<compile_context>
chip_gen: v7x
topology: tpu7x:2x2x1
jax: 0.10.0
libtpu: 0.0.40
codegen_flags: <defaults>
</compile_context>

<pallas_src>
import math
import functools

import jax
import jax.numpy as jnp
from jax.experimental import pallas as pl
from jax.experimental.pallas import tpu as pltpu

EPS = 1e-6                    # LayerNorm eps (matches partial(nn.LayerNorm, eps=1e-06))
MXU_DTYPE = jnp.bfloat16      # MXU operand dtype; set to jnp.float32 for exact-f32 parity
ROW_TILE = 256                # max rows per grid step for row-tiled kernels

_CPARAMS = pltpu.CompilerParams(
    dimension_semantics=("parallel",),
    vmem_limit_bytes=32 * 1024 * 1024,
)


def _row_grid(M):
    """(tile_rows, grid_len). Small M -> one full-extent block (no host padding)."""
    if M <= ROW_TILE:
        return M, 1
    return ROW_TILE, pl.cdiv(M, ROW_TILE)


def _ln_stats(x):
    mean = jnp.mean(x, axis=-1, keepdims=True)
    var = jnp.mean(jnp.square(x - mean), axis=-1, keepdims=True)
    return (x - mean) * jax.lax.rsqrt(var + EPS)


def _gelu_tanh(x):
    # TODO(synk): PyTorch nn.GELU default is exact erf; tanh approximation used
    # in-kernel because Mosaic erf lowering is not guaranteed.
    c = 0.7978845608028654  # sqrt(2/pi)
    return 0.5 * x * (1.0 + jnp.tanh(c * (x + 0.044715 * x * x * x)))


# ----------------------------------------------------------------------------
# Pallas kernels
# ----------------------------------------------------------------------------
def _ln_kernel(x_ref, g_ref, b_ref, o_ref):
    xn = _ln_stats(x_ref[...].astype(jnp.float32))
    o_ref[...] = (xn * g_ref[...] + b_ref[...]).astype(o_ref.dtype)


def layernorm(x2d, gamma, beta):
    """Row-tiled standalone LayerNorm (used for non-first spectral LN1 / fallback)."""
    M, D = x2d.shape
    tm, g = _row_grid(M)
    return pl.pallas_call(
        _ln_kernel,
        grid=(g,),
        out_shape=jax.ShapeDtypeStruct((M, D), jnp.float32),
        in_specs=[
            pl.BlockSpec((tm, D), lambda i: (i, 0)),
            pl.BlockSpec((1, D), lambda i: (0, 0)),
            pl.BlockSpec((1, D), lambda i: (0, 0)),
        ],
        out_specs=pl.BlockSpec((tm, D), lambda i: (i, 0)),
        compiler_params=_CPARAMS,
    )(x2d.astype(jnp.float32), gamma.reshape(1, D), beta.reshape(1, D))


def _ln_posadd_kernel(x_ref, pos_ref, g_ref, b_ref, xp_ref, xn_ref):
    # Emits both (x + pos) [residual base] and LN1(x + pos) in one pass.
    x = x_ref[0].astype(jnp.float32) + pos_ref[0].astype(jnp.float32)
    xp_ref[0] = x.astype(xp_ref.dtype)
    xn_ref[0] = (_ln_stats(x) * g_ref[...] + b_ref[...]).astype(xn_ref.dtype)


def ln_posadd(x3, pos, gamma, beta):
    """(x + pos, LayerNorm(x + pos)) over (B, S, D); grid over B."""
    B, S, D = x3.shape
    return pl.pallas_call(
        _ln_posadd_kernel,
        grid=(B,),
        out_shape=(jax.ShapeDtypeStruct((B, S, D), jnp.float32),
                   jax.ShapeDtypeStruct((B, S, D), jnp.float32)),
        in_specs=[
            pl.BlockSpec((1, S, D), lambda b: (b, 0, 0)),
            pl.BlockSpec((1, S, D), lambda b: (0, 0, 0)),
            pl.BlockSpec((1, D), lambda b: (0, 0)),
            pl.BlockSpec((1, D), lambda b: (0, 0)),
        ],
        out_specs=(pl.BlockSpec((1, S, D), lambda b: (b, 0, 0)),
                   pl.BlockSpec((1, S, D), lambda b: (b, 0, 0))),
        compiler_params=_CPARAMS,
    )(x3.astype(jnp.float32), pos.astype(jnp.float32),
      gamma.reshape(1, D), beta.reshape(1, D))


def _cplx_kernel(x_ref, w_ref, o_ref):
    o_ref[...] = jnp.dot(x_ref[...].astype(MXU_DTYPE), w_ref[...],
                         preferred_element_type=jnp.float32).astype(o_ref.dtype)


def complex_matmul_block(x_cat, w_block):
    """[xr | xi] @ [[wr, wi], [-wi, wr]] -> [yr | yi] as ONE real MXU matmul."""
    M, C2 = x_cat.shape
    tm, g = _row_grid(M)
    return pl.pallas_call(
        _cplx_kernel,
        grid=(g,),
        out_shape=jax.ShapeDtypeStruct((M, C2), jnp.float32),
        in_specs=[
            pl.BlockSpec((tm, C2), lambda i: (i, 0)),
            pl.BlockSpec((C2, C2), lambda i: (0, 0)),
        ],
        out_specs=pl.BlockSpec((tm, C2), lambda i: (i, 0)),
        compiler_params=_CPARAMS,
    )(x_cat.astype(jnp.float32), w_block)


def _mlp_kernel(*refs, use_final_ln):
    it = iter(refs)
    x_ref = next(it)
    res_ref = next(it)
    g = next(it)
    b = next(it)
    w1 = next(it)
    b1 = next(it)
    w2 = next(it)
    b2 = next(it)
    fg = next(it) if use_final_ln else None
    fb = next(it) if use_final_ln else None
    o_ref = next(it)

    xn = _ln_stats(x_ref[...].astype(jnp.float32)) * g[...] + b[...]
    h = jnp.dot(xn.astype(MXU_DTYPE), w1[...],
                preferred_element_type=jnp.float32) + b1[...]
    h = _gelu_tanh(h)
    y = jnp.dot(h.astype(MXU_DTYPE), w2[...],
                preferred_element_type=jnp.float32) + b2[...]
    y = y + res_ref[...].astype(jnp.float32)
    if use_final_ln:
        y = _ln_stats(y) * fg[...] + fb[...]
    o_ref[...] = y.astype(o_ref.dtype)


def mlp_ln_residual(x2d, residual2d, p, final_ln=None):
    """residual2d + MLP(LayerNorm2(x2d)), optionally followed by the encoder LN."""
    M, D = x2d.shape
    Nh = p["mlp_w1"].shape[1]
    tm, g = _row_grid(M)
    use_final_ln = final_ln is not None

    args = [x2d.astype(jnp.float32), residual2d.astype(jnp.float32),
            p["ln2_g"].reshape(1, D), p["ln2_b"].reshape(1, D),
            p["mlp_w1"], p["mlp_b1"].reshape(1, Nh),
            p["mlp_w2"], p["mlp_b2"].reshape(1, D)]
    in_specs = [
        pl.BlockSpec((tm, D), lambda i: (i, 0)),
        pl.BlockSpec((tm, D), lambda i: (i, 0)),
        pl.BlockSpec((1, D), lambda i: (0, 0)),
        pl.BlockSpec((1, D), lambda i: (0, 0)),
        pl.BlockSpec((D, Nh), lambda i: (0, 0)),
        pl.BlockSpec((1, Nh), lambda i: (0, 0)),
        pl.BlockSpec((Nh, D), lambda i: (0, 0)),
        pl.BlockSpec((1, D), lambda i: (0, 0)),
    ]
    if use_final_ln:
        fg, fb = final_ln
        args += [fg.reshape(1, D), fb.reshape(1, D)]
        in_specs += [pl.BlockSpec((1, D), lambda i: (0, 0)),
                     pl.BlockSpec((1, D), lambda i: (0, 0))]

    return pl.pallas_call(
        functools.partial(_mlp_kernel, use_final_ln=use_final_ln),
        grid=(g,),
        out_shape=jax.ShapeDtypeStruct((M, D), jnp.float32),
        in_specs=in_specs,
        out_specs=pl.BlockSpec((tm, D), lambda i: (i, 0)),
        compiler_params=_CPARAMS,
    )(*args)


def _attn_block_kernel(*refs, num_heads, scale, add_pos, use_final_ln):
    """Whole AttentionBlock for ONE batch element, entirely in VMEM/vregs."""
    it = iter(refs)
    x_ref = next(it)
    pos_ref = next(it) if add_pos else None
    ln1_g = next(it)
    ln1_b = next(it)
    wqkv = next(it)
    bqkv = next(it)
    wo = next(it)
    bo = next(it)
    ln2_g = next(it)
    ln2_b = next(it)
    w1 = next(it)
    b1 = next(it)
    w2 = next(it)
    b2 = next(it)
    fg = next(it) if use_final_ln else None
    fb = next(it) if use_final_ln else None
    o_ref = next(it)

    x = x_ref[0].astype(jnp.float32)                     # (S, D)
    if add_pos:
        x = x + pos_ref[0].astype(jnp.float32)
    inp = x                                              # residual base
    D = x.shape[-1]
    dh = D // num_heads

    # LN1 + fused QKV projection (single (D, 3D) MXU matmul).
    xn = _ln_stats(x) * ln1_g[...] + ln1_b[...]
    qkv = jnp.dot(xn.astype(MXU_DTYPE), wqkv[...],
                  preferred_element_type=jnp.float32) + bqkv[...]

    # Per-head attention; head results stay in registers and are concatenated
    # so downstream matmul / the only store are full-width (lane-dense).
    heads = []
    for h in range(num_heads):                           # unrolled (static)
        q = qkv[:, h * dh:(h + 1) * dh]
        k = qkv[:, D + h * dh:D + (h + 1) * dh]
        v = qkv[:, 2 * D + h * dh:2 * D + (h + 1) * dh]
        s = jax.lax.dot_general(
            q.astype(MXU_DTYPE), k.astype(MXU_DTYPE),
            (((1,), (1,)), ((), ())),
            preferred_element_type=jnp.float32) * scale
        s = s - jnp.max(s, axis=-1, keepdims=True)
        pr = jnp.exp(s)
        pr = pr * pl.reciprocal(jnp.sum(pr, axis=-1, keepdims=True), approx=True)
        heads.append(jnp.dot(pr.astype(MXU_DTYPE), v.astype(MXU_DTYPE),
                             preferred_element_type=jnp.float32))
    attn = jnp.concatenate(heads, axis=-1)               # (S, D)

    # Output projection + bias + residual (dropout: identity in eval).
    x2 = jnp.dot(attn.astype(MXU_DTYPE), wo[...],
                 preferred_element_type=jnp.float32) + bo[...] + inp

    # LN2 + MLP + residual.
    yn = _ln_stats(x2) * ln2_g[...] + ln2_b[...]
    hh = jnp.dot(yn.astype(MXU_DTYPE), w1[...],
                 preferred_element_type=jnp.float32) + b1[...]
    hh = _gelu_tanh(hh)
    out = jnp.dot(hh.astype(MXU_DTYPE), w2[...],
                  preferred_element_type=jnp.float32) + b2[...] + x2

    if use_final_ln:                                     # fused encoder LN
        out = _ln_stats(out) * fg[...] + fb[...]

    o_ref[0] = out.astype(o_ref.dtype)                   # one full-width store


def attention_block(inp, p, num_heads, pos=None, final_ln=None):
    """Entire AttentionBlock as ONE pallas_call, grid over batch."""
    B, S, D = inp.shape
    Nh = p["mlp_w1"].shape[1]
    dh = D // num_heads
    add_pos = pos is not None
    use_final_ln = final_ln is not None

    args = [inp.astype(jnp.float32)]
    in_specs = [pl.BlockSpec((1, S, D), lambda b: (b, 0, 0))]
    if add_pos:
        args.append(pos.astype(jnp.float32))
        in_specs.append(pl.BlockSpec((1, S, D), lambda b: (0, 0, 0)))

    weights = [
        (p["ln1_g"].reshape(1, D), (1, D)),
        (p["ln1_b"].reshape(1, D), (1, D)),
        (p["wqkv"], (D, 3 * D)),
        (p["bqkv"].reshape(1, 3 * D), (1, 3 * D)),
        (p["wo"], (D, D)),
        (p["bo"].reshape(1, D), (1, D)),
        (p["ln2_g"].reshape(1, D), (1, D)),
        (p["ln2_b"].reshape(1, D), (1, D)),
        (p["mlp_w1"], (D, Nh)),
        (p["mlp_b1"].reshape(1, Nh), (1, Nh)),
        (p["mlp_w2"], (Nh, D)),
        (p["mlp_b2"].reshape(1, D), (1, D)),
    ]
    if use_final_ln:
        fg, fb = final_ln
        weights += [(fg.reshape(1, D), (1, D)), (fb.reshape(1, D), (1, D))]
    for arr, shp in weights:
        args.append(arr)
        in_specs.append(pl.BlockSpec(shp, lambda b, _n=len(shp): (0,) * _n))

    return pl.pallas_call(
        functools.partial(_attn_block_kernel, num_heads=num_heads,
                          scale=1.0 / math.sqrt(dh), add_pos=add_pos,
                          use_final_ln=use_final_ln),
        grid=(B,),
        out_shape=jax.ShapeDtypeStruct((B, S, D), jnp.float32),
        in_specs=in_specs,
        out_specs=pl.BlockSpec((1, S, D), lambda b: (b, 0, 0)),
        compiler_params=_CPARAMS,
    )(*args)


# ----------------------------------------------------------------------------
# Spectral block (glue in plain JAX for FFTs, compute in Pallas kernels)
# ----------------------------------------------------------------------------
def spectral_block(inp, p, sequence_lengths, pos=None, final_ln=None):
    B, S, D = inp.shape
    if pos is not None:
        # Fused pos-add + LN1 (also emits the residual base x+pos).
        resid3, x = ln_posadd(inp, pos, p["ln1_g"], p["ln1_b"])
    else:
        resid3 = inp
        x = layernorm(inp.reshape(B * S, D), p["ln1_g"], p["ln1_b"]).reshape(B, S, D)

    # TODO(synk): rfft2/irfft2 have no Pallas equivalent; kept as XLA FFT ops.
    freq_pieces, meta = [], []
    off = 0
    for L in sequence_lengths:
        xv = x[:, off:off + L, :]
        off += L
        H = W = int(math.sqrt(L))
        xf = jnp.fft.rfft2(xv.reshape(B, H, W, D), axes=(1, 2), norm="ortho")
        Wf = W // 2 + 1
        xr = jnp.real(xf).astype(jnp.float32)
        xi = jnp.imag(xf).astype(jnp.float32)
        freq_pieces.append(
            jnp.concatenate([xr, xi], axis=-1).reshape(B * H * Wf, 2 * D))
        meta.append((H, W, Wf, L))

    # One fused complex matmul over all scales (shared weight).
    rows = [fp.shape[0] for fp in freq_pieces]
    y_cat = complex_matmul_block(jnp.concatenate(freq_pieces, axis=0), p["w_block"])

    pieces, start = [], 0
    for (H, W, Wf, L), r in zip(meta, rows):
        y = y_cat[start:start + r].reshape(B, H, Wf, 2 * D)
        start += r
        yf = y[..., :D] + 1j * y[..., D:]
        yv = jnp.fft.irfft2(yf, s=(H, W), axes=(1, 2), norm="ortho")
        pieces.append(yv.reshape(B, L, D).astype(jnp.float32))
    xs = jnp.concatenate(pieces, axis=1)          # dropout: identity (eval)

    # return MLP(LN2(xs)) + block_input  (fused; optional final encoder LN)
    out = mlp_ln_residual(xs.reshape(B * S, D), resid3.reshape(B * S, D), p,
                          final_ln=final_ln)
    return out.reshape(B, S, D)


def encoder_forward(x, params, sequence_lengths, layer_config, num_heads):
    B, S, D = x.shape
    n = len(layer_config)
    pos = params["pos_embedding"]
    if n == 0:
        x2d = (x + pos).reshape(B * S, D)          # dropout: identity (eval)
        return layernorm(x2d, params["ln_g"], params["ln_b"]).reshape(B, S, D)

    for idx, (lc, p) in enumerate(zip(layer_config, params["layers"])):
        pos_arg = pos if idx == 0 else None                       # fused pos-add
        fln = (params["ln_g"], params["ln_b"]) if idx == n - 1 else None  # fused LN
        if lc == 1:
            x = spectral_block(x, p, sequence_lengths, pos=pos_arg, final_ln=fln)
        else:
            x = attention_block(x, p, num_heads, pos=pos_arg, final_ln=fln)
    return x


# ----------------------------------------------------------------------------
# Deterministic parameter construction (fused layouts)
# ----------------------------------------------------------------------------
def init_params(key, sequence_lengths, layer_config, D, mlp_dim):
    S = sum(sequence_lengths)
    keys = iter(jax.random.split(key, 256))

    def nrm(shape, std=0.02):
        return jax.random.normal(next(keys), shape, dtype=jnp.float32) * std

    params = {"pos_embedding": nrm((1, S, D))}
    layers = []
    for lc in layer_config:
        p = {
            "ln1_g": jnp.ones((D,), jnp.float32),
            "ln1_b": jnp.zeros((D,), jnp.float32),
            "ln2_g": jnp.ones((D,), jnp.float32),
            "ln2_b": jnp.zeros((D,), jnp.float32),
            "mlp_w1": nrm((D, mlp_dim)).astype(MXU_DTYPE),
            "mlp_b1": jnp.zeros((mlp_dim,), jnp.float32),
            "mlp_w2": nrm((mlp_dim, D)).astype(MXU_DTYPE),
            "mlp_b2": jnp.zeros((D,), jnp.float32),
        }
        if lc == 1:  # SpectralBlock: fold complex weight into a (2D, 2D) real block.
            wc = nrm((D, D, 2))
            wr, wi = wc[..., 0], wc[..., 1]
            p["w_block"] = jnp.concatenate(
                [jnp.concatenate([wr, wi], axis=1),
                 jnp.concatenate([-wi, wr], axis=1)], axis=0).astype(MXU_DTYPE)
        else:        # AttentionBlock: fused QKV projection + output projection.
            p["wqkv"] = jnp.concatenate(
                [nrm((D, D)), nrm((D, D)), nrm((D, D))], axis=1).astype(MXU_DTYPE)
            p["bqkv"] = jnp.zeros((3 * D,), jnp.float32)
            p["wo"] = nrm((D, D)).astype(MXU_DTYPE)
            p["bo"] = jnp.zeros((D,), jnp.float32)
        layers.append(p)
    params["layers"] = layers
    params["ln_g"] = jnp.ones((D,), jnp.float32)
    params["ln_b"] = jnp.zeros((D,), jnp.float32)
    return params


# ----------------------------------------------------------------------------
if __name__ == "__main__":
    B = 2
    hidden_dim = 32
    num_heads = 4
    mlp_dim = 64
    sequence_lengths = [16, 4]   # perfect squares (4x4 and 2x2 spatial grids)
    layer_config = [1, 0]        # one SpectralBlock, one AttentionBlock
    S = sum(sequence_lengths)

    key = jax.random.PRNGKey(0)
    kx, kp = jax.random.split(key)
    x = jax.random.normal(kx, (B, S, hidden_dim), dtype=jnp.float32)
    params = init_params(kp, sequence_lengths, layer_config, hidden_dim, mlp_dim)

    fwd = jax.jit(lambda xx, pp: encoder_forward(
        xx, pp, sequence_lengths, layer_config, num_heads))
    out = jax.block_until_ready(fwd(x, params))
    assert out.shape == (B, S, hidden_dim)
    assert bool(jnp.all(jnp.isfinite(out)))
    print("KERNEL_OK")
</pallas_src>

<mosaic_0001>
module attributes {stable_mosaic.version = 11 : i64} {
  func.func @_ln_posadd_kernel(%arg0: i32, %arg1: memref<1x20x32xf32, #tpu.memory_space<vmem>>, %arg2: memref<1x20x32xf32, #tpu.memory_space<vmem>>, %arg3: memref<1x32xf32, #tpu.memory_space<vmem>>, %arg4: memref<1x32xf32, #tpu.memory_space<vmem>>, %arg5: memref<1x20x32xf32, #tpu.memory_space<vmem>>, %arg6: memref<1x20x32xf32, #tpu.memory_space<vmem>>) attributes {dimension_semantics = [#tpu.dimension_semantics<parallel>], iteration_bounds = array<i64: 2>, scalar_prefetch = 0 : i64, scratch_operands = 0 : i64, tpu.core_type = #tpu.core_type<tc>, window_params = [{transform_indices = @transform_0, window_bounds = array<i64: 1, 20, 32>}, {pipeline_mode = #tpu.pipeline_mode<synchronous>, transform_indices = @transform_1, window_bounds = array<i64: 1, 20, 32>}, {pipeline_mode = #tpu.pipeline_mode<synchronous>, transform_indices = @transform_2, window_bounds = array<i64: 1, 32>}, {pipeline_mode = #tpu.pipeline_mode<synchronous>, transform_indices = @transform_3, window_bounds = array<i64: 1, 32>}, {transform_indices = @transform_4, window_bounds = array<i64: 1, 20, 32>}, {transform_indices = @transform_5, window_bounds = array<i64: 1, 20, 32>}]} {
    %c0 = arith.constant 0 : index
    %c0_0 = arith.constant 0 : index
    %c0_1 = arith.constant 0 : index
    %0 = vector.load %arg1[%c0, %c0_0, %c0_1] : memref<1x20x32xf32, #tpu.memory_space<vmem>>, vector<1x20x32xf32>
    %1 = vector.shape_cast %0 : vector<1x20x32xf32> to vector<20x32xf32>
    %c0_2 = arith.constant 0 : index
    %c0_3 = arith.constant 0 : index
    %c0_4 = arith.constant 0 : index
    %2 = vector.load %arg2[%c0_2, %c0_3, %c0_4] : memref<1x20x32xf32, #tpu.memory_space<vmem>>, vector<1x20x32xf32>
    %3 = vector.shape_cast %2 : vector<1x20x32xf32> to vector<20x32xf32>
    %4 = arith.addf %1, %3 : vector<20x32xf32>
    %c0_5 = arith.constant 0 : index
    %c0_6 = arith.constant 0 : index
    %c0_7 = arith.constant 0 : index
    %5 = vector.load %arg5[%c0_5, %c0_6, %c0_7] : memref<1x20x32xf32, #tpu.memory_space<vmem>>, vector<1x20x32xf32>
    %6 = vector.shape_cast %5 : vector<1x20x32xf32> to vector<20x32xf32>
    %7 = vector.shape_cast %4 : vector<20x32xf32> to vector<1x20x32xf32>
    tpu.vector_store %arg5[%c0_5, %c0_6, %c0_7], %7 {strides = array<i32>} : memref<1x20x32xf32, #tpu.memory_space<vmem>>, vector<1x20x32xf32>,
    %cst = arith.constant dense<0.000000e+00> : vector<20xf32>
    %8 = vector.multi_reduction <add>, %4, %cst [1] : vector<20x32xf32> to vector<20xf32>
    %9 = vector.shape_cast %8 : vector<20xf32> to vector<20x1xf32>
    %cst_8 = arith.constant 3.200000e+01 : f32
    %10 = vector.broadcast %cst_8 : f32 to vector<20x1xf32>
    %11 = arith.divf %9, %10 : vector<20x1xf32>
    %12 = vector.broadcast %11 : vector<20x1xf32> to vector<20x32xf32>
    %13 = arith.subf %4, %12 : vector<20x32xf32>
    %14 = arith.mulf %13, %13 : vector<20x32xf32>
    %cst_9 = arith.constant dense<0.000000e+00> : vector<20xf32>
    %15 = vector.multi_reduction <add>, %14, %cst_9 [1] : vector<20x32xf32> to vector<20xf32>
    %16 = vector.shape_cast %15 : vector<20xf32> to vector<20x1xf32>
    %cst_10 = arith.constant 3.200000e+01 : f32
    %17 = vector.broadcast %cst_10 : f32 to vector<20x1xf32>
    %18 = arith.divf %16, %17 : vector<20x1xf32>
    %19 = vector.broadcast %11 : vector<20x1xf32> to vector<20x32xf32>
    %20 = arith.subf %4, %19 : vector<20x32xf32>
    %cst_11 = arith.constant 9.99999997E-7 : f32
    %21 = vector.broadcast %cst_11 : f32 to vector<20x1xf32>
    %22 = arith.addf %18, %21 : vector<20x1xf32>
    %23 = math.rsqrt %22 : vector<20x1xf32>
    %24 = vector.broadcast %23 : vector<20x1xf32> to vector<20x32xf32>
    %25 = arith.mulf %20, %24 : vector<20x32xf32>
    %c0_12 = arith.constant 0 : index
    %c0_13 = arith.constant 0 : index
    %26 = vector.load %arg3[%c0_12, %c0_13] : memref<1x32xf32, #tpu.memory_space<vmem>>, vector<1x32xf32>
    %27 = vector.broadcast %26 : vector<1x32xf32> to vector<20x32xf32>
    %28 = arith.mulf %25, %27 : vector<20x32xf32>
    %c0_14 = arith.constant 0 : index
    %c0_15 = arith.constant 0 : index
    %29 = vector.load %arg4[%c0_14, %c0_15] : memref<1x32xf32, #tpu.memory_space<vmem>>, vector<1x32xf32>
    %30 = vector.broadcast %29 : vector<1x32xf32> to vector<20x32xf32>
    %31 = arith.addf %28, %30 : vector<20x32xf32>
    %c0_16 = arith.constant 0 : index
    %c0_17 = arith.constant 0 : index
    %c0_18 = arith.constant 0 : index
    %32 = vector.load %arg6[%c0_16, %c0_17, %c0_18] : memref<1x20x32xf32, #tpu.memory_space<vmem>>, vector<1x20x32xf32>
    %33 = vector.shape_cast %32 : vector<1x20x32xf32> to vector<20x32xf32>
    %34 = vector.shape_cast %31 : vector<20x32xf32> to vector<1x20x32xf32>
    tpu.vector_store %arg6[%c0_16, %c0_17, %c0_18], %34 {strides = array<i32>} : memref<1x20x32xf32, #tpu.memory_space<vmem>>, vector<1x20x32xf32>,
    return
  }
  func.func @transform_0(%arg0: i32) -> (i32, i32, i32) {
    %c0_i32 = arith.constant 0 : i32
    %c0_i32_0 = arith.constant 0 : i32
    %c0_i32_1 = arith.constant 0 : i32
    return %arg0, %c0_i32, %c0_i32_0 : i32, i32, i32
  }
  func.func @transform_1(%arg0: i32) -> (i32, i32, i32) {
    %c0_i32 = arith.constant 0 : i32
    %c0_i32_0 = arith.constant 0 : i32
    %c0_i32_1 = arith.constant 0 : i32
    %c0_i32_2 = arith.constant 0 : i32
    return %c0_i32, %c0_i32_0, %c0_i32_1 : i32, i32, i32
  }
  func.func @transform_2(%arg0: i32) -> (i32, i32) {
    %c0_i32 = arith.constant 0 : i32
    %c0_i32_0 = arith.constant 0 : i32
    %c0_i32_1 = arith.constant 0 : i32
    return %c0_i32, %c0_i32_0 : i32, i32
  }
  func.func @transform_3(%arg0: i32) -> (i32, i32) {
    %c0_i32 = arith.constant 0 : i32
    %c0_i32_0 = arith.constant 0 : i32
    %c0_i32_1 = arith.constant 0 : i32
    return %c0_i32, %c0_i32_0 : i32, i32
  }
  func.func @transform_4(%arg0: i32) -> (i32, i32, i32) {
    %c0_i32 = arith.constant 0 : i32
    %c0_i32_0 = arith.constant 0 : i32
    %c0_i32_1 = arith.constant 0 : i32
    return %arg0, %c0_i32, %c0_i32_0 : i32, i32, i32
  }
  func.func @transform_5(%arg0: i32) -> (i32, i32, i32) {
    %c0_i32 = arith.constant 0 : i32
    %c0_i32_0 = arith.constant 0 : i32
    %c0_i32_1 = arith.constant 0 : i32
    return %arg0, %c0_i32, %c0_i32_0 : i32, i32, i32
  }
}

module attributes {stable_mosaic.version = 11 : i64} {
  func.func @_cplx_kernel(%arg0: i32, %arg1: memref<32x64xf32, #tpu.memory_space<vmem>>, %arg2: memref<64x64xbf16, #tpu.memory_space<vmem>>, %arg3: memref<32x64xf32, #tpu.memory_space<vmem>>) attributes {dimension_semantics = [#tpu.dimension_semantics<parallel>], iteration_bounds = array<i64: 1>, scalar_prefetch = 0 : i64, scratch_operands = 0 : i64, tpu.core_type = #tpu.core_type<tc>, window_params = [{transform_indices = @transform_0, window_bounds = array<i64: 32, 64>}, {pipeline_mode = #tpu.pipeline_mode<synchronous>, transform_indices = @transform_1, window_bounds = array<i64: 64, 64>}, {transform_indices = @transform_2, window_bounds = array<i64: 32, 64>}]} {
    %c0 = arith.constant 0 : index
    %c0_0 = arith.constant 0 : index
    %0 = vector.load %arg1[%c0, %c0_0] : memref<32x64xf32, #tpu.memory_space<vmem>>, vector<32x64xf32>
    %1 = arith.truncf %0 : vector<32x64xf32> to vector<32x64xbf16>
    %c0_1 = arith.constant 0 : index
    %c0_2 = arith.constant 0 : index
    %2 = vector.load %arg2[%c0_1, %c0_2] : memref<64x64xbf16, #tpu.memory_space<vmem>>, vector<64x64xbf16>
    %cst = arith.constant dense<0.000000e+00> : vector<32x64xf32>
    %3 = tpu.matmul %1, %2, %cst {dimension_numbers = #tpu.dot_dimension_numbers<[1], [0], [0], [1], [0, 0, 1, 1], [], []>} : vector<32x64xbf16>, vector<64x64xbf16>, vector<32x64xf32> -> vector<32x64xf32>
    %c0_3 = arith.constant 0 : index
    %c0_4 = arith.constant 0 : index
    %4 = vector.load %arg3[%c0_3, %c0_4] : memref<32x64xf32, #tpu.memory_space<vmem>>, vector<32x64xf32>
    tpu.vector_store %arg3[%c0_3, %c0_4], %3 {strides = array<i32>} : memref<32x64xf32, #tpu.memory_space<vmem>>, vector<32x64xf32>,
    return
  }
  func.func @transform_0(%arg0: i32) -> (i32, i32) {
    %c0_i32 = arith.constant 0 : i32
    %c0_i32_0 = arith.constant 0 : i32
    return %arg0, %c0_i32 : i32, i32
  }
  func.func @transform_1(%arg0: i32) -> (i32, i32) {
    %c0_i32 = arith.constant 0 : i32
    %c0_i32_0 = arith.constant 0 : i32
    %c0_i32_1 = arith.constant 0 : i32
    return %c0_i32, %c0_i32_0 : i32, i32
  }
  func.func @transform_2(%arg0: i32) -> (i32, i32) {
    %c0_i32 = arith.constant 0 : i32
    %c0_i32_0 = arith.constant 0 : i32
    return %arg0, %c0_i32 : i32, i32
  }
}

module attributes {stable_mosaic.version = 11 : i64} {
  func.func @_mlp_kernel(%arg0: i32, %arg1: memref<40x32xf32, #tpu.memory_space<vmem>>, %arg2: memref<40x32xf32, #tpu.memory_space<vmem>>, %arg3: memref<1x32xf32, #tpu.memory_space<vmem>>, %arg4: memref<1x32xf32, #tpu.memory_space<vmem>>, %arg5: memref<32x64xbf16, #tpu.memory_space<vmem>>, %arg6: memref<1x64xf32, #tpu.memory_space<vmem>>, %arg7: memref<64x32xbf16, #tpu.memory_space<vmem>>, %arg8: memref<1x32xf32, #tpu.memory_space<vmem>>, %arg9: memref<40x32xf32, #tpu.memory_space<vmem>>) attributes {dimension_semantics = [#tpu.dimension_semantics<parallel>], iteration_bounds = array<i64: 1>, scalar_prefetch = 0 : i64, scratch_operands = 0 : i64, tpu.core_type = #tpu.core_type<tc>, window_params = [{transform_indices = @transform_0, window_bounds = array<i64: 40, 32>}, {transform_indices = @transform_1, window_bounds = array<i64: 40, 32>}, {pipeline_mode = #tpu.pipeline_mode<synchronous>, transform_indices = @transform_2, window_bounds = array<i64: 1, 32>}, {pipeline_mode = #tpu.pipeline_mode<synchronous>, transform_indices = @transform_3, window_bounds = array<i64: 1, 32>}, {pipeline_mode = #tpu.pipeline_mode<synchronous>, transform_indices = @transform_4, window_bounds = array<i64: 32, 64>}, {pipeline_mode = #tpu.pipeline_mode<synchronous>, transform_indices = @transform_5, window_bounds = array<i64: 1, 64>}, {pipeline_mode = #tpu.pipeline_mode<synchronous>, transform_indices = @transform_6, window_bounds = array<i64: 64, 32>}, {pipeline_mode = #tpu.pipeline_mode<synchronous>, transform_indices = @transform_7, window_bounds = array<i64: 1, 32>}, {transform_indices = @transform_8, window_bounds = array<i64: 40, 32>}]} {
    %c0 = arith.constant 0 : index
    %c0_0 = arith.constant 0 : index
    %0 = vector.load %arg1[%c0, %c0_0] : memref<40x32xf32, #tpu.memory_space<vmem>>, vector<40x32xf32>
    %cst = arith.constant dense<0.000000e+00> : vector<40xf32>
    %1 = vector.multi_reduction <add>, %0, %cst [1] : vector<40x32xf32> to vector<40xf32>
    %2 = vector.shape_cast %1 : vector<40xf32> to vector<40x1xf32>
    %cst_1 = arith.constant 3.200000e+01 : f32
    %3 = vector.broadcast %cst_1 : f32 to vector<40x1xf32>
    %4 = arith.divf %2, %3 : vector<40x1xf32>
    %5 = vector.broadcast %4 : vector<40x1xf32> to vector<40x32xf32>
    %6 = arith.subf %0, %5 : vector<40x32xf32>
    %7 = arith.mulf %6, %6 : vector<40x32xf32>
    %cst_2 = arith.constant dense<0.000000e+00> : vector<40xf32>
    %8 = vector.multi_reduction <add>, %7, %cst_2 [1] : vector<40x32xf32> to vector<40xf32>
    %9 = vector.shape_cast %8 : vector<40xf32> to vector<40x1xf32>
    %cst_3 = arith.constant 3.200000e+01 : f32
    %10 = vector.broadcast %cst_3 : f32 to vector<40x1xf32>
    %11 = arith.divf %9, %10 : vector<40x1xf32>
    %12 = vector.broadcast %4 : vector<40x1xf32> to vector<40x32xf32>
    %13 = arith.subf %0, %12 : vector<40x32xf32>
    %cst_4 = arith.constant 9.99999997E-7 : f32
    %14 = vector.broadcast %cst_4 : f32 to vector<40x1xf32>
    %15 = arith.addf %11, %14 : vector<40x1xf32>
    %16 = math.rsqrt %15 : vector<40x1xf32>
    %17 = vector.broadcast %16 : vector<40x1xf32> to vector<40x32xf32>
    %18 = arith.mulf %13, %17 : vector<40x32xf32>
    %c0_5 = arith.constant 0 : index
    %c0_6 = arith.constant 0 : index
    %19 = vector.load %arg3[%c0_5, %c0_6] : memref<1x32xf32, #tpu.memory_space<vmem>>, vector<1x32xf32>
    %20 = vector.broadcast %19 : vector<1x32xf32> to vector<40x32xf32>
    %21 = arith.mulf %18, %20 : vector<40x32xf32>
    %c0_7 = arith.constant 0 : index
    %c0_8 = arith.constant 0 : index
    %22 = vector.load %arg4[%c0_7, %c0_8] : memref<1x32xf32, #tpu.memory_space<vmem>>, vector<1x32xf32>
    %23 = vector.broadcast %22 : vector<1x32xf32> to vector<40x32xf32>
    %24 = arith.addf %21, %23 : vector<40x32xf32>
    %25 = arith.truncf %24 : vector<40x32xf32> to vector<40x32xbf16>
    %c0_9 = arith.constant 0 : index
    %c0_10 = arith.constant 0 : index
    %26 = vector.load %arg5[%c0_9, %c0_10] : memref<32x64xbf16, #tpu.memory_space<vmem>>, vector<32x64xbf16>
    %cst_11 = arith.constant dense<0.000000e+00> : vector<40x64xf32>
    %27 = tpu.matmul %25, %26, %cst_11 {dimension_numbers = #tpu.dot_dimension_numbers<[1], [0], [0], [1], [0, 0, 1, 1], [], []>} : vector<40x32xbf16>, vector<32x64xbf16>, vector<40x64xf32> -> vector<40x64xf32>
    %c0_12 = arith.constant 0 : index
    %c0_13 = arith.constant 0 : index
    %28 = vector.load %arg6[%c0_12, %c0_13] : memref<1x64xf32, #tpu.memory_space<vmem>>, vector<1x64xf32>
    %29 = vector.broadcast %28 : vector<1x64xf32> to vector<40x64xf32>
    %30 = arith.addf %27, %29 : vector<40x64xf32>
    %cst_14 = arith.constant 5.000000e-01 : f32
    %31 = vector.broadcast %cst_14 : f32 to vector<40x64xf32>
    %32 = arith.mulf %31, %30 : vector<40x64xf32>
    %cst_15 = arith.constant 4.471500e-02 : f32
    %33 = vector.broadcast %cst_15 : f32 to vector<40x64xf32>
    %34 = arith.mulf %33, %30 : vector<40x64xf32>
    %35 = arith.mulf %34, %30 : vector<40x64xf32>
    %36 = arith.mulf %35, %30 : vector<40x64xf32>
    %37 = arith.addf %30, %36 : vector<40x64xf32>
    %cst_16 = arith.constant 0.797884583 : f32
    %38 = vector.broadcast %cst_16 : f32 to vector<40x64xf32>
    %39 = arith.mulf %38, %37 : vector<40x64xf32>
    %40 = math.tanh %39 : vector<40x64xf32>
    %cst_17 = arith.constant 1.000000e+00 : f32
    %41 = vector.broadcast %cst_17 : f32 to vector<40x64xf32>
    %42 = arith.addf %41, %40 : vector<40x64xf32>
    %43 = arith.mulf %32, %42 : vector<40x64xf32>
    %44 = arith.truncf %43 : vector<40x64xf32> to vector<40x64xbf16>
    %c0_18 = arith.constant 0 : index
    %c0_19 = arith.constant 0 : index
    %45 = vector.load %arg7[%c0_18, %c0_19] : memref<64x32xbf16, #tpu.memory_space<vmem>>, vector<64x32xbf16>
    %cst_20 = arith.constant dense<0.000000e+00> : vector<40x32xf32>
    %46 = tpu.matmul %44, %45, %cst_20 {dimension_numbers = #tpu.dot_dimension_numbers<[1], [0], [0], [1], [0, 0, 1, 1], [], []>} : vector<40x64xbf16>, vector<64x32xbf16>, vector<40x32xf32> -> vector<40x32xf32>
    %c0_21 = arith.constant 0 : index
    %c0_22 = arith.constant 0 : index
    %47 = vector.load %arg8[%c0_21, %c0_22] : memref<1x32xf32, #tpu.memory_space<vmem>>, vector<1x32xf32>
    %48 = vector.broadcast %47 : vector<1x32xf32> to vector<40x32xf32>
    %49 = arith.addf %46, %48 : vector<40x32xf32>
    %c0_23 = arith.constant 0 : index
    %c0_24 = arith.constant 0 : index
    %50 = vector.load %arg2[%c0_23, %c0_24] : memref<40x32xf32, #tpu.memory_space<vmem>>, vector<40x32xf32>
    %51 = arith.addf %49, %50 : vector<40x32xf32>
    %c0_25 = arith.constant 0 : index
    %c0_26 = arith.constant 0 : index
    %52 = vector.load %arg9[%c0_25, %c0_26] : memref<40x32xf32, #tpu.memory_space<vmem>>, vector<40x32xf32>
    tpu.vector_store %arg9[%c0_25, %c0_26], %51 {strides = array<i32>} : memref<40x32xf32, #tpu.memory_space<vmem>>, vector<40x32xf32>,
    return
  }
  func.func @transform_0(%arg0: i32) -> (i32, i32) {
    %c0_i32 = arith.constant 0 : i32
    %c0_i32_0 = arith.constant 0 : i32
    return %arg0, %c0_i32 : i32, i32
  }
  func.func @transform_1(%arg0: i32) -> (i32, i32) {
    %c0_i32 = arith.constant 0 : i32
    %c0_i32_0 = arith.constant 0 : i32
    return %arg0, %c0_i32 : i32, i32
  }
  func.func @transform_2(%arg0: i32) -> (i32, i32) {
    %c0_i32 = arith.constant 0 : i32
    %c0_i32_0 = arith.constant 0 : i32
    %c0_i32_1 = arith.constant 0 : i32
    return %c0_i32, %c0_i32_0 : i32, i32
  }
  func.func @transform_3(%arg0: i32) -> (i32, i32) {
    %c0_i32 = arith.constant 0 : i32
    %c0_i32_0 = arith.constant 0 : i32
    %c0_i32_1 = arith.constant 0 : i32
    return %c0_i32, %c0_i32_0 : i32, i32
  }
  func.func @transform_4(%arg0: i32) -> (i32, i32) {
    %c0_i32 = arith.constant 0 : i32
    %c0_i32_0 = arith.constant 0 : i32
    %c0_i32_1 = arith.constant 0 : i32
    return %c0_i32, %c0_i32_0 : i32, i32
  }
  func.func @transform_5(%arg0: i32) -> (i32, i32) {
    %c0_i32 = arith.constant 0 : i32
    %c0_i32_0 = arith.constant 0 : i32
    %c0_i32_1 = arith.constant 0 : i32
    return %c0_i32, %c0_i32_0 : i32, i32
  }
  func.func @transform_6(%arg0: i32) -> (i32, i32) {
    %c0_i32 = arith.constant 0 : i32
    %c0_i32_0 = arith.constant 0 : i32
    %c0_i32_1 = arith.constant 0 : i32
    return %c0_i32, %c0_i32_0 : i32, i32
  }
  func.func @transform_7(%arg0: i32) -> (i32, i32) {
    %c0_i32 = arith.constant 0 : i32
    %c0_i32_0 = arith.constant 0 : i32
    %c0_i32_1 = arith.constant 0 : i32
    return %c0_i32, %c0_i32_0 : i32, i32
  }
  func.func @transform_8(%arg0: i32) -> (i32, i32) {
    %c0_i32 = arith.constant 0 : i32
    %c0_i32_0 = arith.constant 0 : i32
    return %arg0, %c0_i32 : i32, i32
  }
}

module attributes {stable_mosaic.version = 11 : i64} {
  func.func @_attn_block_kernel(%arg0: i32, %arg1: memref<1x20x32xf32, #tpu.memory_space<vmem>>, %arg2: memref<1x32xf32, #tpu.memory_space<vmem>>, %arg3: memref<1x32xf32, #tpu.memory_space<vmem>>, %arg4: memref<32x96xbf16, #tpu.memory_space<vmem>>, %arg5: memref<1x96xf32, #tpu.memory_space<vmem>>, %arg6: memref<32x32xbf16, #tpu.memory_space<vmem>>, %arg7: memref<1x32xf32, #tpu.memory_space<vmem>>, %arg8: memref<1x32xf32, #tpu.memory_space<vmem>>, %arg9: memref<1x32xf32, #tpu.memory_space<vmem>>, %arg10: memref<32x64xbf16, #tpu.memory_space<vmem>>, %arg11: memref<1x64xf32, #tpu.memory_space<vmem>>, %arg12: memref<64x32xbf16, #tpu.memory_space<vmem>>, %arg13: memref<1x32xf32, #tpu.memory_space<vmem>>, %arg14: memref<1x32xf32, #tpu.memory_space<vmem>>, %arg15: memref<1x32xf32, #tpu.memory_space<vmem>>, %arg16: memref<1x20x32xf32, #tpu.memory_space<vmem>>) attributes {dimension_semantics = [#tpu.dimension_semantics<parallel>], iteration_bounds = array<i64: 2>, scalar_prefetch = 0 : i64, scratch_operands = 0 : i64, tpu.core_type = #tpu.core_type<tc>, window_params = [{transform_indices = @transform_0, window_bounds = array<i64: 1, 20, 32>}, {pipeline_mode = #tpu.pipeline_mode<synchronous>, transform_indices = @transform_1, window_bounds = array<i64: 1, 32>}, {pipeline_mode = #tpu.pipeline_mode<synchronous>, transform_indices = @transform_2, window_bounds = array<i64: 1, 32>}, {pipeline_mode = #tpu.pipeline_mode<synchronous>, transform_indices = @transform_3, window_bounds = array<i64: 32, 96>}, {pipeline_mode = #tpu.pipeline_mode<synchronous>, transform_indices = @transform_4, window_bounds = array<i64: 1, 96>}, {pipeline_mode = #tpu.pipeline_mode<synchronous>, transform_indices = @transform_5, window_bounds = array<i64: 32, 32>}, {pipeline_mode = #tpu.pipeline_mode<synchronous>, transform_indices = @transform_6, window_bounds = array<i64: 1, 32>}, {pipeline_mode = #tpu.pipeline_mode<synchronous>, transform_indices = @transform_7, window_bounds = array<i64: 1, 32>}, {pipeline_mode = #tpu.pipeline_mode<synchronous>, transform_indices = @transform_8, window_bounds = array<i64: 1, 32>}, {pipeline_mode = #tpu.pipeline_mode<synchronous>, transform_indices = @transform_9, window_bounds = array<i64: 32, 64>}, {pipeline_mode = #tpu.pipeline_mode<synchronous>, transform_indices = @transform_10, window_bounds = array<i64: 1, 64>}, {pipeline_mode = #tpu.pipeline_mode<synchronous>, transform_indices = @transform_11, window_bounds = array<i64: 64, 32>}, {pipeline_mode = #tpu.pipeline_mode<synchronous>, transform_indices = @transform_12, window_bounds = array<i64: 1, 32>}, {pipeline_mode = #tpu.pipeline_mode<synchronous>, transform_indices = @transform_13, window_bounds = array<i64: 1, 32>}, {pipeline_mode = #tpu.pipeline_mode<synchronous>, transform_indices = @transform_14, window_bounds = array<i64: 1, 32>}, {transform_indices = @transform_15, window_bounds = array<i64: 1, 20, 32>}]} {
    %c0 = arith.constant 0 : index
    %c0_0 = arith.constant 0 : index
    %c0_1 = arith.constant 0 : index
    %0 = vector.load %arg1[%c0, %c0_0, %c0_1] : memref<1x20x32xf32, #tpu.memory_space<vmem>>, vector<1x20x32xf32>
    %1 = vector.shape_cast %0 : vector<1x20x32xf32> to vector<20x32xf32>
    %cst = arith.constant dense<0.000000e+00> : vector<20xf32>
    %2 = vector.multi_reduction <add>, %1, %cst [1] : vector<20x32xf32> to vector<20xf32>
    %3 = vector.shape_cast %2 : vector<20xf32> to vector<20x1xf32>
    %cst_2 = arith.constant 3.200000e+01 : f32
    %4 = vector.broadcast %cst_2 : f32 to vector<20x1xf32>
    %5 = arith.divf %3, %4 : vector<20x1xf32>
    %6 = vector.broadcast %5 : vector<20x1xf32> to vector<20x32xf32>
    %7 = arith.subf %1, %6 : vector<20x32xf32>
    %8 = arith.mulf %7, %7 : vector<20x32xf32>
    %cst_3 = arith.constant dense<0.000000e+00> : vector<20xf32>
    %9 = vector.multi_reduction <add>, %8, %cst_3 [1] : vector<20x32xf32> to vector<20xf32>
    %10 = vector.shape_cast %9 : vector<20xf32> to vector<20x1xf32>
    %cst_4 = arith.constant 3.200000e+01 : f32
    %11 = vector.broadcast %cst_4 : f32 to vector<20x1xf32>
    %12 = arith.divf %10, %11 : vector<20x1xf32>
    %13 = vector.broadcast %5 : vector<20x1xf32> to vector<20x32xf32>
    %14 = arith.subf %1, %13 : vector<20x32xf32>
    %cst_5 = arith.constant 9.99999997E-7 : f32
    %15 = vector.broadcast %cst_5 : f32 to vector<20x1xf32>
    %16 = arith.addf %12, %15 : vector<20x1xf32>
    %17 = math.rsqrt %16 : vector<20x1xf32>
    %18 = vector.broadcast %17 : vector<20x1xf32> to vector<20x32xf32>
    %19 = arith.mulf %14, %18 : vector<20x32xf32>
    %c0_6 = arith.constant 0 : index
    %c0_7 = arith.constant 0 : index
    %20 = vector.load %arg2[%c0_6, %c0_7] : memref<1x32xf32, #tpu.memory_space<vmem>>, vector<1x32xf32>
    %21 = vector.broadcast %20 : vector<1x32xf32> to vector<20x32xf32>
    %22 = arith.mulf %19, %21 : vector<20x32xf32>
    %c0_8 = arith.constant 0 : index
    %c0_9 = arith.constant 0 : index
    %23 = vector.load %arg3[%c0_8, %c0_9] : memref<1x32xf32, #tpu.memory_space<vmem>>, vector<1x32xf32>
    %24 = vector.broadcast %23 : vector<1x32xf32> to vector<20x32xf32>
    %25 = arith.addf %22, %24 : vector<20x32xf32>
    %26 = arith.truncf %25 : vector<20x32xf32> to vector<20x32xbf16>
    %c0_10 = arith.constant 0 : index
    %c0_11 = arith.constant 0 : index
    %27 = vector.load %arg4[%c0_10, %c0_11] : memref<32x96xbf16, #tpu.memory_space<vmem>>, vector<32x96xbf16>
    %cst_12 = arith.constant dense<0.000000e+00> : vector<20x96xf32>
    %28 = tpu.matmul %26, %27, %cst_12 {dimension_numbers = #tpu.dot_dimension_numbers<[1], [0], [0], [1], [0, 0, 1, 1], [], []>} : vector<20x32xbf16>, vector<32x96xbf16>, vector<20x96xf32> -> vector<20x96xf32>
    %c0_13 = arith.constant 0 : index
    %c0_14 = arith.constant 0 : index
    %29 = vector.load %arg5[%c0_13, %c0_14] : memref<1x96xf32, #tpu.memory_space<vmem>>, vector<1x96xf32>
    %30 = vector.broadcast %29 : vector<1x96xf32> to vector<20x96xf32>
    %31 = arith.addf %28, %30 : vector<20x96xf32>
    %32 = vector.extract_strided_slice %31 {offsets = [0, 0], sizes = [20, 8], strides = [1, 1]} : vector<20x96xf32> to vector<20x8xf32>
    %33 = vector.extract_strided_slice %31 {offsets = [0, 32], sizes = [20, 8], strides = [1, 1]} : vector<20x96xf32> to vector<20x8xf32>
    %34 = vector.extract_strided_slice %31 {offsets = [0, 64], sizes = [20, 8], strides = [1, 1]} : vector<20x96xf32> to vector<20x8xf32>
    %35 = arith.truncf %32 : vector<20x8xf32> to vector<20x8xbf16>
    %36 = arith.truncf %33 : vector<20x8xf32> to vector<20x8xbf16>
    %cst_15 = arith.constant dense<0.000000e+00> : vector<20x20xf32>
    %37 = tpu.matmul %35, %36, %cst_15 {dimension_numbers = #tpu.dot_dimension_numbers<[1], [1], [0], [0], [0, 0, 1, 0], [], []>} : vector<20x8xbf16>, vector<20x8xbf16>, vector<20x20xf32> -> vector<20x20xf32>
    %cst_16 = arith.constant 0.353553385 : f32
    %38 = vector.broadcast %cst_16 : f32 to vector<20x20xf32>
    %39 = arith.mulf %37, %38 : vector<20x20xf32>
    %cst_17 = arith.constant dense<0xFF800000> : vector<20xf32>
    %40 = vector.multi_reduction <maximumf>, %39, %cst_17 [1] : vector<20x20xf32> to vector<20xf32>
    %41 = vector.shape_cast %40 : vector<20xf32> to vector<20x1xf32>
    %42 = vector.broadcast %41 : vector<20x1xf32> to vector<20x20xf32>
    %43 = arith.subf %39, %42 : vector<20x20xf32>
    %44 = math.exp %43 : vector<20x20xf32>
    %cst_18 = arith.constant dense<0.000000e+00> : vector<20xf32>
    %45 = vector.multi_reduction <add>, %44, %cst_18 [1] : vector<20x20xf32> to vector<20xf32>
    %46 = vector.shape_cast %45 : vector<20xf32> to vector<20x1xf32>
    %47 = tpu.reciprocal %46 {approx = true} : vector<20x1xf32> -> vector<20x1xf32>
    %48 = vector.broadcast %47 : vector<20x1xf32> to vector<20x20xf32>
    %49 = arith.mulf %44, %48 : vector<20x20xf32>
    %50 = arith.truncf %49 : vector<20x20xf32> to vector<20x20xbf16>
    %51 = arith.truncf %34 : vector<20x8xf32> to vector<20x8xbf16>
    %cst_19 = arith.constant dense<0.000000e+00> : vector<20x8xf32>
    %52 = tpu.matmul %50, %51, %cst_19 {dimension_numbers = #tpu.dot_dimension_numbers<[1], [0], [0], [1], [0, 0, 1, 1], [], []>} : vector<20x20xbf16>, vector<20x8xbf16>, vector<20x8xf32> -> vector<20x8xf32>
    %53 = vector.extract_strided_slice %31 {offsets = [0, 8], sizes = [20, 8], strides = [1, 1]} : vector<20x96xf32> to vector<20x8xf32>
    %54 = vector.extract_strided_slice %31 {offsets = [0, 40], sizes = [20, 8], strides = [1, 1]} : vector<20x96xf32> to vector<20x8xf32>
    %55 = vector.extract_strided_slice %31 {offsets = [0, 72], sizes = [20, 8], strides = [1, 1]} : vector<20x96xf32> to vector<20x8xf32>
    %56 = arith.truncf %53 : vector<20x8xf32> to vector<20x8xbf16>
    %57 = arith.truncf %54 : vector<20x8xf32> to vector<20x8xbf16>
    %cst_20 = arith.constant dense<0.000000e+00> : vector<20x20xf32>
    %58 = tpu.matmul %56, %57, %cst_20 {dimension_numbers = #tpu.dot_dimension_numbers<[1], [1], [0], [0], [0, 0, 1, 0], [], []>} : vector<20x8xbf16>, vector<20x8xbf16>, vector<20x20xf32> -> vector<20x20xf32>
    %cst_21 = arith.constant 0.353553385 : f32
    %59 = vector.broadcast %cst_21 : f32 to vector<20x20xf32>
    %60 = arith.mulf %58, %59 : vector<20x20xf32>
    %cst_22 = arith.constant dense<0xFF800000> : vector<20xf32>
    %61 = vector.multi_reduction <maximumf>, %60, %cst_22 [1] : vector<20x20xf32> to vector<20xf32>
    %62 = vector.shape_cast %61 : vector<20xf32> to vector<20x1xf32>
    %63 = vector.broadcast %62 : vector<20x1xf32> to vector<20x20xf32>
    %64 = arith.subf %60, %63 : vector<20x20xf32>
    %65 = math.exp %64 : vector<20x20xf32>
    %cst_23 = arith.constant dense<0.000000e+00> : vector<20xf32>
    %66 = vector.multi_reduction <add>, %65, %cst_23 [1] : vector<20x20xf32> to vector<20xf32>
    %67 = vector.shape_cast %66 : vector<20xf32> to vector<20x1xf32>
    %68 = tpu.reciprocal %67 {approx = true} : vector<20x1xf32> -> vector<20x1xf32>
    %69 = vector.broadcast %68 : vector<20x1xf32> to vector<20x20xf32>
    %70 = arith.mulf %65, %69 : vector<20x20xf32>
    %71 = arith.truncf %70 : vector<20x20xf32> to vector<20x20xbf16>
    %72 = arith.truncf %55 : vector<20x8xf32> to vector<20x8xbf16>
    %cst_24 = arith.constant dense<0.000000e+00> : vector<20x8xf32>
    %73 = tpu.matmul %71, %72, %cst_24 {dimension_numbers = #tpu.dot_dimension_numbers<[1], [0], [0], [1], [0, 0, 1, 1], [], []>} : vector<20x20xbf16>, vector<20x8xbf16>, vector<20x8xf32> -> vector<20x8xf32>
    %74 = vector.extract_strided_slice %31 {offsets = [0, 16], sizes = [20, 8], strides = [1, 1]} : vector<20x96xf32> to vector<20x8xf32>
    %75 = vector.extract_strided_slice %31 {offsets = [0, 48], sizes = [20, 8], strides = [1, 1]} : vector<20x96xf32> to vector<20x8xf32>
    %76 = vector.extract_strided_slice %31 {offsets = [0, 80], sizes = [20, 8], strides = [1, 1]} : vector<20x96xf32> to vector<20x8xf32>
    %77 = arith.truncf %74 : vector<20x8xf32> to vector<20x8xbf16>
    %78 = arith.truncf %75 : vector<20x8xf32> to vector<20x8xbf16>
    %cst_25 = arith.constant dense<0.000000e+00> : vector<20x20xf32>
    %79 = tpu.matmul %77, %78, %cst_25 {dimension_numbers = #tpu.dot_dimension_numbers<[1], [1], [0], [0], [0, 0, 1, 0], [], []>} : vector<20x8xbf16>, vector<20x8xbf16>, vector<20x20xf32> -> vector<20x20xf32>
    %cst_26 = arith.constant 0.353553385 : f32
    %80 = vector.broadcast %cst_26 : f32 to vector<20x20xf32>
    %81 = arith.mulf %79, %80 : vector<20x20xf32>
    %cst_27 = arith.constant dense<0xFF800000> : vector<20xf32>
    %82 = vector.multi_reduction <maximumf>, %81, %cst_27 [1] : vector<20x20xf32> to vector<20xf32>
    %83 = vector.shape_cast %82 : vector<20xf32> to vector<20x1xf32>
    %84 = vector.broadcast %83 : vector<20x1xf32> to vector<20x20xf32>
    %85 = arith.subf %81, %84 : vector<20x20xf32>
    %86 = math.exp %85 : vector<20x20xf32>
    %cst_28 = arith.constant dense<0.000000e+00> : vector<20xf32>
    %87 = vector.multi_reduction <add>, %86, %cst_28 [1] : vector<20x20xf32> to vector<20xf32>
    %88 = vector.shape_cast %87 : vector<20xf32> to vector<20x1xf32>
    %89 = tpu.reciprocal %88 {approx = true} : vector<20x1xf32> -> vector<20x1xf32>
    %90 = vector.broadcast %89 : vector<20x1xf32> to vector<20x20xf32>
    %91 = arith.mulf %86, %90 : vector<20x20xf32>
    %92 = arith.truncf %91 : vector<20x20xf32> to vector<20x20xbf16>
    %93 = arith.truncf %76 : vector<20x8xf32> to vector<20x8xbf16>
    %cst_29 = arith.constant dense<0.000000e+00> : vector<20x8xf32>
    %94 = tpu.matmul %92, %93, %cst_29 {dimension_numbers = #tpu.dot_dimension_numbers<[1], [0], [0], [1], [0, 0, 1, 1], [], []>} : vector<20x20xbf16>, vector<20x8xbf16>, vector<20x8xf32> -> vector<20x8xf32>
    %95 = vector.extract_strided_slice %31 {offsets = [0, 24], sizes = [20, 8], strides = [1, 1]} : vector<20x96xf32> to vector<20x8xf32>
    %96 = vector.extract_strided_slice %31 {offsets = [0, 56], sizes = [20, 8], strides = [1, 1]} : vector<20x96xf32> to vector<20x8xf32>
    %97 = vector.extract_strided_slice %31 {offsets = [0, 88], sizes = [20, 8], strides = [1, 1]} : vector<20x96xf32> to vector<20x8xf32>
    %98 = arith.truncf %95 : vector<20x8xf32> to vector<20x8xbf16>
    %99 = arith.truncf %96 : vector<20x8xf32> to vector<20x8xbf16>
    %cst_30 = arith.constant dense<0.000000e+00> : vector<20x20xf32>
    %100 = tpu.matmul %98, %99, %cst_30 {dimension_numbers = #tpu.dot_dimension_numbers<[1], [1], [0], [0], [0, 0, 1, 0], [], []>} : vector<20x8xbf16>, vector<20x8xbf16>, vector<20x20xf32> -> vector<20x20xf32>
    %cst_31 = arith.constant 0.353553385 : f32
    %101 = vector.broadcast %cst_31 : f32 to vector<20x20xf32>
    %102 = arith.mulf %100, %101 : vector<20x20xf32>
    %cst_32 = arith.constant dense<0xFF800000> : vector<20xf32>
    %103 = vector.multi_reduction <maximumf>, %102, %cst_32 [1] : vector<20x20xf32> to vector<20xf32>
    %104 = vector.shape_cast %103 : vector<20xf32> to vector<20x1xf32>
    %105 = vector.broadcast %104 : vector<20x1xf32> to vector<20x20xf32>
    %106 = arith.subf %102, %105 : vector<20x20xf32>
    %107 = math.exp %106 : vector<20x20xf32>
    %cst_33 = arith.constant dense<0.000000e+00> : vector<20xf32>
    %108 = vector.multi_reduction <add>, %107, %cst_33 [1] : vector<20x20xf32> to vector<20xf32>
    %109 = vector.shape_cast %108 : vector<20xf32> to vector<20x1xf32>
    %110 = tpu.reciprocal %109 {approx = true} : vector<20x1xf32> -> vector<20x1xf32>
    %111 = vector.broadcast %110 : vector<20x1xf32> to vector<20x20xf32>
    %112 = arith.mulf %107, %111 : vector<20x20xf32>
    %113 = arith.truncf %112 : vector<20x20xf32> to vector<20x20xbf16>
    %114 = arith.truncf %97 : vector<20x8xf32> to vector<20x8xbf16>
    %cst_34 = arith.constant dense<0.000000e+00> : vector<20x8xf32>
    %115 = tpu.matmul %113, %114, %cst_34 {dimension_numbers = #tpu.dot_dimension_numbers<[1], [0], [0], [1], [0, 0, 1, 1], [], []>} : vector<20x20xbf16>, vector<20x8xbf16>, vector<20x8xf32> -> vector<20x8xf32>
    %116 = tpu.concatenate %52, %73, %94, %115 in 1 : vector<20x8xf32>, vector<20x8xf32>, vector<20x8xf32>, vector<20x8xf32> -> vector<20x32xf32>
    %117 = arith.truncf %116 : vector<20x32xf32> to vector<20x32xbf16>
    %c0_35 = arith.constant 0 : index
    %c0_36 = arith.constant 0 : index
    %118 = vector.load %arg6[%c0_35, %c0_36] : memref<32x32xbf16, #tpu.memory_space<vmem>>, vector<32x32xbf16>
    %cst_37 = arith.constant dense<0.000000e+00> : vector<20x32xf32>
    %119 = tpu.matmul %117, %118, %cst_37 {dimension_numbers = #tpu.dot_dimension_numbers<[1], [0], [0], [1], [0, 0, 1, 1], [], []>} : vector<20x32xbf16>, vector<32x32xbf16>, vector<20x32xf32> -> vector<20x32xf32>
    %c0_38 = arith.constant 0 : index
    %c0_39 = arith.constant 0 : index
    %120 = vector.load %arg7[%c0_38, %c0_39] : memref<1x32xf32, #tpu.memory_space<vmem>>, vector<1x32xf32>
    %121 = vector.broadcast %120 : vector<1x32xf32> to vector<20x32xf32>
    %122 = arith.addf %119, %121 : vector<20x32xf32>
    %123 = arith.addf %122, %1 : vector<20x32xf32>
    %cst_40 = arith.constant dense<0.000000e+00> : vector<20xf32>
    %124 = vector.multi_reduction <add>, %123, %cst_40 [1] : vector<20x32xf32> to vector<20xf32>
    %125 = vector.shape_cast %124 : vector<20xf32> to vector<20x1xf32>
    %cst_41 = arith.constant 3.200000e+01 : f32
    %126 = vector.broadcast %cst_41 : f32 to vector<20x1xf32>
    %127 = arith.divf %125, %126 : vector<20x1xf32>
    %128 = vector.broadcast %127 : vector<20x1xf32> to vector<20x32xf32>
    %129 = arith.subf %123, %128 : vector<20x32xf32>
    %130 = arith.mulf %129, %129 : vector<20x32xf32>
    %cst_42 = arith.constant dense<0.000000e+00> : vector<20xf32>
    %131 = vector.multi_reduction <add>, %130, %cst_42 [1] : vector<20x32xf32> to vector<20xf32>
    %132 = vector.shape_cast %131 : vector<20xf32> to vector<20x1xf32>
    %cst_43 = arith.constant 3.200000e+01 : f32
    %133 = vector.broadcast %cst_43 : f32 to vector<20x1xf32>
    %134 = arith.divf %132, %133 : vector<20x1xf32>
    %135 = vector.broadcast %127 : vector<20x1xf32> to vector<20x32xf32>
    %136 = arith.subf %123, %135 : vector<20x32xf32>
    %cst_44 = arith.constant 9.99999997E-7 : f32
    %137 = vector.broadcast %cst_44 : f32 to vector<20x1xf32>
    %138 = arith.addf %134, %137 : vector<20x1xf32>
    %139 = math.rsqrt %138 : vector<20x1xf32>
    %140 = vector.broadcast %139 : vector<20x1xf32> to vector<20x32xf32>
    %141 = arith.mulf %136, %140 : vector<20x32xf32>
    %c0_45 = arith.constant 0 : index
    %c0_46 = arith.constant 0 : index
    %142 = vector.load %arg8[%c0_45, %c0_46] : memref<1x32xf32, #tpu.memory_space<vmem>>, vector<1x32xf32>
    %143 = vector.broadcast %142 : vector<1x32xf32> to vector<20x32xf32>
    %144 = arith.mulf %141, %143 : vector<20x32xf32>
    %c0_47 = arith.constant 0 : index
    %c0_48 = arith.constant 0 : index
    %145 = vector.load %arg9[%c0_47, %c0_48] : memref<1x32xf32, #tpu.memory_space<vmem>>, vector<1x32xf32>
    %146 = vector.broadcast %145 : vector<1x32xf32> to vector<20x32xf32>
    %147 = arith.addf %144, %146 : vector<20x32xf32>
    %148 = arith.truncf %147 : vector<20x32xf32> to vector<20x32xbf16>
    %c0_49 = arith.constant 0 : index
    %c0_50 = arith.constant 0 : index
    %149 = vector.load %arg10[%c0_49, %c0_50] : memref<32x64xbf16, #tpu.memory_space<vmem>>, vector<32x64xbf16>
    %cst_51 = arith.constant dense<0.000000e+00> : vector<20x64xf32>
    %150 = tpu.matmul %148, %149, %cst_51 {dimension_numbers = #tpu.dot_dimension_numbers<[1], [0], [0], [1], [0, 0, 1, 1], [], []>} : vector<20x32xbf16>, vector<32x64xbf16>, vector<20x64xf32> -> vector<20x64xf32>
    %c0_52 = arith.constant 0 : index
    %c0_53 = arith.constant 0 : index
    %151 = vector.load %arg11[%c0_52, %c0_53] : memref<1x64xf32, #tpu.memory_space<vmem>>, vector<1x64xf32>
    %152 = vector.broadcast %151 : vector<1x64xf32> to vector<20x64xf32>
    %153 = arith.addf %150, %152 : vector<20x64xf32>
    %cst_54 = arith.constant 5.000000e-01 : f32
    %154 = vector.broadcast %cst_54 : f32 to vector<20x64xf32>
    %155 = arith.mulf %154, %153 : vector<20x64xf32>
    %cst_55 = arith.constant 4.471500e-02 : f32
    %156 = vector.broadcast %cst_55 : f32 to vector<20x64xf32>
    %157 = arith.mulf %156, %153 : vector<20x64xf32>
    %158 = arith.mulf %157, %153 : vector<20x64xf32>
    %159 = arith.mulf %158, %153 : vector<20x64xf32>
    %160 = arith.addf %153, %159 : vector<20x64xf32>
    %cst_56 = arith.constant 0.797884583 : f32
    %161 = vector.broadcast %cst_56 : f32 to vector<20x64xf32>
    %162 = arith.mulf %161, %160 : vector<20x64xf32>
    %163 = math.tanh %162 : vector<20x64xf32>
    %cst_57 = arith.constant 1.000000e+00 : f32
    %164 = vector.broadcast %cst_57 : f32 to vector<20x64xf32>
    %165 = arith.addf %164, %163 : vector<20x64xf32>
    %166 = arith.mulf %155, %165 : vector<20x64xf32>
    %167 = arith.truncf %166 : vector<20x64xf32> to vector<20x64xbf16>
    %c0_58 = arith.constant 0 : index
    %c0_59 = arith.constant 0 : index
    %168 = vector.load %arg12[%c0_58, %c0_59] : memref<64x32xbf16, #tpu.memory_space<vmem>>, vector<64x32xbf16>
    %cst_60 = arith.constant dense<0.000000e+00> : vector<20x32xf32>
    %169 = tpu.matmul %167, %168, %cst_60 {dimension_numbers = #tpu.dot_dimension_numbers<[1], [0], [0], [1], [0, 0, 1, 1], [], []>} : vector<20x64xbf16>, vector<64x32xbf16>, vector<20x32xf32> -> vector<20x32xf32>
    %c0_61 = arith.constant 0 : index
    %c0_62 = arith.constant 0 : index
    %170 = vector.load %arg13[%c0_61, %c0_62] : memref<1x32xf32, #tpu.memory_space<vmem>>, vector<1x32xf32>
    %171 = vector.broadcast %170 : vector<1x32xf32> to vector<20x32xf32>
    %172 = arith.addf %169, %171 : vector<20x32xf32>
    %173 = arith.addf %172, %123 : vector<20x32xf32>
    %cst_63 = arith.constant dense<0.000000e+00> : vector<20xf32>
    %174 = vector.multi_reduction <add>, %173, %cst_63 [1] : vector<20x32xf32> to vector<20xf32>
    %175 = vector.shape_cast %174 : vector<20xf32> to vector<20x1xf32>
    %cst_64 = arith.constant 3.200000e+01 : f32
    %176 = vector.broadcast %cst_64 : f32 to vector<20x1xf32>
    %177 = arith.divf %175, %176 : vector<20x1xf32>
    %178 = vector.broadcast %177 : vector<20x1xf32> to vector<20x32xf32>
    %179 = arith.subf %173, %178 : vector<20x32xf32>
    %180 = arith.mulf %179, %179 : vector<20x32xf32>
    %cst_65 = arith.constant dense<0.000000e+00> : vector<20xf32>
    %181 = vector.multi_reduction <add>, %180, %cst_65 [1] : vector<20x32xf32> to vector<20xf32>
    %182 = vector.shape_cast %181 : vector<20xf32> to vector<20x1xf32>
    %cst_66 = arith.constant 3.200000e+01 : f32
    %183 = vector.broadcast %cst_66 : f32 to vector<20x1xf32>
    %184 = arith.divf %182, %183 : vector<20x1xf32>
    %185 = vector.broadcast %177 : vector<20x1xf32> to vector<20x32xf32>
    %186 = arith.subf %173, %185 : vector<20x32xf32>
    %cst_67 = arith.constant 9.99999997E-7 : f32
    %187 = vector.broadcast %cst_67 : f32 to vector<20x1xf32>
    %188 = arith.addf %184, %187 : vector<20x1xf32>
    %189 = math.rsqrt %188 : vector<20x1xf32>
    %190 = vector.broadcast %189 : vector<20x1xf32> to vector<20x32xf32>
    %191 = arith.mulf %186, %190 : vector<20x32xf32>
    %c0_68 = arith.constant 0 : index
    %c0_69 = arith.constant 0 : index
    %192 = vector.load %arg14[%c0_68, %c0_69] : memref<1x32xf32, #tpu.memory_space<vmem>>, vector<1x32xf32>
    %193 = vector.broadcast %192 : vector<1x32xf32> to vector<20x32xf32>
    %194 = arith.mulf %191, %193 : vector<20x32xf32>
    %c0_70 = arith.constant 0 : index
    %c0_71 = arith.constant 0 : index
    %195 = vector.load %arg15[%c0_70, %c0_71] : memref<1x32xf32, #tpu.memory_space<vmem>>, vector<1x32xf32>
    %196 = vector.broadcast %195 : vector<1x32xf32> to vector<20x32xf32>
    %197 = arith.addf %194, %196 : vector<20x32xf32>
    %c0_72 = arith.constant 0 : index
    %c0_73 = arith.constant 0 : index
    %c0_74 = arith.constant 0 : index
    %198 = vector.load %arg16[%c0_72, %c0_73, %c0_74] : memref<1x20x32xf32, #tpu.memory_space<vmem>>, vector<1x20x32xf32>
    %199 = vector.shape_cast %198 : vector<1x20x32xf32> to vector<20x32xf32>
    %200 = vector.shape_cast %197 : vector<20x32xf32> to vector<1x20x32xf32>
    tpu.vector_store %arg16[%c0_72, %c0_73, %c0_74], %200 {strides = array<i32>} : memref<1x20x32xf32, #tpu.memory_space<vmem>>, vector<1x20x32xf32>,
    return
  }
  func.func @transform_0(%arg0: i32) -> (i32, i32, i32) {
    %c0_i32 = arith.constant 0 : i32
    %c0_i32_0 = arith.constant 0 : i32
    %c0_i32_1 = arith.constant 0 : i32
    return %arg0, %c0_i32, %c0_i32_0 : i32, i32, i32
  }
  func.func @transform_1(%arg0: i32) -> (i32, i32) {
    %c0_i32 = arith.constant 0 : i32
    %c0_i32_0 = arith.constant 0 : i32
    %c0_i32_1 = arith.constant 0 : i32
    return %c0_i32, %c0_i32_0 : i32, i32
  }
  func.func @transform_2(%arg0: i32) -> (i32, i32) {
    %c0_i32 = arith.constant 0 : i32
    %c0_i32_0 = arith.constant 0 : i32
    %c0_i32_1 = arith.constant 0 : i32
    return %c0_i32, %c0_i32_0 : i32, i32
  }
  func.func @transform_3(%arg0: i32) -> (i32, i32) {
    %c0_i32 = arith.constant 0 : i32
    %c0_i32_0 = arith.constant 0 : i32
    %c0_i32_1 = arith.constant 0 : i32
    return %c0_i32, %c0_i32_0 : i32, i32
  }
  func.func @transform_4(%arg0: i32) -> (i32, i32) {
    %c0_i32 = arith.constant 0 : i32
    %c0_i32_0 = arith.constant 0 : i32
    %c0_i32_1 = arith.constant 0 : i32
    return %c0_i32, %c0_i32_0 : i32, i32
  }
  func.func @transform_5(%arg0: i32) -> (i32, i32) {
    %c0_i32 = arith.constant 0 : i32
    %c0_i32_0 = arith.constant 0 : i32
    %c0_i32_1 = arith.constant 0 : i32
    return %c0_i32, %c0_i32_0 : i32, i32
  }
  func.func @transform_6(%arg0: i32) -> (i32, i32) {
    %c0_i32 = arith.constant 0 : i32
    %c0_i32_0 = arith.constant 0 : i32
    %c0_i32_1 = arith.constant 0 : i32
    return %c0_i32, %c0_i32_0 : i32, i32
  }
  func.func @transform_7(%arg0: i32) -> (i32, i32) {
    %c0_i32 = arith.constant 0 : i32
    %c0_i32_0 = arith.constant 0 : i32
    %c0_i32_1 = arith.constant 0 : i32
    return %c0_i32, %c0_i32_0 : i32, i32
  }
  func.func @transform_8(%arg0: i32) -> (i32, i32) {
    %c0_i32 = arith.constant 0 : i32
    %c0_i32_0 = arith.constant 0 : i32
    %c0_i32_1 = arith.constant 0 : i32
    return %c0_i32, %c0_i32_0 : i32, i32
  }
  func.func @transform_9(%arg0: i32) -> (i32, i32) {
    %c0_i32 = arith.constant 0 : i32
    %c0_i32_0 = arith.constant 0 : i32
    %c0_i32_1 = arith.constant 0 : i32
    return %c0_i32, %c0_i32_0 : i32, i32
  }
  func.func @transform_10(%arg0: i32) -> (i32, i32) {
    %c0_i32 = arith.constant 0 : i32
    %c0_i32_0 = arith.constant 0 : i32
    %c0_i32_1 = arith.constant 0 : i32
    return %c0_i32, %c0_i32_0 : i32, i32
  }
  func.func @transform_11(%arg0: i32) -> (i32, i32) {
    %c0_i32 = arith.constant 0 : i32
    %c0_i32_0 = arith.constant 0 : i32
    %c0_i32_1 = arith.constant 0 : i32
    return %c0_i32, %c0_i32_0 : i32, i32
  }
  func.func @transform_12(%arg0: i32) -> (i32, i32) {
    %c0_i32 = arith.constant 0 : i32
    %c0_i32_0 = arith.constant 0 : i32
    %c0_i32_1 = arith.constant 0 : i32
    return %c0_i32, %c0_i32_0 : i32, i32
  }
  func.func @transform_13(%arg0: i32) -> (i32, i32) {
    %c0_i32 = arith.constant 0 : i32
    %c0_i32_0 = arith.constant 0 : i32
    %c0_i32_1 = arith.constant 0 : i32
    return %c0_i32, %c0_i32_0 : i32, i32
  }
  func.func @transform_14(%arg0: i32) -> (i32, i32) {
    %c0_i32 = arith.constant 0 : i32
    %c0_i32_0 = arith.constant 0 : i32
    %c0_i32_1 = arith.constant 0 : i32
    return %c0_i32, %c0_i32_0 : i32, i32
  }
  func.func @transform_15(%arg0: i32) -> (i32, i32, i32) {
    %c0_i32 = arith.constant 0 : i32
    %c0_i32_0 = arith.constant 0 : i32
    %c0_i32_1 = arith.constant 0 : i32
    return %arg0, %c0_i32, %c0_i32_0 : i32, i32, i32
  }
}

</mosaic_0001>

<llo_original>
// kernel: _lambda_.4
$region0: #{_lambda_.4}
  #allocation0 [shape = 'u32[]', space=smem, size = 0x4, offset = 0x4, fixed_abs, tag = 'smem constant byte address 0x4 - core index']
  #allocation1 [shape = 'u32[144,128]{1,0:T(1,128)}', space=vmem, size = 0x12000, scoped, tag = 'internal scratch']
  %s0 = inlined_call_operand.vmem [shape: f32[2,20,32], index: 0, kind: input, shape index: {}]
  %s1 = inlined_call_operand.vmem [shape: f32[1,20,32], index: 1, kind: input, shape index: {}]
  %s2 = inlined_call_operand.vmem [shape: f32[1,32], index: 2, kind: input, shape index: {}]
  %s3 = inlined_call_operand.vmem [shape: f32[1,32], index: 3, kind: input, shape index: {}]
  %s4 = inlined_call_operand.vmem [shape: f32[2,20,32], index: 4, kind: output, shape index: {0}]
  %s5 = inlined_call_operand.vmem [shape: f32[2,20,32], index: 5, kind: output, shape index: {1}]
  %6 = xla_tuple %s4, %s5
  %s7 = sld [smem:[#allocation0]]
  $region57: #{_lambda_.4} parent=0
    _
  %s9 = ssub.s32 1, %s7
  %s10 = scalar_select 0, %s9, %s7
  loop: start=0, step=1, limit=4
  $region2: #{_lambda_.4} parent=0 // loop_pre_header
    _
  $region3: #{_lambda_.4} parent=0 // loop_header
    %s12 = sphi 0, %s16
    %p13 = scmp.ge.s32.totalorder %s12, 4
    %s22 = sphi 0, %s24
    %s25 = sphi 0, %s22
    %s26 = sphi 0, %s25
    %s42 = sphi 0, %s26
    %s46 = sphi 0, %s46
    %s48 = sphi 0, %s46
    %s49 = sphi 0, %s48
    %s63 = sphi 0, %s49
    %s67 = sphi 0, %s67
    %s69 = sphi 0, %s67
    %s70 = sphi 0, %s69
    %s84 = sphi 0, %s70
    %s88 = sphi 0, %s88
    %s90 = sphi 0, %s88
    %s91 = sphi 0, %s90
    %s105 = sphi 0, %s91
    %s111 = sphi 0, %s113
    %s114 = sphi 0, %s111
    %s115 = sphi 0, %s114
    %s131 = sphi 0, %s115
    %s137 = sphi 0, %s139
    %s140 = sphi 0, %s137
    %s141 = sphi 0, %s140
    %s157 = sphi 0, %s141
  $region4: #{_lambda_.4} parent=0 // loop_header_branch
    %15 = sbr.rel (%p13) target = $region8
  $region5: #{_lambda_.4} parent=0 // loop_body
    %s17 = ssub.s32 %s12, 1
    %s18 = ssub.s32 %s12, 2
    %s19 = sadd.s32 %s12, 1
    %s20 = ssub.s32 %s12, %s19
    %p21 = scmp.eq.s32.totalorder %s20, 0
    %s23 = sadd.s32 %s22, 1
    %s24 = scalar_select %p21, %s22, %s23
    %p27 = pneg %p21
    %p28 = scmp.eq.s32.totalorder %s12, 1
    %p29 = por %p27, %p28
    %p30 = scmp.ne.s32.totalorder %s22, %s25
    %p31 = scmp.eq.s32.totalorder %s12, 0
    %p32 = por %p30, %p31
    %p33 = scmp.ne.s32.totalorder %s22, %s25
    %p34 = scmp.eq.s32.totalorder %s17, 1
    %p35 = por %p33, %p34
    %p36 = scmp.ne.s32.totalorder %s25, %s26
    %p37 = scmp.eq.s32.totalorder %s17, 0
    %p38 = por %p36, %p37
    %p39 = scmp.ne.s32.totalorder %s25, %s26
    %p40 = scmp.eq.s32.totalorder %s18, 1
    %p41 = por %p39, %p40
    %p43 = scmp.ne.s32.totalorder %s26, %s42
    %p44 = scmp.eq.s32.totalorder %s18, 0
    %p45 = por %p43, %p44
    %s47 = sadd.s32 %s46, 1
    %p50 = scmp.eq.s32.totalorder %s12, 1
    %p51 = scmp.ne.s32.totalorder %s46, %s48
    %p52 = scmp.eq.s32.totalorder %s12, 0
    %p53 = por %p51, %p52
    %p54 = scmp.ne.s32.totalorder %s46, %s48
    %p55 = scmp.eq.s32.totalorder %s17, 1
    %p56 = por %p54, %p55
    %p57 = scmp.ne.s32.totalorder %s48, %s49
    %p58 = scmp.eq.s32.totalorder %s17, 0
    %p59 = por %p57, %p58
    %p60 = scmp.ne.s32.totalorder %s48, %s49
    %p61 = scmp.eq.s32.totalorder %s18, 1
    %p62 = por %p60, %p61
    %p64 = scmp.ne.s32.totalorder %s49, %s63
    %p65 = scmp.eq.s32.totalorder %s18, 0
    %p66 = por %p64, %p65
    %s68 = sadd.s32 %s67, 1
    %p71 = scmp.eq.s32.totalorder %s12, 1
    %p72 = scmp.ne.s32.totalorder %s67, %s69
    %p73 = scmp.eq.s32.totalorder %s12, 0
    %p74 = por %p72, %p73
    %p75 = scmp.ne.s32.totalorder %s67, %s69
    %p76 = scmp.eq.s32.totalorder %s17, 1
    %p77 = por %p75, %p76
    %p78 = scmp.ne.s32.totalorder %s69, %s70
    %p79 = scmp.eq.s32.totalorder %s17, 0
    %p80 = por %p78, %p79
    %p81 = scmp.ne.s32.totalorder %s69, %s70
    %p82 = scmp.eq.s32.totalorder %s18, 1
    %p83 = por %p81, %p82
    %p85 = scmp.ne.s32.totalorder %s70, %s84
    %p86 = scmp.eq.s32.totalorder %s18, 0
    %p87 = por %p85, %p86
    %s89 = sadd.s32 %s88, 1
    %p92 = scmp.eq.s32.totalorder %s12, 1
    %p93 = scmp.ne.s32.totalorder %s88, %s90
    %p94 = scmp.eq.s32.totalorder %s12, 0
    %p95 = por %p93, %p94
    %p96 = scmp.ne.s32.totalorder %s88, %s90
    %p97 = scmp.eq.s32.totalorder %s17, 1
    %p98 = por %p96, %p97
    %p99 = scmp.ne.s32.totalorder %s90, %s91
    %p100 = scmp.eq.s32.totalorder %s17, 0
    %p101 = por %p99, %p100
    %p102 = scmp.ne.s32.totalorder %s90, %s91
    %p103 = scmp.eq.s32.totalorder %s18, 1
    %p104 = por %p102, %p103
    %p106 = scmp.ne.s32.totalorder %s91, %s105
    %p107 = scmp.eq.s32.totalorder %s18, 0
    %p108 = por %p106, %p107
    %s109 = ssub.s32 %s12, %s19
    %p110 = scmp.eq.s32.totalorder %s109, 0
    %s112 = sadd.s32 %s111, 1
    %s113 = scalar_select %p110, %s111, %s112
    %p116 = pneg %p110
    %p117 = scmp.eq.s32.totalorder %s12, 1
    %p118 = por %p116, %p117
    %p119 = scmp.ne.s32.totalorder %s111, %s114
    %p120 = scmp.eq.s32.totalorder %s12, 0
    %p121 = por %p119, %p120
    %p122 = scmp.ne.s32.totalorder %s111, %s114
    %p123 = scmp.eq.s32.totalorder %s17, 1
    %p124 = por %p122, %p123
    %p125 = scmp.ne.s32.totalorder %s114, %s115
    %p126 = scmp.eq.s32.totalorder %s17, 0
    %p127 = por %p125, %p126
    %p128 = scmp.ne.s32.totalorder %s114, %s115
    %p129 = scmp.eq.s32.totalorder %s18, 1
    %p130 = por %p128, %p129
    %p132 = scmp.ne.s32.totalorder %s115, %s131
    %p133 = scmp.eq.s32.totalorder %s18, 0
    %p134 = por %p132, %p133
    %s135 = ssub.s32 %s12, %s19
    %p136 = scmp.eq.s32.totalorder %s135, 0
    %s138 = sadd.s32 %s137, 1
    %s139 = scalar_select %p136, %s137, %s138
    %p142 = pneg %p136
    %p143 = scmp.eq.s32.totalorder %s12, 1
    %p144 = por %p142, %p143
    %p145 = scmp.ne.s32.totalorder %s137, %s140
    %p146 = scmp.eq.s32.totalorder %s12, 0
    %p147 = por %p145, %p146
    %p148 = scmp.ne.s32.totalorder %s137, %s140
    %p149 = scmp.eq.s32.totalorder %s17, 1
    %p150 = por %p148, %p149
    %p151 = scmp.ne.s32.totalorder %s140, %s141
    %p152 = scmp.eq.s32.totalorder %s17, 0
    %p153 = por %p151, %p152
    %p154 = scmp.ne.s32.totalorder %s140, %s141
    %p155 = scmp.eq.s32.totalorder %s18, 1
    %p156 = por %p154, %p155
    %p158 = scmp.ne.s32.totalorder %s141, %s157
    %p159 = scmp.eq.s32.totalorder %s18, 0
    %p160 = por %p158, %p159
    %p161 = scmp.le.s32.totalorder 1, %s12
    %p162 = scmp.lt.s32.totalorder %s12, 3
    %p163 = pnand %p161, %p162
    %p164 = pneg %p163
    // Predicated region
    $region9: #{_lambda_.4} parent=5 // pred_check
      _
    $region10: #{_lambda_.4} parent=5 // pred_check_branch
      %166 = sbr.rel (%p163) target = $region12
    $region11: #{_lambda_.4} parent=5 // pred_region
      %s167 = ssub.s32 %s12, 1
      // Predicated region
      $region13: #{_lambda_.4} parent=11 // pred_check
        %p168 = pneg %p59
      $region14: #{_lambda_.4} parent=11 // pred_check_branch
        %170 = sbr.rel (%p168) target = $region16
      $region15: #{_lambda_.4} parent=11 // pred_region
        _
      $region16: #{_lambda_.4} parent=11 // pred_fallthru
        _
      // Predicated region
      $region17: #{_lambda_.4} parent=11 // pred_check
        %p171 = pneg %p80
      $region18: #{_lambda_.4} parent=11 // pred_check_branch
        %173 = sbr.rel (%p171) target = $region20
      $region19: #{_lambda_.4} parent=11 // pred_region
        _
      $region20: #{_lambda_.4} parent=11 // pred_fallthru
        _
      // Predicated region
      $region21: #{_lambda_.4} parent=11 // pred_check
        %p174 = pneg %p101
      $region22: #{_lambda_.4} parent=11 // pred_check_branch
        %176 = sbr.rel (%p174) target = $region24
      $region23: #{_lambda_.4} parent=11 // pred_region
        _
      $region24: #{_lambda_.4} parent=11 // pred_fallthru
        _
    $region12: #{_lambda_.4} parent=5 // pred_fallthru
      _
    %p177 = scmp.lt.s32.totalorder %s12, 2
    // Predicated region
    $region25: #{_lambda_.4} parent=5 // pred_check
      %p178 = pneg %p177
    $region26: #{_lambda_.4} parent=5 // pred_check_branch
      %180 = sbr.rel (%p178) target = $region28
    $region27: #{_lambda_.4} parent=5 // pred_region
      // Predicated region
      $region29: #{_lambda_.4} parent=27 // pred_check
        %p181 = pneg %p32
      $region30: #{_lambda_.4} parent=27 // pred_check_branch
        %183 = sbr.rel (%p181) target = $region32
      $region31: #{_lambda_.4} parent=27 // pred_region
        %p184 = scmp.lt.s32.totalorder %s12, 1
        %s185 = scalar_select %p184, %s12, 1
        %s186 = smul.addr %s185, 3
        %s187 = smul.addr %s186, 8
        %s188 = scalar_lea.vmem %s0, %s187
      $region32: #{_lambda_.4} parent=27 // pred_fallthru
        _
    $region28: #{_lambda_.4} parent=5 // pred_fallthru
      _
    %p189 = scmp.le.s32.totalorder 1, %s12
    %p190 = scmp.lt.s32.totalorder %s12, 3
    %p191 = pnand %p189, %p190
    %p192 = pneg %p191
    // Predicated region
    $region33: #{_lambda_.4} parent=5 // pred_check
      _
    $region34: #{_lambda_.4} parent=5 // pred_check_branch
      %194 = sbr.rel (%p191) target = $region36
    $region35: #{_lambda_.4} parent=5 // pred_region
      %s195 = ssub.s32 %s12, 1
      %p196 = scmp.lt.s32.totalorder %s17, 1
      %s197 = scalar_select %p196, %s17, 1
      %s198 = smul.addr %s197, 3
      %s199 = smul.addr %s198, 8
      %s200 = scalar_lea.vmem %s0, %s199
      %p201 = pneg %p38
      %p202 = pneg %p35
      %p203 = pneg %p59
      %p204 = pneg %p56
      %p205 = pneg %p80
      %p206 = pneg %p77
      %p207 = pneg %p101
      %p208 = pneg %p98
      %p209 = pneg %p127
      %p210 = pneg %p124
      %p211 = scmp.lt.s32.totalorder %s17, 1
      %s212 = scalar_select %p211, %s17, 1
      %s213 = smul.addr %s212, 3
      %s214 = smul.addr %s213, 8
      %s215 = scalar_lea.vmem %s4, %s214
      %p216 = pneg %p153
      %p217 = pneg %p150
      %p218 = scmp.lt.s32.totalorder %s17, 1
      %s219 = scalar_select %p218, %s17, 1
      %s220 = smul.addr %s219, 3
      %s221 = smul.addr %s220, 8
      %s222 = scalar_lea.vmem %s5, %s221
      %p223 = scmp.lt.s32.totalorder %s17, 1
      %s224 = scalar_select %p223, %s17, 1
      %s225 = smul.addr %s224, 3
      %s226 = smul.addr %s225, 8
      %s227 = scalar_lea.vmem %s0, %s226
      %p228 = scmp.lt.s32.totalorder %s17, 1
      %s229 = scalar_select %p228, %s17, 1
      %s230 = smul.addr %s229, 3
      %s231 = smul.addr %s230, 8
      %s232 = scalar_lea.vmem %s4, %s231
      %p233 = scmp.lt.s32.totalorder %s17, 1
      %s234 = scalar_select %p233, %s17, 1
      %s235 = smul.addr %s234, 3
      %s236 = smul.addr %s235, 8
      %s237 = scalar_lea.vmem %s5, %s236
      %v238 = vld [vmem:[%s227] sm:$0xff]
      %v239 = vld [vmem:[%s227 + $0x8] sm:$0xff]
      %v240 = vld [vmem:[%s227 + $0x10] sm:$0xf]
      %v241 = vld [vmem:[%s1] sm:$0xff]
      %v242 = vld [vmem:[%s1 + $0x8] sm:$0xff]
      %v243 = vld [vmem:[%s1 + $0x10] sm:$0xf]
      %v244 = vadd.f32 %v238, %v241
      %v245 = vadd.f32 %v239, %v242
      %v246 = vadd.f32 %v240, %v243
      %vm247 = vcmask 261120
      %248 = vst.msk [vmem:[%s232] sm:$0xff] %vm247, %v244
      %249 = vst.msk [vmem:[%s232 + $0x8] sm:$0xff] %vm247, %v245
      %vm250 = vcmask 257024
      %251 = vst.msk [vmem:[%s232 + $0x10] sm:$0xf] %vm250, %v246
      %v252 = vsel %vm247, %v244, 0.0
      %253 = vadd.xlane.f32.xlu0 %v252
      %v254 = vpop.xlane.xlu0 %253
      %v255 = vsel %vm247, %v245, 0.0
      %256 = vadd.xlane.f32.xlu0 %v255
      %v257 = vpop.xlane.xlu0 %256
      %v258 = vsel %vm250, %v246, 0.0
      %259 = vadd.xlane.f32.xlu0 %v258
      %v260 = vpop.xlane.xlu0 %259
      %v261 = vrcp.pop 32.0
      %v262 = vmul.f32 %v254, %v261
      %v263 = vmul.f32 %v257, %v261
      %v264 = vmul.f32 %v260, %v261
      %v265 = vsub.f32 %v244, %v262
      %v266 = vsub.f32 %v245, %v263
      %v267 = vsub.f32 %v246, %v264
      %v268 = vmul.f32 %v265, %v265
      %v269 = vmul.f32 %v266, %v266
      %v270 = vmul.f32 %v267, %v267
      %v271 = vsel %vm247, %v268, 0.0
      %272 = vadd.xlane.f32.xlu0 %v271
      %v273 = vpop.xlane.xlu0 %272
      %v274 = vsel %vm247, %v269, 0.0
      %275 = vadd.xlane.f32.xlu0 %v274
      %v276 = vpop.xlane.xlu0 %275
      %v277 = vsel %vm250, %v270, 0.0
      %278 = vadd.xlane.f32.xlu0 %v277
      %v279 = vpop.xlane.xlu0 %278
      %v280 = vmul.f32 %v273, %v261
      %v281 = vmul.f32 %v276, %v261
      %v282 = vmul.f32 %v279, %v261
      %v283 = vadd.f32 %v280, 1e-06
      %v284 = vadd.f32 %v281, 1e-06
      %v285 = vadd.f32 %v282, 1e-06
      %v286 = vrsqrt.pop %v283
      %v287 = vrsqrt.pop %v284
      %v288 = vrsqrt.pop %v285
      %v289 = vmul.f32 %v265, %v286
      %v290 = vmul.f32 %v266, %v287
      %v291 = vmul.f32 %v267, %v288
      %v292 = vld [vmem:[%s2] sm:$0x1]
      %v294 = vlaneseq
      %v295 = vshrl.u32 %v294, 7
      %v296 = vsub.s32 0, %v295
      %v297 = vrot.slane %v292, %v296
      %v299 = vmul.f32 %v289, %v297
      %v300 = vmul.f32 %v290, %v297
      %v301 = vmul.f32 %v291, %v297
      %v302 = vld [vmem:[%s3] sm:$0x1]
      %v304 = vlaneseq
      %v305 = vshrl.u32 %v304, 7
      %v306 = vsub.s32 0, %v305
      %v307 = vrot.slane %v302, %v306
      %v309 = vadd.f32 %v299, %v307
      %v310 = vadd.f32 %v300, %v307
      %v311 = vadd.f32 %v301, %v307
      %312 = vst.msk [vmem:[%s237] sm:$0xff] %vm247, %v309
      %313 = vst.msk [vmem:[%s237 + $0x8] sm:$0xff] %vm247, %v310
      %314 = vst.msk [vmem:[%s237 + $0x10] sm:$0xf] %vm250, %v311
      %p315 = scmp.lt.s32.totalorder %s17, 1
      %s316 = scalar_select %p315, %s17, 1
      %s317 = smul.addr %s316, 3
      %s318 = smul.addr %s317, 8
      %s319 = scalar_lea.vmem %s4, %s318
      %p320 = scmp.lt.s32.totalorder %s17, 1
      %s321 = scalar_select %p320, %s17, 1
      %s322 = smul.addr %s321, 3
      %s323 = smul.addr %s322, 8
      %s324 = scalar_lea.vmem %s5, %s323
      // Predicated region
      $region37: #{_lambda_.4} parent=35 // pred_check
        %p325 = pneg %p124
      $region38: #{_lambda_.4} parent=35 // pred_check_branch
        %327 = sbr.rel (%p325) target = $region40
      $region39: #{_lambda_.4} parent=35 // pred_region
        _
      $region40: #{_lambda_.4} parent=35 // pred_fallthru
        _
      // Predicated region
      $region41: #{_lambda_.4} parent=35 // pred_check
        %p328 = pneg %p150
      $region42: #{_lambda_.4} parent=35 // pred_check_branch
        %330 = sbr.rel (%p328) target = $region44
      $region43: #{_lambda_.4} parent=35 // pred_region
        _
      $region44: #{_lambda_.4} parent=35 // pred_fallthru
        _
    $region36: #{_lambda_.4} parent=5 // pred_fallthru
      _
    %p331 = scmp.le.s32.totalorder 2, %s12
    // Predicated region
    $region45: #{_lambda_.4} parent=5 // pred_check
      %p332 = pneg %p331
    $region46: #{_lambda_.4} parent=5 // pred_check_branch
      %334 = sbr.rel (%p332) target = $region48
    $region47: #{_lambda_.4} parent=5 // pred_region
      %s335 = ssub.s32 %s12, 2
      // Predicated region
      $region49: #{_lambda_.4} parent=47 // pred_check
        %p336 = pneg %p130
      $region50: #{_lambda_.4} parent=47 // pred_check_branch
        %338 = sbr.rel (%p336) target = $region52
      $region51: #{_lambda_.4} parent=47 // pred_region
        %p339 = scmp.lt.s32.totalorder %s18, 1
        %s340 = scalar_select %p339, %s18, 1
        %s341 = smul.addr %s340, 3
        %s342 = smul.addr %s341, 8
        %s343 = scalar_lea.vmem %s4, %s342
      $region52: #{_lambda_.4} parent=47 // pred_fallthru
        _
      // Predicated region
      $region53: #{_lambda_.4} parent=47 // pred_check
        %p344 = pneg %p156
      $region54: #{_lambda_.4} parent=47 // pred_check_branch
        %346 = sbr.rel (%p344) target = $region56
      $region55: #{_lambda_.4} parent=47 // pred_region
        %p347 = scmp.lt.s32.totalorder %s18, 1
        %s348 = scalar_select %p347, %s18, 1
        %s349 = smul.addr %s348, 3
        %s350 = smul.addr %s349, 8
        %s351 = scalar_lea.vmem %s5, %s350
      $region56: #{_lambda_.4} parent=47 // pred_fallthru
        _
    $region48: #{_lambda_.4} parent=5 // pred_fallthru
      _
  $region6: #{_lambda_.4} parent=0 // loop_footer
    %s16 = sadd.s32 1, %s12
  $region7: #{_lambda_.4} parent=0 // loop_footer_branch
    %11 = sbr.rel target = $region3
  $region8: #{_lambda_.4} parent=0 // loop_exit
    _

// kernel: _lambda_.5
$region0: #{_lambda_.5}
  #allocation0 [shape = 'u32[]', space=smem, size = 0x4, offset = 0x4, fixed_abs, tag = 'smem constant byte address 0x4 - core index']
  #allocation1 [shape = 'u32[144,128]{1,0:T(1,128)}', space=vmem, size = 0x12000, scoped, tag = 'internal scratch']
  %s0 = inlined_call_operand.vmem [shape: f32[32,64], index: 0, kind: input, shape index: {}]
  %s1 = inlined_call_operand.vmem [shape: bf16[64,64], index: 1, kind: input, shape index: {}]
  %s2 = inlined_call_operand.vmem [shape: f32[32,64], index: 2, kind: output, shape index: {}]
  %s3 = sld [smem:[#allocation0]]
  $region18: #{_lambda_.5} parent=0
    _
  %s5 = ssub.s32 1, %s3
  %s6 = scalar_select 0, %s5, %s3
  // Predicated region
  $region2: #{_lambda_.5} parent=0 // pred_check
    _
  $region3: #{_lambda_.5} parent=0 // pred_check_branch
    %8 = sbr.rel (0) target = $region5
  $region4: #{_lambda_.5} parent=0 // pred_region
    _
  $region5: #{_lambda_.5} parent=0 // pred_fallthru
    _
  // Predicated region
  $region6: #{_lambda_.5} parent=0 // pred_check
    _
  $region7: #{_lambda_.5} parent=0 // pred_check_branch
    %10 = sbr.rel (0) target = $region9
  $region8: #{_lambda_.5} parent=0 // pred_region
    _
  $region9: #{_lambda_.5} parent=0 // pred_fallthru
    _
  %v12 = vld [vmem:[%s0] sm:$0xff]
  %v13 = vld [vmem:[%s0 + $0x8] sm:$0xff]
  %v14 = vld [vmem:[%s0 + $0x10] sm:$0xff]
  %v15 = vld [vmem:[%s0 + $0x18] sm:$0xff]
  %v16 = vpack.c.bf16 %v13, %v12
  %v17 = vpack.c.bf16 %v15, %v14
  %v18 = vld [vmem:[%s1] sm:$0xf]
  %v19 = vld [vmem:[%s1 + $0x4] sm:$0xf]
  %v20 = vld [vmem:[%s1 + $0x8] sm:$0xf]
  %v21 = vld [vmem:[%s1 + $0xc] sm:$0xf]
  %v22 = vld [vmem:[%s1 + $0x10] sm:$0xf]
  %v23 = vld [vmem:[%s1 + $0x14] sm:$0xf]
  %v24 = vld [vmem:[%s1 + $0x18] sm:$0xf]
  %v25 = vld [vmem:[%s1 + $0x1c] sm:$0xf]
  %v34 = vunpack.c.l.b16 %v18
  %v35 = vunpack.c.l.b16 %v19
  %v36 = vunpack.c.l.b16 %v20
  %v37 = vunpack.c.l.b16 %v21
  %v38 = vunpack.c.l.b16 %v22
  %v39 = vunpack.c.l.b16 %v23
  %v40 = vunpack.c.l.b16 %v24
  %v41 = vunpack.c.l.b16 %v25
  %v42 = vpack.c.b16 %v35, %v34
  %v43 = vpack.c.b16 %v37, %v36
  %v44 = vpack.c.b16 %v39, %v38
  %v45 = vpack.c.b16 %v41, %v40
  %vm50 = vcmask 523264
  %v52 = vsel %vm50, %v16, 0
  %v55 = vsel %vm50, %v17, 0
  %57 = vmatprep.subr.bf16.mxu0 0
  %58 = vmatpush1.bf16.msra.mxu0 %v42
  %59 = vmatprep.subr.bf16.mxu0 0
  %60 = vmatpush1.bf16.msra.mxu0 %v43
  %61 = vmatprep.subr.bf16.mxu0 0
  %62 = vmatpush1.bf16.msra.mxu0 %v44
  %63 = vmatprep.subr.bf16.mxu0 0
  %64 = vmatpush1.bf16.msra.mxu0 %v45
  %65 = vmatprep.subr.bf16.mxu0 0
  %66 = vmatpush1.bf16.msra.mxu0 0
  %67 = vmatprep.subr.bf16.mxu0 0
  %68 = vmatpush1.bf16.msra.mxu0 0
  %69 = vmatprep.subr.bf16.mxu0 0
  %70 = vmatpush1.bf16.msra.mxu0 0
  %71 = vmatprep.subr.bf16.mxu0 0
  %72 = vmatpush1.bf16.msra.mxu0 0
  %73 = vmatprep.subr.bf16.mxu0 0
  %74 = vmatpush1.bf16.msra.mxu0 0
  %75 = vmatprep.subr.bf16.mxu0 0
  %76 = vmatpush1.bf16.msra.mxu0 0
  %77 = vmatprep.subr.bf16.mxu0 0
  %78 = vmatpush1.bf16.msra.mxu0 0
  %79 = vmatprep.subr.bf16.mxu0 0
  %80 = vmatpush1.bf16.msra.mxu0 0
  %81 = vmatprep.subr.bf16.mxu0 0
  %82 = vmatpush1.bf16.msra.mxu0 0
  %83 = vmatprep.subr.bf16.mxu0 0
  %84 = vmatpush1.bf16.msra.mxu0 0
  %85 = vmatprep.subr.bf16.mxu0 0
  %86 = vmatpush1.bf16.msra.mxu0 0
  %87 = vmatprep.subr.bf16.mxu0 0
  %88 = vmatpush1.bf16.msra.mxu0 0
  %89 = vmatprep.mubr.bf16.mxu0 0
  %90 = vmatmul.mubr.bf16.gmra.mrb[0].mxu0 %v52
  %v91 = vpop.f32.mrb[0].mxu0
  %v92 = vadd.f32 0.0, %v91
  %v93 = vpop.f32.mrb[0].mxu0
  %v94 = vpop.f32.mrb[0].mxu0
  %v95 = vadd.f32 0.0, %v94
  %v96 = vpop.f32.mrb[0].mxu0
  %97 = vmatprep.mubr.bf16.mxu0 0
  %98 = vmatmul.mubr.bf16.gmra.mrb[0].mxu0 %v55
  %v99 = vpop.f32.mrb[0].mxu0
  %v100 = vadd.f32 0.0, %v99
  %v101 = vpop.f32.mrb[0].mxu0
  %v102 = vpop.f32.mrb[0].mxu0
  %v103 = vadd.f32 0.0, %v102
  %v104 = vpop.f32.mrb[0].mxu0
  %105 = vdwg.mxu0
  %106 = vst.msk [vmem:[%s2] sm:$0xff] %vm50, %v92
  %107 = vst.msk [vmem:[%s2 + $0x8] sm:$0xff] %vm50, %v95
  %108 = vst.msk [vmem:[%s2 + $0x10] sm:$0xff] %vm50, %v100
  %109 = vst.msk [vmem:[%s2 + $0x18] sm:$0xff] %vm50, %v103
  // Predicated region
  $region10: #{_lambda_.5} parent=0 // pred_check
    _
  $region11: #{_lambda_.5} parent=0 // pred_check_branch
    %111 = sbr.rel (0) target = $region13
  $region12: #{_lambda_.5} parent=0 // pred_region
    _
  $region13: #{_lambda_.5} parent=0 // pred_fallthru
    _
  // Predicated region
  $region14: #{_lambda_.5} parent=0 // pred_check
    _
  $region15: #{_lambda_.5} parent=0 // pred_check_branch
    %113 = sbr.rel (0) target = $region17
  $region16: #{_lambda_.5} parent=0 // pred_region
    _
  $region17: #{_lambda_.5} parent=0 // pred_fallthru
    _

// kernel: _lambda_.6
$region0: #{_lambda_.6}
  #allocation0 [shape = 'u32[]', space=smem, size = 0x4, offset = 0x4, fixed_abs, tag = 'smem constant byte address 0x4 - core index']
  #allocation1 [shape = 'u32[144,128]{1,0:T(1,128)}', space=vmem, size = 0x12000, scoped, tag = 'internal scratch']
  %s0 = inlined_call_operand.vmem [shape: f32[40,32], index: 0, kind: input, shape index: {}]
  %s1 = inlined_call_operand.vmem [shape: f32[40,32], index: 1, kind: input, shape index: {}]
  %s2 = inlined_call_operand.vmem [shape: f32[1,32], index: 2, kind: input, shape index: {}]
  %s3 = inlined_call_operand.vmem [shape: f32[1,32], index: 3, kind: input, shape index: {}]
  %s4 = inlined_call_operand.vmem [shape: bf16[32,64], index: 4, kind: input, shape index: {}]
  %s5 = inlined_call_operand.vmem [shape: f32[1,64], index: 5, kind: input, shape index: {}]
  %s6 = inlined_call_operand.vmem [shape: bf16[64,32], index: 6, kind: input, shape index: {}]
  %s7 = inlined_call_operand.vmem [shape: f32[1,32], index: 7, kind: input, shape index: {}]
  %s8 = inlined_call_operand.vmem [shape: f32[40,32], index: 8, kind: output, shape index: {}]
  %s9 = sld [smem:[#allocation0]]
  $region42: #{_lambda_.6} parent=0
    _
  %s11 = ssub.s32 1, %s9
  %s12 = scalar_select 0, %s11, %s9
  // Predicated region
  $region2: #{_lambda_.6} parent=0 // pred_check
    _
  $region3: #{_lambda_.6} parent=0 // pred_check_branch
    %14 = sbr.rel (0) target = $region5
  $region4: #{_lambda_.6} parent=0 // pred_region
    _
  $region5: #{_lambda_.6} parent=0 // pred_fallthru
    _
  // Predicated region
  $region6: #{_lambda_.6} parent=0 // pred_check
    _
  $region7: #{_lambda_.6} parent=0 // pred_check_branch
    %16 = sbr.rel (0) target = $region9
  $region8: #{_lambda_.6} parent=0 // pred_region
    _
  $region9: #{_lambda_.6} parent=0 // pred_fallthru
    _
  // Predicated region
  $region10: #{_lambda_.6} parent=0 // pred_check
    _
  $region11: #{_lambda_.6} parent=0 // pred_check_branch
    %18 = sbr.rel (0) target = $region13
  $region12: #{_lambda_.6} parent=0 // pred_region
    _
  $region13: #{_lambda_.6} parent=0 // pred_fallthru
    _
  // Predicated region
  $region14: #{_lambda_.6} parent=0 // pred_check
    _
  $region15: #{_lambda_.6} parent=0 // pred_check_branch
    %20 = sbr.rel (0) target = $region17
  $region16: #{_lambda_.6} parent=0 // pred_region
    _
  $region17: #{_lambda_.6} parent=0 // pred_fallthru
    _
  // Predicated region
  $region18: #{_lambda_.6} parent=0 // pred_check
    _
  $region19: #{_lambda_.6} parent=0 // pred_check_branch
    %22 = sbr.rel (0) target = $region21
  $region20: #{_lambda_.6} parent=0 // pred_region
    _
  $region21: #{_lambda_.6} parent=0 // pred_fallthru
    _
  // Predicated region
  $region22: #{_lambda_.6} parent=0 // pred_check
    _
  $region23: #{_lambda_.6} parent=0 // pred_check_branch
    %24 = sbr.rel (0) target = $region25
  $region24: #{_lambda_.6} parent=0 // pred_region
    _
  $region25: #{_lambda_.6} parent=0 // pred_fallthru
    _
  // Predicated region
  $region26: #{_lambda_.6} parent=0 // pred_check
    _
  $region27: #{_lambda_.6} parent=0 // pred_check_branch
    %26 = sbr.rel (0) target = $region29
  $region28: #{_lambda_.6} parent=0 // pred_region
    _
  $region29: #{_lambda_.6} parent=0 // pred_fallthru
    _
  // Predicated region
  $region30: #{_lambda_.6} parent=0 // pred_check
    _
  $region31: #{_lambda_.6} parent=0 // pred_check_branch
    %28 = sbr.rel (0) target = $region33
  $region32: #{_lambda_.6} parent=0 // pred_region
    _
  $region33: #{_lambda_.6} parent=0 // pred_fallthru
    _
  %v30 = vld [vmem:[%s0] sm:$0xff]
  %v31 = vld [vmem:[%s0 + $0x8] sm:$0xff]
  %v32 = vld [vmem:[%s0 + $0x10] sm:$0xff]
  %v33 = vld [vmem:[%s0 + $0x18] sm:$0xff]
  %v34 = vld [vmem:[%s0 + $0x20] sm:$0xff]
  %vm35 = vcmask 261120
  %v36 = vsel %vm35, %v30, 0.0
  %37 = vadd.xlane.f32.xlu0 %v36
  %v38 = vpop.xlane.xlu0 %37
  %v39 = vsel %vm35, %v31, 0.0
  %40 = vadd.xlane.f32.xlu0 %v39
  %v41 = vpop.xlane.xlu0 %40
  %v42 = vsel %vm35, %v32, 0.0
  %43 = vadd.xlane.f32.xlu0 %v42
  %v44 = vpop.xlane.xlu0 %43
  %v45 = vsel %vm35, %v33, 0.0
  %46 = vadd.xlane.f32.xlu0 %v45
  %v47 = vpop.xlane.xlu0 %46
  %v48 = vsel %vm35, %v34, 0.0
  %49 = vadd.xlane.f32.xlu0 %v48
  %v50 = vpop.xlane.xlu0 %49
  %v51 = vrcp.pop 32.0
  %v52 = vmul.f32 %v38, %v51
  %v53 = vmul.f32 %v41, %v51
  %v54 = vmul.f32 %v44, %v51
  %v55 = vmul.f32 %v47, %v51
  %v56 = vmul.f32 %v50, %v51
  %v57 = vsub.f32 %v30, %v52
  %v58 = vsub.f32 %v31, %v53
  %v59 = vsub.f32 %v32, %v54
  %v60 = vsub.f32 %v33, %v55
  %v61 = vsub.f32 %v34, %v56
  %v62 = vmul.f32 %v57, %v57
  %v63 = vmul.f32 %v58, %v58
  %v64 = vmul.f32 %v59, %v59
  %v65 = vmul.f32 %v60, %v60
  %v66 = vmul.f32 %v61, %v61
  %v67 = vsel %vm35, %v62, 0.0
  %68 = vadd.xlane.f32.xlu0 %v67
  %v69 = vpop.xlane.xlu0 %68
  %v70 = vsel %vm35, %v63, 0.0
  %71 = vadd.xlane.f32.xlu0 %v70
  %v72 = vpop.xlane.xlu0 %71
  %v73 = vsel %vm35, %v64, 0.0
  %74 = vadd.xlane.f32.xlu0 %v73
  %v75 = vpop.xlane.xlu0 %74
  %v76 = vsel %vm35, %v65, 0.0
  %77 = vadd.xlane.f32.xlu0 %v76
  %v78 = vpop.xlane.xlu0 %77
  %v79 = vsel %vm35, %v66, 0.0
  %80 = vadd.xlane.f32.xlu0 %v79
  %v81 = vpop.xlane.xlu0 %80
  %v82 = vmul.f32 %v69, %v51
  %v83 = vmul.f32 %v72, %v51
  %v84 = vmul.f32 %v75, %v51
  %v85 = vmul.f32 %v78, %v51
  %v86 = vmul.f32 %v81, %v51
  %v87 = vadd.f32 %v82, 1e-06
  %v88 = vadd.f32 %v83, 1e-06
  %v89 = vadd.f32 %v84, 1e-06
  %v90 = vadd.f32 %v85, 1e-06
  %v91 = vadd.f32 %v86, 1e-06
  %v92 = vrsqrt.pop %v87
  %v93 = vrsqrt.pop %v88
  %v94 = vrsqrt.pop %v89
  %v95 = vrsqrt.pop %v90
  %v96 = vrsqrt.pop %v91
  %v97 = vmul.f32 %v57, %v92
  %v98 = vmul.f32 %v58, %v93
  %v99 = vmul.f32 %v59, %v94
  %v100 = vmul.f32 %v60, %v95
  %v101 = vmul.f32 %v61, %v96
  %v102 = vld [vmem:[%s2] sm:$0x1]
  %v104 = vlaneseq
  %v105 = vshrl.u32 %v104, 7
  %v106 = vsub.s32 0, %v105
  %v107 = vrot.slane %v102, %v106
  %v109 = vmul.f32 %v97, %v107
  %v110 = vmul.f32 %v98, %v107
  %v111 = vmul.f32 %v99, %v107
  %v112 = vmul.f32 %v100, %v107
  %v113 = vmul.f32 %v101, %v107
  %v114 = vld [vmem:[%s3] sm:$0x1]
  %v116 = vlaneseq
  %v117 = vshrl.u32 %v116, 7
  %v118 = vsub.s32 0, %v117
  %v119 = vrot.slane %v114, %v118
  %v121 = vadd.f32 %v109, %v119
  %v122 = vadd.f32 %v110, %v119
  %v123 = vadd.f32 %v111, %v119
  %v124 = vadd.f32 %v112, %v119
  %v125 = vadd.f32 %v113, %v119
  %v126 = vpack.c.bf16 %v122, %v121
  %v127 = vpack.c.bf16 %v124, %v123
  %v128 = vpack.c.bf16 %v125, %v125
  %v129 = vld [vmem:[%s4] sm:$0xf]
  %v130 = vld [vmem:[%s4 + $0x4] sm:$0xf]
  %v131 = vld [vmem:[%s4 + $0x8] sm:$0xf]
  %v132 = vld [vmem:[%s4 + $0xc] sm:$0xf]
  %v133 = vld [vmem:[%s5] sm:$0x1]
  %v135 = vlaneseq
  %v136 = vshrl.u32 %v135, 7
  %v137 = vsub.s32 0, %v136
  %v138 = vrot.slane %v133, %v137
  %v144 = vunpack.c.l.b16 %v129
  %v145 = vunpack.c.l.b16 %v130
  %v146 = vunpack.c.l.b16 %v131
  %v147 = vunpack.c.l.b16 %v132
  %v148 = vpack.c.b16 %v145, %v144
  %v149 = vpack.c.b16 %v147, %v146
  %v153 = vsel %vm35, %v126, 0
  %v156 = vsel %vm35, %v127, 0
  %v159 = vsel %vm35, %v128, 0
  %161 = vmatprep.subr.bf16.mxu0 0
  %162 = vmatpush1.bf16.msra.mxu0 %v148
  %163 = vmatprep.subr.bf16.mxu0 0
  %164 = vmatpush1.bf16.msra.mxu0 %v149
  %165 = vmatprep.subr.bf16.mxu0 0
  %166 = vmatpush1.bf16.msra.mxu0 0
  %167 = vmatprep.subr.bf16.mxu0 0
  %168 = vmatpush1.bf16.msra.mxu0 0
  %169 = vmatprep.subr.bf16.mxu0 0
  %170 = vmatpush1.bf16.msra.mxu0 0
  %171 = vmatprep.subr.bf16.mxu0 0
  %172 = vmatpush1.bf16.msra.mxu0 0
  %173 = vmatprep.subr.bf16.mxu0 0
  %174 = vmatpush1.bf16.msra.mxu0 0
  %175 = vmatprep.subr.bf16.mxu0 0
  %176 = vmatpush1.bf16.msra.mxu0 0
  %177 = vmatprep.subr.bf16.mxu0 0
  %178 = vmatpush1.bf16.msra.mxu0 0
  %179 = vmatprep.subr.bf16.mxu0 0
  %180 = vmatpush1.bf16.msra.mxu0 0
  %181 = vmatprep.subr.bf16.mxu0 0
  %182 = vmatpush1.bf16.msra.mxu0 0
  %183 = vmatprep.subr.bf16.mxu0 0
  %184 = vmatpush1.bf16.msra.mxu0 0
  %185 = vmatprep.subr.bf16.mxu0 0
  %186 = vmatpush1.bf16.msra.mxu0 0
  %187 = vmatprep.subr.bf16.mxu0 0
  %188 = vmatpush1.bf16.msra.mxu0 0
  %189 = vmatprep.subr.bf16.mxu0 0
  %190 = vmatpush1.bf16.msra.mxu0 0
  %191 = vmatprep.subr.bf16.mxu0 0
  %192 = vmatpush1.bf16.msra.mxu0 0
  %193 = vmatprep.mubr.bf16.mxu0 0
  %194 = vmatmul.mubr.bf16.gmra.mrb[0].mxu0 %v153
  %v195 = vpop.f32.mrb[0].mxu0
  %v196 = vadd.f32 %v138, %v195
  %v197 = vpop.f32.mrb[0].mxu0
  %v198 = vpop.f32.mrb[0].mxu0
  %v199 = vadd.f32 %v138, %v198
  %v200 = vpop.f32.mrb[0].mxu0
  %201 = vmatprep.mubr.bf16.mxu0 0
  %202 = vmatmul.mubr.bf16.gmra.mrb[0].mxu0 %v156
  %v203 = vpop.f32.mrb[0].mxu0
  %v204 = vadd.f32 %v138, %v203
  %v205 = vpop.f32.mrb[0].mxu0
  %v206 = vpop.f32.mrb[0].mxu0
  %v207 = vadd.f32 %v138, %v206
  %v208 = vpop.f32.mrb[0].mxu0
  %209 = vmatprep.mubr.bf16.mxu0 0
  %210 = vmatmul.mubr.bf16.gmra.mrb[0].mxu0 %v159
  %v211 = vpop.f32.mrb[0].mxu0
  %v212 = vadd.f32 %v138, %v211
  %v213 = vpop.f32.mrb[0].mxu0
  %v214 = vpop.f32.mrb[0].mxu0
  %v215 = vpop.f32.mrb[0].mxu0
  %216 = vdwg.mxu0
  %v217 = vmul.f32 %v196, 0.5
  %v218 = vmul.f32 %v199, 0.5
  %v219 = vmul.f32 %v204, 0.5
  %v220 = vmul.f32 %v207, 0.5
  %v221 = vmul.f32 %v212, 0.5
  %v222 = vmul.f32 %v196, 0.044715
  %v223 = vmul.f32 %v199, 0.044715
  %v224 = vmul.f32 %v204, 0.044715
  %v225 = vmul.f32 %v207, 0.044715
  %v226 = vmul.f32 %v212, 0.044715
  %v227 = vmul.f32 %v222, %v196
  %v228 = vmul.f32 %v223, %v199
  %v229 = vmul.f32 %v224, %v204
  %v230 = vmul.f32 %v225, %v207
  %v231 = vmul.f32 %v226, %v212
  %v232 = vmul.f32 %v227, %v196
  %v233 = vmul.f32 %v228, %v199
  %v234 = vmul.f32 %v229, %v204
  %v235 = vmul.f32 %v230, %v207
  %v236 = vmul.f32 %v231, %v212
  %v237 = vadd.f32 %v196, %v232
  %v238 = vadd.f32 %v199, %v233
  %v239 = vadd.f32 %v204, %v234
  %v240 = vadd.f32 %v207, %v235
  %v241 = vadd.f32 %v212, %v236
  %v242 = vmul.f32 %v237, 0.7978846
  %v243 = vmul.f32 %v238, 0.7978846
  %v244 = vmul.f32 %v239, 0.7978846
  %v245 = vmul.f32 %v240, 0.7978846
  %v246 = vmul.f32 %v241, 0.7978846
  %v247 = vtanh.pop %v242
  %v248 = vtanh.pop %v243
  %v249 = vtanh.pop %v244
  %v250 = vtanh.pop %v245
  %v251 = vtanh.pop %v246
  %v252 = vadd.f32 %v247, 1.0
  %v253 = vadd.f32 %v248, 1.0
  %v254 = vadd.f32 %v249, 1.0
  %v255 = vadd.f32 %v250, 1.0
  %v256 = vadd.f32 %v251, 1.0
  %v257 = vmul.f32 %v217, %v252
  %v258 = vmul.f32 %v218, %v253
  %v259 = vmul.f32 %v219, %v254
  %v260 = vmul.f32 %v220, %v255
  %v261 = vmul.f32 %v221, %v256
  %v262 = vpack.c.bf16 %v258, %v257
  %v263 = vpack.c.bf16 %v260, %v259
  %v264 = vpack.c.bf16 %v261, %v261
  %v265 = vld [vmem:[%s6] sm:$0xf]
  %v266 = vld [vmem:[%s6 + $0x4] sm:$0xf]
  %v267 = vld [vmem:[%s6 + $0x8] sm:$0xf]
  %v268 = vld [vmem:[%s6 + $0xc] sm:$0xf]
  %v269 = vld [vmem:[%s6 + $0x10] sm:$0xf]
  %v270 = vld [vmem:[%s6 + $0x14] sm:$0xf]
  %v271 = vld [vmem:[%s6 + $0x18] sm:$0xf]
  %v272 = vld [vmem:[%s6 + $0x1c] sm:$0xf]
  %v273 = vld [vmem:[%s7] sm:$0x1]
  %v275 = vlaneseq
  %v276 = vshrl.u32 %v275, 7
  %v277 = vsub.s32 0, %v276
  %v278 = vrot.slane %v273, %v277
  %v288 = vunpack.c.l.b16 %v265
  %v289 = vunpack.c.l.b16 %v266
  %v290 = vunpack.c.l.b16 %v267
  %v291 = vunpack.c.l.b16 %v268
  %v292 = vunpack.c.l.b16 %v269
  %v293 = vunpack.c.l.b16 %v270
  %v294 = vunpack.c.l.b16 %v271
  %v295 = vunpack.c.l.b16 %v272
  %v296 = vpack.c.b16 %v289, %v288
  %v297 = vpack.c.b16 %v291, %v290
  %v298 = vpack.c.b16 %v293, %v292
  %v299 = vpack.c.b16 %v295, %v294
  %vm304 = vcmask 523264
  %v306 = vsel %vm304, %v262, 0
  %v309 = vsel %vm304, %v263, 0
  %v312 = vsel %vm304, %v264, 0
  %314 = vmatprep.subr.bf16.mxu0 0
  %315 = vmatpush1.bf16.msra.mxu0 %v296
  %316 = vmatprep.subr.bf16.mxu0 0
  %317 = vmatpush1.bf16.msra.mxu0 %v297
  %318 = vmatprep.subr.bf16.mxu0 0
  %319 = vmatpush1.bf16.msra.mxu0 %v298
  %320 = vmatprep.subr.bf16.mxu0 0
  %321 = vmatpush1.bf16.msra.mxu0 %v299
  %322 = vmatprep.subr.bf16.mxu0 0
  %323 = vmatpush1.bf16.msra.mxu0 0
  %324 = vmatprep.subr.bf16.mxu0 0
  %325 = vmatpush1.bf16.msra.mxu0 0
  %326 = vmatprep.subr.bf16.mxu0 0
  %327 = vmatpush1.bf16.msra.mxu0 0
  %328 = vmatprep.subr.bf16.mxu0 0
  %329 = vmatpush1.bf16.msra.mxu0 0
  %330 = vmatprep.subr.bf16.mxu0 0
  %331 = vmatpush1.bf16.msra.mxu0 0
  %332 = vmatprep.subr.bf16.mxu0 0
  %333 = vmatpush1.bf16.msra.mxu0 0
  %334 = vmatprep.subr.bf16.mxu0 0
  %335 = vmatpush1.bf16.msra.mxu0 0
  %336 = vmatprep.subr.bf16.mxu0 0
  %337 = vmatpush1.bf16.msra.mxu0 0
  %338 = vmatprep.subr.bf16.mxu0 0
  %339 = vmatpush1.bf16.msra.mxu0 0
  %340 = vmatprep.subr.bf16.mxu0 0
  %341 = vmatpush1.bf16.msra.mxu0 0
  %342 = vmatprep.subr.bf16.mxu0 0
  %343 = vmatpush1.bf16.msra.mxu0 0
  %344 = vmatprep.subr.bf16.mxu0 0
  %345 = vmatpush1.bf16.msra.mxu0 0
  %346 = vmatprep.mubr.bf16.mxu0 0
  %347 = vmatmul.mubr.bf16.gmra.mrb[0].mxu0 %v306
  %v348 = vpop.f32.mrb[0].mxu0
  %v349 = vadd.f32 %v278, %v348
  %v350 = vpop.f32.mrb[0].mxu0
  %v351 = vpop.f32.mrb[0].mxu0
  %v352 = vadd.f32 %v278, %v351
  %v353 = vpop.f32.mrb[0].mxu0
  %354 = vmatprep.mubr.bf16.mxu0 0
  %355 = vmatmul.mubr.bf16.gmra.mrb[0].mxu0 %v309
  %v356 = vpop.f32.mrb[0].mxu0
  %v357 = vadd.f32 %v278, %v356
  %v358 = vpop.f32.mrb[0].mxu0
  %v359 = vpop.f32.mrb[0].mxu0
  %v360 = vadd.f32 %v278, %v359
  %v361 = vpop.f32.mrb[0].mxu0
  %362 = vmatprep.mubr.bf16.mxu0 0
  %363 = vmatmul.mubr.bf16.gmra.mrb[0].mxu0 %v312
  %v364 = vpop.f32.mrb[0].mxu0
  %v365 = vadd.f32 %v278, %v364
  %v366 = vpop.f32.mrb[0].mxu0
  %v367 = vpop.f32.mrb[0].mxu0
  %v368 = vpop.f32.mrb[0].mxu0
  %369 = vdwg.mxu0
  %v370 = vld [vmem:[%s1] sm:$0xff]
  %v371 = vld [vmem:[%s1 + $0x8] sm:$0xff]
  %v372 = vld [vmem:[%s1 + $0x10] sm:$0xff]
  %v373 = vld [vmem:[%s1 + $0x18] sm:$0xff]
  %v374 = vld [vmem:[%s1 + $0x20] sm:$0xff]
  %v375 = vadd.f32 %v349, %v370
  %v376 = vadd.f32 %v352, %v371
  %v377 = vadd.f32 %v357, %v372
  %v378 = vadd.f32 %v360, %v373
  %v379 = vadd.f32 %v365, %v374
  %380 = vst.msk [vmem:[%s8] sm:$0xff] %vm35, %v375
  %381 = vst.msk [vmem:[%s8 + $0x8] sm:$0xff] %vm35, %v376
  %382 = vst.msk [vmem:[%s8 + $0x10] sm:$0xff] %vm35, %v377
  %383 = vst.msk [vmem:[%s8 + $0x18] sm:$0xff] %vm35, %v378
  %384 = vst.msk [vmem:[%s8 + $0x20] sm:$0xff] %vm35, %v379
  // Predicated region
  $region34: #{_lambda_.6} parent=0 // pred_check
    _
  $region35: #{_lambda_.6} parent=0 // pred_check_branch
    %386 = sbr.rel (0) target = $region37
  $region36: #{_lambda_.6} parent=0 // pred_region
    _
  $region37: #{_lambda_.6} parent=0 // pred_fallthru
    _
  // Predicated region
  $region38: #{_lambda_.6} parent=0 // pred_check
    _
  $region39: #{_lambda_.6} parent=0 // pred_check_branch
    %388 = sbr.rel (0) target = $region41
  $region40: #{_lambda_.6} parent=0 // pred_region
    _
  $region41: #{_lambda_.6} parent=0 // pred_fallthru
    _

// kernel: _lambda_.7
$region0: #{_lambda_.7}
  #allocation0 [shape = 'u32[]', space=smem, size = 0x4, offset = 0x4, fixed_abs, tag = 'smem constant byte address 0x4 - core index']
  #allocation1 [shape = 'u32[144,128]{1,0:T(1,128)}', space=vmem, size = 0x12000, scoped, tag = 'internal scratch']
  %s0 = inlined_call_operand.vmem [shape: f32[2,20,32], index: 0, kind: input, shape index: {}]
  %s1 = inlined_call_operand.vmem [shape: f32[1,32], index: 1, kind: input, shape index: {}]
  %s2 = inlined_call_operand.vmem [shape: f32[1,32], index: 2, kind: input, shape index: {}]
  %s3 = inlined_call_operand.vmem [shape: bf16[32,96], index: 3, kind: input, shape index: {}]
  %s4 = inlined_call_operand.vmem [shape: f32[1,96], index: 4, kind: input, shape index: {}]
  %s5 = inlined_call_operand.vmem [shape: bf16[32,32], index: 5, kind: input, shape index: {}]
  %s6 = inlined_call_operand.vmem [shape: f32[1,32], index: 6, kind: input, shape index: {}]
  %s7 = inlined_call_operand.vmem [shape: f32[1,32], index: 7, kind: input, shape index: {}]
  %s8 = inlined_call_operand.vmem [shape: f32[1,32], index: 8, kind: input, shape index: {}]
  %s9 = inlined_call_operand.vmem [shape: bf16[32,64], index: 9, kind: input, shape index: {}]
  %s10 = inlined_call_operand.vmem [shape: f32[1,64], index: 10, kind: input, shape index: {}]
  %s11 = inlined_call_operand.vmem [shape: bf16[64,32], index: 11, kind: input, shape index: {}]
  %s12 = inlined_call_operand.vmem [shape: f32[1,32], index: 12, kind: input, shape index: {}]
  %s13 = inlined_call_operand.vmem [shape: f32[1,32], index: 13, kind: input, shape index: {}]
  %s14 = inlined_call_operand.vmem [shape: f32[1,32], index: 14, kind: input, shape index: {}]
  %s15 = inlined_call_operand.vmem [shape: f32[2,20,32], index: 15, kind: output, shape index: {}]
  %s16 = sld [smem:[#allocation0]]
  $region93: #{_lambda_.7} parent=0
    _
  %s18 = ssub.s32 1, %s16
  %s19 = scalar_select 0, %s18, %s16
  loop: start=0, step=1, limit=4
  $region2: #{_lambda_.7} parent=0 // loop_pre_header
    _
  $region3: #{_lambda_.7} parent=0 // loop_header
    %s21 = sphi 0, %s25
    %p22 = scmp.ge.s32.totalorder %s21, 4
    %s31 = sphi 0, %s33
    %s34 = sphi 0, %s31
    %s35 = sphi 0, %s34
    %s51 = sphi 0, %s35
    %s55 = sphi 0, %s55
    %s57 = sphi 0, %s55
    %s58 = sphi 0, %s57
    %s72 = sphi 0, %s58
    %s76 = sphi 0, %s76
    %s78 = sphi 0, %s76
    %s79 = sphi 0, %s78
    %s93 = sphi 0, %s79
    %s97 = sphi 0, %s97
    %s99 = sphi 0, %s97
    %s100 = sphi 0, %s99
    %s114 = sphi 0, %s100
    %s118 = sphi 0, %s118
    %s120 = sphi 0, %s118
    %s121 = sphi 0, %s120
    %s135 = sphi 0, %s121
    %s139 = sphi 0, %s139
    %s141 = sphi 0, %s139
    %s142 = sphi 0, %s141
    %s156 = sphi 0, %s142
    %s160 = sphi 0, %s160
    %s162 = sphi 0, %s160
    %s163 = sphi 0, %s162
    %s177 = sphi 0, %s163
    %s181 = sphi 0, %s181
    %s183 = sphi 0, %s181
    %s184 = sphi 0, %s183
    %s198 = sphi 0, %s184
    %s202 = sphi 0, %s202
    %s204 = sphi 0, %s202
    %s205 = sphi 0, %s204
    %s219 = sphi 0, %s205
    %s223 = sphi 0, %s223
    %s225 = sphi 0, %s223
    %s226 = sphi 0, %s225
    %s240 = sphi 0, %s226
    %s244 = sphi 0, %s244
    %s246 = sphi 0, %s244
    %s247 = sphi 0, %s246
    %s261 = sphi 0, %s247
    %s265 = sphi 0, %s265
    %s267 = sphi 0, %s265
    %s268 = sphi 0, %s267
    %s282 = sphi 0, %s268
    %s286 = sphi 0, %s286
    %s288 = sphi 0, %s286
    %s289 = sphi 0, %s288
    %s303 = sphi 0, %s289
    %s307 = sphi 0, %s307
    %s309 = sphi 0, %s307
    %s310 = sphi 0, %s309
    %s324 = sphi 0, %s310
    %s328 = sphi 0, %s328
    %s330 = sphi 0, %s328
    %s331 = sphi 0, %s330
    %s345 = sphi 0, %s331
    %s351 = sphi 0, %s353
    %s354 = sphi 0, %s351
    %s355 = sphi 0, %s354
    %s371 = sphi 0, %s355
  $region4: #{_lambda_.7} parent=0 // loop_header_branch
    %24 = sbr.rel (%p22) target = $region8
  $region5: #{_lambda_.7} parent=0 // loop_body
    %s26 = ssub.s32 %s21, 1
    %s27 = ssub.s32 %s21, 2
    %s28 = sadd.s32 %s21, 1
    %s29 = ssub.s32 %s21, %s28
    %p30 = scmp.eq.s32.totalorder %s29, 0
    %s32 = sadd.s32 %s31, 1
    %s33 = scalar_select %p30, %s31, %s32
    %p36 = pneg %p30
    %p37 = scmp.eq.s32.totalorder %s21, 1
    %p38 = por %p36, %p37
    %p39 = scmp.ne.s32.totalorder %s31, %s34
    %p40 = scmp.eq.s32.totalorder %s21, 0
    %p41 = por %p39, %p40
    %p42 = scmp.ne.s32.totalorder %s31, %s34
    %p43 = scmp.eq.s32.totalorder %s26, 1
    %p44 = por %p42, %p43
    %p45 = scmp.ne.s32.totalorder %s34, %s35
    %p46 = scmp.eq.s32.totalorder %s26, 0
    %p47 = por %p45, %p46
    %p48 = scmp.ne.s32.totalorder %s34, %s35
    %p49 = scmp.eq.s32.totalorder %s27, 1
    %p50 = por %p48, %p49
    %p52 = scmp.ne.s32.totalorder %s35, %s51
    %p53 = scmp.eq.s32.totalorder %s27, 0
    %p54 = por %p52, %p53
    %s56 = sadd.s32 %s55, 1
    %p59 = scmp.eq.s32.totalorder %s21, 1
    %p60 = scmp.ne.s32.totalorder %s55, %s57
    %p61 = scmp.eq.s32.totalorder %s21, 0
    %p62 = por %p60, %p61
    %p63 = scmp.ne.s32.totalorder %s55, %s57
    %p64 = scmp.eq.s32.totalorder %s26, 1
    %p65 = por %p63, %p64
    %p66 = scmp.ne.s32.totalorder %s57, %s58
    %p67 = scmp.eq.s32.totalorder %s26, 0
    %p68 = por %p66, %p67
    %p69 = scmp.ne.s32.totalorder %s57, %s58
    %p70 = scmp.eq.s32.totalorder %s27, 1
    %p71 = por %p69, %p70
    %p73 = scmp.ne.s32.totalorder %s58, %s72
    %p74 = scmp.eq.s32.totalorder %s27, 0
    %p75 = por %p73, %p74
    %s77 = sadd.s32 %s76, 1
    %p80 = scmp.eq.s32.totalorder %s21, 1
    %p81 = scmp.ne.s32.totalorder %s76, %s78
    %p82 = scmp.eq.s32.totalorder %s21, 0
    %p83 = por %p81, %p82
    %p84 = scmp.ne.s32.totalorder %s76, %s78
    %p85 = scmp.eq.s32.totalorder %s26, 1
    %p86 = por %p84, %p85
    %p87 = scmp.ne.s32.totalorder %s78, %s79
    %p88 = scmp.eq.s32.totalorder %s26, 0
    %p89 = por %p87, %p88
    %p90 = scmp.ne.s32.totalorder %s78, %s79
    %p91 = scmp.eq.s32.totalorder %s27, 1
    %p92 = por %p90, %p91
    %p94 = scmp.ne.s32.totalorder %s79, %s93
    %p95 = scmp.eq.s32.totalorder %s27, 0
    %p96 = por %p94, %p95
    %s98 = sadd.s32 %s97, 1
    %p101 = scmp.eq.s32.totalorder %s21, 1
    %p102 = scmp.ne.s32.totalorder %s97, %s99
    %p103 = scmp.eq.s32.totalorder %s21, 0
    %p104 = por %p102, %p103
    %p105 = scmp.ne.s32.totalorder %s97, %s99
    %p106 = scmp.eq.s32.totalorder %s26, 1
    %p107 = por %p105, %p106
    %p108 = scmp.ne.s32.totalorder %s99, %s100
    %p109 = scmp.eq.s32.totalorder %s26, 0
    %p110 = por %p108, %p109
    %p111 = scmp.ne.s32.totalorder %s99, %s100
    %p112 = scmp.eq.s32.totalorder %s27, 1
    %p113 = por %p111, %p112
    %p115 = scmp.ne.s32.totalorder %s100, %s114
    %p116 = scmp.eq.s32.totalorder %s27, 0
    %p117 = por %p115, %p116
    %s119 = sadd.s32 %s118, 1
    %p122 = scmp.eq.s32.totalorder %s21, 1
    %p123 = scmp.ne.s32.totalorder %s118, %s120
    %p124 = scmp.eq.s32.totalorder %s21, 0
    %p125 = por %p123, %p124
    %p126 = scmp.ne.s32.totalorder %s118, %s120
    %p127 = scmp.eq.s32.totalorder %s26, 1
    %p128 = por %p126, %p127
    %p129 = scmp.ne.s32.totalorder %s120, %s121
    %p130 = scmp.eq.s32.totalorder %s26, 0
    %p131 = por %p129, %p130
    %p132 = scmp.ne.s32.totalorder %s120, %s121
    %p133 = scmp.eq.s32.totalorder %s27, 1
    %p134 = por %p132, %p133
    %p136 = scmp.ne.s32.totalorder %s121, %s135
    %p137 = scmp.eq.s32.totalorder %s27, 0
    %p138 = por %p136, %p137
    %s140 = sadd.s32 %s139, 1
    %p143 = scmp.eq.s32.totalorder %s21, 1
    %p144 = scmp.ne.s32.totalorder %s139, %s141
    %p145 = scmp.eq.s32.totalorder %s21, 0
    %p146 = por %p144, %p145
    %p147 = scmp.ne.s32.totalorder %s139, %s141
    %p148 = scmp.eq.s32.totalorder %s26, 1
    %p149 = por %p147, %p148
    %p150 = scmp.ne.s32.totalorder %s141, %s142
    %p151 = scmp.eq.s32.totalorder %s26, 0
    %p152 = por %p150, %p151
    %p153 = scmp.ne.s32.totalorder %s141, %s142
    %p154 = scmp.eq.s32.totalorder %s27, 1
    %p155 = por %p153, %p154
    %p157 = scmp.ne.s32.totalorder %s142, %s156
    %p158 = scmp.eq.s32.totalorder %s27, 0
    %p159 = por %p157, %p158
    %s161 = sadd.s32 %s160, 1
    %p164 = scmp.eq.s32.totalorder %s21, 1
    %p165 = scmp.ne.s32.totalorder %s160, %s162
    %p166 = scmp.eq.s32.totalorder %s21, 0
    %p167 = por %p165, %p166
    %p168 = scmp.ne.s32.totalorder %s160, %s162
    %p169 = scmp.eq.s32.totalorder %s26, 1
    %p170 = por %p168, %p169
    %p171 = scmp.ne.s32.totalorder %s162, %s163
    %p172 = scmp.eq.s32.totalorder %s26, 0
    %p173 = por %p171, %p172
    %p174 = scmp.ne.s32.totalorder %s162, %s163
    %p175 = scmp.eq.s32.totalorder %s27, 1
    %p176 = por %p174, %p175
    %p178 = scmp.ne.s32.totalorder %s163, %s177
    %p179 = scmp.eq.s32.totalorder %s27, 0
    %p180 = por %p178, %p179
    %s182 = sadd.s32 %s181, 1
    %p185 = scmp.eq.s32.totalorder %s21, 1
    %p186 = scmp.ne.s32.totalorder %s181, %s183
    %p187 = scmp.eq.s32.totalorder %s21, 0
    %p188 = por %p186, %p187
    %p189 = scmp.ne.s32.totalorder %s181, %s183
    %p190 = scmp.eq.s32.totalorder %s26, 1
    %p191 = por %p189, %p190
    %p192 = scmp.ne.s32.totalorder %s183, %s184
    %p193 = scmp.eq.s32.totalorder %s26, 0
    %p194 = por %p192, %p193
    %p195 = scmp.ne.s32.totalorder %s183, %s184
    %p196 = scmp.eq.s32.totalorder %s27, 1
    %p197 = por %p195, %p196
    %p199 = scmp.ne.s32.totalorder %s184, %s198
    %p200 = scmp.eq.s32.totalorder %s27, 0
    %p201 = por %p199, %p200
    %s203 = sadd.s32 %s202, 1
    %p206 = scmp.eq.s32.totalorder %s21, 1
    %p207 = scmp.ne.s32.totalorder %s202, %s204
    %p208 = scmp.eq.s32.totalorder %s21, 0
    %p209 = por %p207, %p208
    %p210 = scmp.ne.s32.totalorder %s202, %s204
    %p211 = scmp.eq.s32.totalorder %s26, 1
    %p212 = por %p210, %p211
    %p213 = scmp.ne.s32.totalorder %s204, %s205
    %p214 = scmp.eq.s32.totalorder %s26, 0
    %p215 = por %p213, %p214
    %p216 = scmp.ne.s32.totalorder %s204, %s205
    %p217 = scmp.eq.s32.totalorder %s27, 1
    %p218 = por %p216, %p217
    %p220 = scmp.ne.s32.totalorder %s205, %s219
    %p221 = scmp.eq.s32.totalorder %s27, 0
    %p222 = por %p220, %p221
    %s224 = sadd.s32 %s223, 1
    %p227 = scmp.eq.s32.totalorder %s21, 1
    %p228 = scmp.ne.s32.totalorder %s223, %s225
    %p229 = scmp.eq.s32.totalorder %s21, 0
    %p230 = por %p228, %p229
    %p231 = scmp.ne.s32.totalorder %s223, %s225
    %p232 = scmp.eq.s32.totalorder %s26, 1
    %p233 = por %p231, %p232
    %p234 = scmp.ne.s32.totalorder %s225, %s226
    %p235 = scmp.eq.s32.totalorder %s26, 0
    %p236 = por %p234, %p235
    %p237 = scmp.ne.s32.totalorder %s225, %s226
    %p238 = scmp.eq.s32.totalorder %s27, 1
    %p239 = por %p237, %p238
    %p241 = scmp.ne.s32.totalorder %s226, %s240
    %p242 = scmp.eq.s32.totalorder %s27, 0
    %p243 = por %p241, %p242
    %s245 = sadd.s32 %s244, 1
    %p248 = scmp.eq.s32.totalorder %s21, 1
    %p249 = scmp.ne.s32.totalorder %s244, %s246
    %p250 = scmp.eq.s32.totalorder %s21, 0
    %p251 = por %p249, %p250
    %p252 = scmp.ne.s32.totalorder %s244, %s246
    %p253 = scmp.eq.s32.totalorder %s26, 1
    %p254 = por %p252, %p253
    %p255 = scmp.ne.s32.totalorder %s246, %s247
    %p256 = scmp.eq.s32.totalorder %s26, 0
    %p257 = por %p255, %p256
    %p258 = scmp.ne.s32.totalorder %s246, %s247
    %p259 = scmp.eq.s32.totalorder %s27, 1
    %p260 = por %p258, %p259
    %p262 = scmp.ne.s32.totalorder %s247, %s261
    %p263 = scmp.eq.s32.totalorder %s27, 0
    %p264 = por %p262, %p263
    %s266 = sadd.s32 %s265, 1
    %p269 = scmp.eq.s32.totalorder %s21, 1
    %p270 = scmp.ne.s32.totalorder %s265, %s267
    %p271 = scmp.eq.s32.totalorder %s21, 0
    %p272 = por %p270, %p271
    %p273 = scmp.ne.s32.totalorder %s265, %s267
    %p274 = scmp.eq.s32.totalorder %s26, 1
    %p275 = por %p273, %p274
    %p276 = scmp.ne.s32.totalorder %s267, %s268
    %p277 = scmp.eq.s32.totalorder %s26, 0
    %p278 = por %p276, %p277
    %p279 = scmp.ne.s32.totalorder %s267, %s268
    %p280 = scmp.eq.s32.totalorder %s27, 1
    %p281 = por %p279, %p280
    %p283 = scmp.ne.s32.totalorder %s268, %s282
    %p284 = scmp.eq.s32.totalorder %s27, 0
    %p285 = por %p283, %p284
    %s287 = sadd.s32 %s286, 1
    %p290 = scmp.eq.s32.totalorder %s21, 1
    %p291 = scmp.ne.s32.totalorder %s286, %s288
    %p292 = scmp.eq.s32.totalorder %s21, 0
    %p293 = por %p291, %p292
    %p294 = scmp.ne.s32.totalorder %s286, %s288
    %p295 = scmp.eq.s32.totalorder %s26, 1
    %p296 = por %p294, %p295
    %p297 = scmp.ne.s32.totalorder %s288, %s289
    %p298 = scmp.eq.s32.totalorder %s26, 0
    %p299 = por %p297, %p298
    %p300 = scmp.ne.s32.totalorder %s288, %s289
    %p301 = scmp.eq.s32.totalorder %s27, 1
    %p302 = por %p300, %p301
    %p304 = scmp.ne.s32.totalorder %s289, %s303
    %p305 = scmp.eq.s32.totalorder %s27, 0
    %p306 = por %p304, %p305
    %s308 = sadd.s32 %s307, 1
    %p311 = scmp.eq.s32.totalorder %s21, 1
    %p312 = scmp.ne.s32.totalorder %s307, %s309
    %p313 = scmp.eq.s32.totalorder %s21, 0
    %p314 = por %p312, %p313
    %p315 = scmp.ne.s32.totalorder %s307, %s309
    %p316 = scmp.eq.s32.totalorder %s26, 1
    %p317 = por %p315, %p316
    %p318 = scmp.ne.s32.totalorder %s309, %s310
    %p319 = scmp.eq.s32.totalorder %s26, 0
    %p320 = por %p318, %p319
    %p321 = scmp.ne.s32.totalorder %s309, %s310
    %p322 = scmp.eq.s32.totalorder %s27, 1
    %p323 = por %p321, %p322
    %p325 = scmp.ne.s32.totalorder %s310, %s324
    %p326 = scmp.eq.s32.totalorder %s27, 0
    %p327 = por %p325, %p326
    %s329 = sadd.s32 %s328, 1
    %p332 = scmp.eq.s32.totalorder %s21, 1
    %p333 = scmp.ne.s32.totalorder %s328, %s330
    %p334 = scmp.eq.s32.totalorder %s21, 0
    %p335 = por %p333, %p334
    %p336 = scmp.ne.s32.totalorder %s328, %s330
    %p337 = scmp.eq.s32.totalorder %s26, 1
    %p338 = por %p336, %p337
    %p339 = scmp.ne.s32.totalorder %s330, %s331
    %p340 = scmp.eq.s32.totalorder %s26, 0
    %p341 = por %p339, %p340
    %p342 = scmp.ne.s32.totalorder %s330, %s331
    %p343 = scmp.eq.s32.totalorder %s27, 1
    %p344 = por %p342, %p343
    %p346 = scmp.ne.s32.totalorder %s331, %s345
    %p347 = scmp.eq.s32.totalorder %s27, 0
    %p348 = por %p346, %p347
    %s349 = ssub.s32 %s21, %s28
    %p350 = scmp.eq.s32.totalorder %s349, 0
    %s352 = sadd.s32 %s351, 1
    %s353 = scalar_select %p350, %s351, %s352
    %p356 = pneg %p350
    %p357 = scmp.eq.s32.totalorder %s21, 1
    %p358 = por %p356, %p357
    %p359 = scmp.ne.s32.totalorder %s351, %s354
    %p360 = scmp.eq.s32.totalorder %s21, 0
    %p361 = por %p359, %p360
    %p362 = scmp.ne.s32.totalorder %s351, %s354
    %p363 = scmp.eq.s32.totalorder %s26, 1
    %p364 = por %p362, %p363
    %p365 = scmp.ne.s32.totalorder %s354, %s355
    %p366 = scmp.eq.s32.totalorder %s26, 0
    %p367 = por %p365, %p366
    %p368 = scmp.ne.s32.totalorder %s354, %s355
    %p369 = scmp.eq.s32.totalorder %s27, 1
    %p370 = por %p368, %p369
    %p372 = scmp.ne.s32.totalorder %s355, %s371
    %p373 = scmp.eq.s32.totalorder %s27, 0
    %p374 = por %p372, %p373
    %p375 = scmp.le.s32.totalorder 1, %s21
    %p376 = scmp.lt.s32.totalorder %s21, 3
    %p377 = pnand %p375, %p376
    %p378 = pneg %p377
    // Predicated region
    $region9: #{_lambda_.7} parent=5 // pred_check
      _
    $region10: #{_lambda_.7} parent=5 // pred_check_branch
      %380 = sbr.rel (%p377) target = $region12
    $region11: #{_lambda_.7} parent=5 // pred_region
      %s381 = ssub.s32 %s21, 1
      // Predicated region
      $region13: #{_lambda_.7} parent=11 // pred_check
        %p382 = pneg %p68
      $region14: #{_lambda_.7} parent=11 // pred_check_branch
        %384 = sbr.rel (%p382) target = $region16
      $region15: #{_lambda_.7} parent=11 // pred_region
        _
      $region16: #{_lambda_.7} parent=11 // pred_fallthru
        _
      // Predicated region
      $region17: #{_lambda_.7} parent=11 // pred_check
        %p385 = pneg %p89
      $region18: #{_lambda_.7} parent=11 // pred_check_branch
        %387 = sbr.rel (%p385) target = $region20
      $region19: #{_lambda_.7} parent=11 // pred_region
        _
      $region20: #{_lambda_.7} parent=11 // pred_fallthru
        _
      // Predicated region
      $region21: #{_lambda_.7} parent=11 // pred_check
        %p388 = pneg %p110
      $region22: #{_lambda_.7} parent=11 // pred_check_branch
        %390 = sbr.rel (%p388) target = $region24
      $region23: #{_lambda_.7} parent=11 // pred_region
        _
      $region24: #{_lambda_.7} parent=11 // pred_fallthru
        _
      // Predicated region
      $region25: #{_lambda_.7} parent=11 // pred_check
        %p391 = pneg %p131
      $region26: #{_lambda_.7} parent=11 // pred_check_branch
        %393 = sbr.rel (%p391) target = $region28
      $region27: #{_lambda_.7} parent=11 // pred_region
        _
      $region28: #{_lambda_.7} parent=11 // pred_fallthru
        _
      // Predicated region
      $region29: #{_lambda_.7} parent=11 // pred_check
        %p394 = pneg %p152
      $region30: #{_lambda_.7} parent=11 // pred_check_branch
        %396 = sbr.rel (%p394) target = $region32
      $region31: #{_lambda_.7} parent=11 // pred_region
        _
      $region32: #{_lambda_.7} parent=11 // pred_fallthru
        _
      // Predicated region
      $region33: #{_lambda_.7} parent=11 // pred_check
        %p397 = pneg %p173
      $region34: #{_lambda_.7} parent=11 // pred_check_branch
        %399 = sbr.rel (%p397) target = $region36
      $region35: #{_lambda_.7} parent=11 // pred_region
        _
      $region36: #{_lambda_.7} parent=11 // pred_fallthru
        _
      // Predicated region
      $region37: #{_lambda_.7} parent=11 // pred_check
        %p400 = pneg %p194
      $region38: #{_lambda_.7} parent=11 // pred_check_branch
        %402 = sbr.rel (%p400) target = $region40
      $region39: #{_lambda_.7} parent=11 // pred_region
        _
      $region40: #{_lambda_.7} parent=11 // pred_fallthru
        _
      // Predicated region
      $region41: #{_lambda_.7} parent=11 // pred_check
        %p403 = pneg %p215
      $region42: #{_lambda_.7} parent=11 // pred_check_branch
        %405 = sbr.rel (%p403) target = $region44
      $region43: #{_lambda_.7} parent=11 // pred_region
        _
      $region44: #{_lambda_.7} parent=11 // pred_fallthru
        _
      // Predicated region
      $region45: #{_lambda_.7} parent=11 // pred_check
        %p406 = pneg %p236
      $region46: #{_lambda_.7} parent=11 // pred_check_branch
        %408 = sbr.rel (%p406) target = $region48
      $region47: #{_lambda_.7} parent=11 // pred_region
        _
      $region48: #{_lambda_.7} parent=11 // pred_fallthru
        _
      // Predicated region
      $region49: #{_lambda_.7} parent=11 // pred_check
        %p409 = pneg %p257
      $region50: #{_lambda_.7} parent=11 // pred_check_branch
        %411 = sbr.rel (%p409) target = $region52
      $region51: #{_lambda_.7} parent=11 // pred_region
        _
      $region52: #{_lambda_.7} parent=11 // pred_fallthru
        _
      // Predicated region
      $region53: #{_lambda_.7} parent=11 // pred_check
        %p412 = pneg %p278
      $region54: #{_lambda_.7} parent=11 // pred_check_branch
        %414 = sbr.rel (%p412) target = $region56
      $region55: #{_lambda_.7} parent=11 // pred_region
        _
      $region56: #{_lambda_.7} parent=11 // pred_fallthru
        _
      // Predicated region
      $region57: #{_lambda_.7} parent=11 // pred_check
        %p415 = pneg %p299
      $region58: #{_lambda_.7} parent=11 // pred_check_branch
        %417 = sbr.rel (%p415) target = $region60
      $region59: #{_lambda_.7} parent=11 // pred_region
        _
      $region60: #{_lambda_.7} parent=11 // pred_fallthru
        _
      // Predicated region
      $region61: #{_lambda_.7} parent=11 // pred_check
        %p418 = pneg %p320
      $region62: #{_lambda_.7} parent=11 // pred_check_branch
        %420 = sbr.rel (%p418) target = $region64
      $region63: #{_lambda_.7} parent=11 // pred_region
        _
      $region64: #{_lambda_.7} parent=11 // pred_fallthru
        _
      // Predicated region
      $region65: #{_lambda_.7} parent=11 // pred_check
        %p421 = pneg %p341
      $region66: #{_lambda_.7} parent=11 // pred_check_branch
        %423 = sbr.rel (%p421) target = $region68
      $region67: #{_lambda_.7} parent=11 // pred_region
        _
      $region68: #{_lambda_.7} parent=11 // pred_fallthru
        _
    $region12: #{_lambda_.7} parent=5 // pred_fallthru
      _
    %p424 = scmp.lt.s32.totalorder %s21, 2
    // Predicated region
    $region69: #{_lambda_.7} parent=5 // pred_check
      %p425 = pneg %p424
    $region70: #{_lambda_.7} parent=5 // pred_check_branch
      %427 = sbr.rel (%p425) target = $region72
    $region71: #{_lambda_.7} parent=5 // pred_region
      // Predicated region
      $region73: #{_lambda_.7} parent=71 // pred_check
        %p428 = pneg %p41
      $region74: #{_lambda_.7} parent=71 // pred_check_branch
        %430 = sbr.rel (%p428) target = $region76
      $region75: #{_lambda_.7} parent=71 // pred_region
        %p431 = scmp.lt.s32.totalorder %s21, 1
        %s432 = scalar_select %p431, %s21, 1
        %s433 = smul.addr %s432, 3
        %s434 = smul.addr %s433, 8
        %s435 = scalar_lea.vmem %s0, %s434
      $region76: #{_lambda_.7} parent=71 // pred_fallthru
        _
    $region72: #{_lambda_.7} parent=5 // pred_fallthru
      _
    %p436 = scmp.le.s32.totalorder 1, %s21
    %p437 = scmp.lt.s32.totalorder %s21, 3
    %p438 = pnand %p436, %p437
    %p439 = pneg %p438
    // Predicated region
    $region77: #{_lambda_.7} parent=5 // pred_check
      _
    $region78: #{_lambda_.7} parent=5 // pred_check_branch
      %441 = sbr.rel (%p438) target = $region80
    $region79: #{_lambda_.7} parent=5 // pred_region
      %s442 = ssub.s32 %s21, 1
      %p443 = scmp.lt.s32.totalorder %s26, 1
      %s444 = scalar_select %p443, %s26, 1
      %s445 = smul.addr %s444, 3
      %s446 = smul.addr %s445, 8
      %s447 = scalar_lea.vmem %s0, %s446
      %p448 = pneg %p47
      %p449 = pneg %p44
      %p450 = pneg %p68
      %p451 = pneg %p65
      %p452 = pneg %p89
      %p453 = pneg %p86
      %p454 = pneg %p110
      %p455 = pneg %p107
      %p456 = pneg %p131
      %p457 = pneg %p128
      %p458 = pneg %p152
      %p459 = pneg %p149
      %p460 = pneg %p173
      %p461 = pneg %p170
      %p462 = pneg %p194
      %p463 = pneg %p191
      %p464 = pneg %p215
      %p465 = pneg %p212
      %p466 = pneg %p236
      %p467 = pneg %p233
      %p468 = pneg %p257
      %p469 = pneg %p254
      %p470 = pneg %p278
      %p471 = pneg %p275
      %p472 = pneg %p299
      %p473 = pneg %p296
      %p474 = pneg %p320
      %p475 = pneg %p317
      %p476 = pneg %p341
      %p477 = pneg %p338
      %p478 = pneg %p367
      %p479 = pneg %p364
      %p480 = scmp.lt.s32.totalorder %s26, 1
      %s481 = scalar_select %p480, %s26, 1
      %s482 = smul.addr %s481, 3
      %s483 = smul.addr %s482, 8
      %s484 = scalar_lea.vmem %s15, %s483
      %p485 = scmp.lt.s32.totalorder %s26, 1
      %s486 = scalar_select %p485, %s26, 1
      %s487 = smul.addr %s486, 3
      %s488 = smul.addr %s487, 8
      %s489 = scalar_lea.vmem %s0, %s488
      %p490 = scmp.lt.s32.totalorder %s26, 1
      %s491 = scalar_select %p490, %s26, 1
      %s492 = smul.addr %s491, 3
      %s493 = smul.addr %s492, 8
      %s494 = scalar_lea.vmem %s15, %s493
      %v496 = vld [vmem:[%s489] sm:$0xff]
      %v497 = vld [vmem:[%s489 + $0x8] sm:$0xff]
      %v498 = vld [vmem:[%s489 + $0x10] sm:$0xf]
      %vm499 = vcmask 261120
      %v500 = vsel %vm499, %v496, 0.0
      %501 = vadd.xlane.f32.xlu0 %v500
      %v502 = vpop.xlane.xlu0 %501
      %v503 = vsel %vm499, %v497, 0.0
      %504 = vadd.xlane.f32.xlu0 %v503
      %v505 = vpop.xlane.xlu0 %504
      %vm506 = vcmask 257024
      %v507 = vsel %vm506, %v498, 0.0
      %508 = vadd.xlane.f32.xlu0 %v507
      %v509 = vpop.xlane.xlu0 %508
      %v510 = vrcp.pop 32.0
      %v511 = vmul.f32 %v502, %v510
      %v512 = vmul.f32 %v505, %v510
      %v513 = vmul.f32 %v509, %v510
      %v514 = vsub.f32 %v496, %v511
      %v515 = vsub.f32 %v497, %v512
      %v516 = vsub.f32 %v498, %v513
      %v517 = vmul.f32 %v514, %v514
      %v518 = vmul.f32 %v515, %v515
      %v519 = vmul.f32 %v516, %v516
      %v520 = vsel %vm499, %v517, 0.0
      %521 = vadd.xlane.f32.xlu0 %v520
      %v522 = vpop.xlane.xlu0 %521
      %v523 = vsel %vm499, %v518, 0.0
      %524 = vadd.xlane.f32.xlu0 %v523
      %v525 = vpop.xlane.xlu0 %524
      %v526 = vsel %vm506, %v519, 0.0
      %527 = vadd.xlane.f32.xlu0 %v526
      %v528 = vpop.xlane.xlu0 %527
      %v529 = vmul.f32 %v522, %v510
      %v530 = vmul.f32 %v525, %v510
      %v531 = vmul.f32 %v528, %v510
      %v532 = vadd.f32 %v529, 1e-06
      %v533 = vadd.f32 %v530, 1e-06
      %v534 = vadd.f32 %v531, 1e-06
      %v535 = vrsqrt.pop %v532
      %v536 = vrsqrt.pop %v533
      %v537 = vrsqrt.pop %v534
      %v538 = vmul.f32 %v514, %v535
      %v539 = vmul.f32 %v515, %v536
      %v540 = vmul.f32 %v516, %v537
      %v541 = vld [vmem:[%s1] sm:$0x1]
      %v543 = vlaneseq
      %v544 = vshrl.u32 %v543, 7
      %v545 = vsub.s32 0, %v544
      %v546 = vrot.slane %v541, %v545
      %v548 = vmul.f32 %v538, %v546
      %v549 = vmul.f32 %v539, %v546
      %v550 = vmul.f32 %v540, %v546
      %v551 = vld [vmem:[%s2] sm:$0x1]
      %v553 = vlaneseq
      %v554 = vshrl.u32 %v553, 7
      %v555 = vsub.s32 0, %v554
      %v556 = vrot.slane %v551, %v555
      %v558 = vadd.f32 %v548, %v556
      %v559 = vadd.f32 %v549, %v556
      %v560 = vadd.f32 %v550, %v556
      %v561 = vpack.c.bf16 %v559, %v558
      %v562 = vpack.c.bf16 %v560, %v560
      %v563 = vld [vmem:[%s3] sm:$0xf]
      %v564 = vld [vmem:[%s3 + $0x4] sm:$0xf]
      %v565 = vld [vmem:[%s3 + $0x8] sm:$0xf]
      %v566 = vld [vmem:[%s3 + $0xc] sm:$0xf]
      %v567 = vld [vmem:[%s4] sm:$0x1]
      %v569 = vlaneseq
      %v570 = vshrl.u32 %v569, 7
      %v571 = vsub.s32 0, %v570
      %v572 = vrot.slane %v567, %v571
      %v578 = vunpack.c.l.b16 %v563
      %v579 = vunpack.c.l.b16 %v564
      %v580 = vunpack.c.l.b16 %v565
      %v581 = vunpack.c.l.b16 %v566
      %v582 = vpack.c.b16 %v579, %v578
      %v583 = vpack.c.b16 %v581, %v580
      %v587 = vsel %vm499, %v561, 0
      %v590 = vsel %vm499, %v562, 0
      %592 = vmatprep.subr.bf16.mxu0 0
      %593 = vmatpush1.bf16.msra.mxu0 %v582
      %594 = vmatprep.subr.bf16.mxu0 0
      %595 = vmatpush1.bf16.msra.mxu0 %v583
      %596 = vmatprep.subr.bf16.mxu0 0
      %597 = vmatpush1.bf16.msra.mxu0 0
      %598 = vmatprep.subr.bf16.mxu0 0
      %599 = vmatpush1.bf16.msra.mxu0 0
      %600 = vmatprep.subr.bf16.mxu0 0
      %601 = vmatpush1.bf16.msra.mxu0 0
      %602 = vmatprep.subr.bf16.mxu0 0
      %603 = vmatpush1.bf16.msra.mxu0 0
      %604 = vmatprep.subr.bf16.mxu0 0
      %605 = vmatpush1.bf16.msra.mxu0 0
      %606 = vmatprep.subr.bf16.mxu0 0
      %607 = vmatpush1.bf16.msra.mxu0 0
      %608 = vmatprep.subr.bf16.mxu0 0
      %609 = vmatpush1.bf16.msra.mxu0 0
      %610 = vmatprep.subr.bf16.mxu0 0
      %611 = vmatpush1.bf16.msra.mxu0 0
      %612 = vmatprep.subr.bf16.mxu0 0
      %613 = vmatpush1.bf16.msra.mxu0 0
      %614 = vmatprep.subr.bf16.mxu0 0
      %615 = vmatpush1.bf16.msra.mxu0 0
      %616 = vmatprep.subr.bf16.mxu0 0
      %617 = vmatpush1.bf16.msra.mxu0 0
      %618 = vmatprep.subr.bf16.mxu0 0
      %619 = vmatpush1.bf16.msra.mxu0 0
      %620 = vmatprep.subr.bf16.mxu0 0
      %621 = vmatpush1.bf16.msra.mxu0 0
      %622 = vmatprep.subr.bf16.mxu0 0
      %623 = vmatpush1.bf16.msra.mxu0 0
      %624 = vmatprep.mubr.bf16.mxu0 0
      %625 = vmatmul.mubr.bf16.gmra.mrb[0].mxu0 %v587
      %v626 = vpop.f32.mrb[0].mxu0
      %v627 = vadd.f32 %v572, %v626
      %v628 = vpop.f32.mrb[0].mxu0
      %v629 = vpop.f32.mrb[0].mxu0
      %v630 = vadd.f32 %v572, %v629
      %v631 = vpop.f32.mrb[0].mxu0
      %632 = vmatprep.mubr.bf16.mxu0 0
      %633 = vmatmul.mubr.bf16.gmra.mrb[0].mxu0 %v590
      %v634 = vpop.f32.mrb[0].mxu0
      %v635 = vadd.f32 %v572, %v634
      %v636 = vpop.f32.mrb[0].mxu0
      %v637 = vpop.f32.mrb[0].mxu0
      %v638 = vpop.f32.mrb[0].mxu0
      %639 = vdwg.mxu0
      %v640 = vpack.c.bf16 %v630, %v627
      %v641 = vpack.c.bf16 %v635, %v635
      %644 = vrot.lane.b32.xlu0 %v640, 96
      %v645 = vpop.permute.xlu0 %644
      %646 = vrot.lane.b32.xlu0 %v641, 96
      %v647 = vpop.permute.xlu0 %646
      %vm648 = vcmask 64512
      %v650 = vsel %vm648, %v640, 0
      %v653 = vsel %vm648, %v641, 0
      %v656 = vsel %vm648, %v645, 0
      %v659 = vsel %vm648, %v647, 0
      %661 = vmatprep.subr.bf16.mxu0 0
      %662 = vmatpush1.bf16.xpose.msra.mxu0 %v656
      %663 = vmatprep.subr.bf16.mxu0 0
      %664 = vmatpush1.bf16.xpose.msra.mxu0 %v659
      %665 = vmatprep.subr.bf16.mxu0 0
      %666 = vmatpush1.bf16.xpose.msra.mxu0 0
      %667 = vmatprep.subr.bf16.mxu0 0
      %668 = vmatpush1.bf16.xpose.msra.mxu0 0
      %669 = vmatprep.subr.bf16.mxu0 0
      %670 = vmatpush1.bf16.xpose.msra.mxu0 0
      %671 = vmatprep.subr.bf16.mxu0 0
      %672 = vmatpush1.bf16.xpose.msra.mxu0 0
      %673 = vmatprep.subr.bf16.mxu0 0
      %674 = vmatpush1.bf16.xpose.msra.mxu0 0
      %675 = vmatprep.subr.bf16.mxu0 0
      %676 = vmatpush1.bf16.xpose.msra.mxu0 0
      %677 = vmatprep.subr.bf16.mxu0 0
      %678 = vmatpush1.bf16.xpose.msra.mxu0 0
      %679 = vmatprep.subr.bf16.mxu0 0
      %680 = vmatpush1.bf16.xpose.msra.mxu0 0
      %681 = vmatprep.subr.bf16.mxu0 0
      %682 = vmatpush1.bf16.xpose.msra.mxu0 0
      %683 = vmatprep.subr.bf16.mxu0 0
      %684 = vmatpush1.bf16.xpose.msra.mxu0 0
      %685 = vmatprep.subr.bf16.mxu0 0
      %686 = vmatpush1.bf16.xpose.msra.mxu0 0
      %687 = vmatprep.subr.bf16.mxu0 0
      %688 = vmatpush1.bf16.xpose.msra.mxu0 0
      %689 = vmatprep.subr.bf16.mxu0 0
      %690 = vmatpush1.bf16.xpose.msra.mxu0 0
      %691 = vmatprep.subr.bf16.mxu0 0
      %692 = vmatpush1.bf16.xpose.msra.mxu0 0
      %693 = vmatprep.mubr.bf16.mxu0 0
      %694 = vmatmul.mubr.bf16.gmra.mrb[0].mxu0 %v650
      %v695 = vpop.f32.mrb[0].mxu0
      %v696 = vadd.f32 0.0, %v695
      %v697 = vpop.f32.mrb[0].mxu0
      %v698 = vpop.f32.mrb[0].mxu0
      %v699 = vadd.f32 0.0, %v698
      %v700 = vpop.f32.mrb[0].mxu0
      %701 = vmatprep.mubr.bf16.mxu0 0
      %702 = vmatmul.mubr.bf16.gmra.mrb[0].mxu0 %v653
      %v703 = vpop.f32.mrb[0].mxu0
      %v704 = vadd.f32 0.0, %v703
      %v705 = vpop.f32.mrb[0].mxu0
      %v706 = vpop.f32.mrb[0].mxu0
      %v707 = vpop.f32.mrb[0].mxu0
      %708 = vdwg.mxu0
      %v709 = vmul.f32 %v696, 0.35355338
      %v710 = vmul.f32 %v699, 0.35355338
      %v711 = vmul.f32 %v704, 0.35355338
      %vm712 = vcmask 162816
      %v713 = vsel %vm712, %v709, -inf
      %714 = vmax.xlane.f32.xlu0 %v713
      %v715 = vpop.xlane.xlu0 %714
      %v716 = vsel %vm712, %v710, -inf
      %717 = vmax.xlane.f32.xlu0 %v716
      %v718 = vpop.xlane.xlu0 %717
      %vm719 = vcmask 158720
      %v720 = vsel %vm719, %v711, -inf
      %721 = vmax.xlane.f32.xlu0 %v720
      %v722 = vpop.xlane.xlu0 %721
      %v723 = vsub.f32 %v709, %v715
      %v724 = vsub.f32 %v710, %v718
      %v725 = vsub.f32 %v711, %v722
      %v726 = vmul.f32 %v723, 1.442695
      %v727 = vpow.pop %v726
      %v728 = vmul.f32 %v724, 1.442695
      %v729 = vpow.pop %v728
      %v730 = vmul.f32 %v725, 1.442695
      %v731 = vpow.pop %v730
      %v732 = vsel %vm712, %v727, 0.0
      %733 = vadd.xlane.f32.xlu0 %v732
      %v734 = vpop.xlane.xlu0 %733
      %v735 = vsel %vm712, %v729, 0.0
      %736 = vadd.xlane.f32.xlu0 %v735
      %v737 = vpop.xlane.xlu0 %736
      %v738 = vsel %vm719, %v731, 0.0
      %739 = vadd.xlane.f32.xlu0 %v738
      %v740 = vpop.xlane.xlu0 %739
      %v741 = vrcp.pop %v734
      %v742 = vrcp.pop %v737
      %v743 = vrcp.pop %v740
      %v744 = vmul.f32 %v727, %v741
      %v745 = vmul.f32 %v729, %v742
      %v746 = vmul.f32 %v731, %v743
      %v747 = vpack.c.bf16 %v745, %v744
      %v748 = vpack.c.bf16 %v746, %v746
      %749 = vrot.lane.b32.xlu0 %v640, 64
      %v750 = vpop.permute.xlu0 %749
      %751 = vrot.lane.b32.xlu0 %v641, 64
      %v752 = vpop.permute.xlu0 %751
      %v755 = vsel %vm712, %v747, 0
      %v758 = vsel %vm712, %v748, 0
      %vm760 = vcmask 1041408
      %v762 = vsel %vm760, %v752, 0
      %764 = vmatprep.subr.bf16.mxu0 0
      %765 = vmatpush1.bf16.msra.mxu0 %v750
      %766 = vmatprep.subr.bf16.mxu0 0
      %767 = vmatpush1.bf16.msra.mxu0 %v762
      %768 = vmatprep.subr.bf16.mxu0 0
      %769 = vmatpush1.bf16.msra.mxu0 0
      %770 = vmatprep.subr.bf16.mxu0 0
      %771 = vmatpush1.bf16.msra.mxu0 0
      %772 = vmatprep.subr.bf16.mxu0 0
      %773 = vmatpush1.bf16.msra.mxu0 0
      %774 = vmatprep.subr.bf16.mxu0 0
      %775 = vmatpush1.bf16.msra.mxu0 0
      %776 = vmatprep.subr.bf16.mxu0 0
      %777 = vmatpush1.bf16.msra.mxu0 0
      %778 = vmatprep.subr.bf16.mxu0 0
      %779 = vmatpush1.bf16.msra.mxu0 0
      %780 = vmatprep.subr.bf16.mxu0 0
      %781 = vmatpush1.bf16.msra.mxu0 0
      %782 = vmatprep.subr.bf16.mxu0 0
      %783 = vmatpush1.bf16.msra.mxu0 0
      %784 = vmatprep.subr.bf16.mxu0 0
      %785 = vmatpush1.bf16.msra.mxu0 0
      %786 = vmatprep.subr.bf16.mxu0 0
      %787 = vmatpush1.bf16.msra.mxu0 0
      %788 = vmatprep.subr.bf16.mxu0 0
      %789 = vmatpush1.bf16.msra.mxu0 0
      %790 = vmatprep.subr.bf16.mxu0 0
      %791 = vmatpush1.bf16.msra.mxu0 0
      %792 = vmatprep.subr.bf16.mxu0 0
      %793 = vmatpush1.bf16.msra.mxu0 0
      %794 = vmatprep.subr.bf16.mxu0 0
      %795 = vmatpush1.bf16.msra.mxu0 0
      %796 = vmatprep.mubr.bf16.mxu0 0
      %797 = vmatmul.mubr.bf16.gmra.mrb[0].mxu0 %v755
      %v798 = vpop.f32.mrb[0].mxu0
      %v799 = vadd.f32 0.0, %v798
      %v800 = vpop.f32.mrb[0].mxu0
      %v801 = vpop.f32.mrb[0].mxu0
      %v802 = vadd.f32 0.0, %v801
      %v803 = vpop.f32.mrb[0].mxu0
      %804 = vmatprep.mubr.bf16.mxu0 0
      %805 = vmatmul.mubr.bf16.gmra.mrb[0].mxu0 %v758
      %v806 = vpop.f32.mrb[0].mxu0
      %v807 = vadd.f32 0.0, %v806
      %v808 = vpop.f32.mrb[0].mxu0
      %v809 = vpop.f32.mrb[0].mxu0
      %v810 = vpop.f32.mrb[0].mxu0
      %811 = vdwg.mxu0
      %812 = vrot.lane.b32.xlu0 %v640, 120
      %v813 = vpop.permute.xlu0 %812
      %814 = vrot.lane.b32.xlu0 %v641, 120
      %v815 = vpop.permute.xlu0 %814
      %816 = vrot.lane.b32.xlu0 %v640, 88
      %v817 = vpop.permute.xlu0 %816
      %818 = vrot.lane.b32.xlu0 %v641, 88
      %v819 = vpop.permute.xlu0 %818
      %v821 = vsel %vm648, %v813, 0
      %v824 = vsel %vm648, %v815, 0
      %v827 = vsel %vm648, %v817, 0
      %v830 = vsel %vm648, %v819, 0
      %832 = vmatprep.subr.bf16.mxu0 0
      %833 = vmatpush1.bf16.xpose.msra.mxu0 %v827
      %834 = vmatprep.subr.bf16.mxu0 0
      %835 = vmatpush1.bf16.xpose.msra.mxu0 %v830
      %836 = vmatprep.subr.bf16.mxu0 0
      %837 = vmatpush1.bf16.xpose.msra.mxu0 0
      %838 = vmatprep.subr.bf16.mxu0 0
      %839 = vmatpush1.bf16.xpose.msra.mxu0 0
      %840 = vmatprep.subr.bf16.mxu0 0
      %841 = vmatpush1.bf16.xpose.msra.mxu0 0
      %842 = vmatprep.subr.bf16.mxu0 0
      %843 = vmatpush1.bf16.xpose.msra.mxu0 0
      %844 = vmatprep.subr.bf16.mxu0 0
      %845 = vmatpush1.bf16.xpose.msra.mxu0 0
      %846 = vmatprep.subr.bf16.mxu0 0
      %847 = vmatpush1.bf16.xpose.msra.mxu0 0
      %848 = vmatprep.subr.bf16.mxu0 0
      %849 = vmatpush1.bf16.xpose.msra.mxu0 0
      %850 = vmatprep.subr.bf16.mxu0 0
      %851 = vmatpush1.bf16.xpose.msra.mxu0 0
      %852 = vmatprep.subr.bf16.mxu0 0
      %853 = vmatpush1.bf16.xpose.msra.mxu0 0
      %854 = vmatprep.subr.bf16.mxu0 0
      %855 = vmatpush1.bf16.xpose.msra.mxu0 0
      %856 = vmatprep.subr.bf16.mxu0 0
      %857 = vmatpush1.bf16.xpose.msra.mxu0 0
      %858 = vmatprep.subr.bf16.mxu0 0
      %859 = vmatpush1.bf16.xpose.msra.mxu0 0
      %860 = vmatprep.subr.bf16.mxu0 0
      %861 = vmatpush1.bf16.xpose.msra.mxu0 0
      %862 = vmatprep.subr.bf16.mxu0 0
      %863 = vmatpush1.bf16.xpose.msra.mxu0 0
      %864 = vmatprep.mubr.bf16.mxu0 0
      %865 = vmatmul.mubr.bf16.gmra.mrb[0].mxu0 %v821
      %v866 = vpop.f32.mrb[0].mxu0
      %v867 = vadd.f32 0.0, %v866
      %v868 = vpop.f32.mrb[0].mxu0
      %v869 = vpop.f32.mrb[0].mxu0
      %v870 = vadd.f32 0.0, %v869
      %v871 = vpop.f32.mrb[0].mxu0
      %872 = vmatprep.mubr.bf16.mxu0 0
      %873 = vmatmul.mubr.bf16.gmra.mrb[0].mxu0 %v824
      %v874 = vpop.f32.mrb[0].mxu0
      %v875 = vadd.f32 0.0, %v874
      %v876 = vpop.f32.mrb[0].mxu0
      %v877 = vpop.f32.mrb[0].mxu0
      %v878 = vpop.f32.mrb[0].mxu0
      %879 = vdwg.mxu0
      %v880 = vmul.f32 %v867, 0.35355338
      %v881 = vmul.f32 %v870, 0.35355338
      %v882 = vmul.f32 %v875, 0.35355338
      %v883 = vsel %vm712, %v880, -inf
      %884 = vmax.xlane.f32.xlu0 %v883
      %v885 = vpop.xlane.xlu0 %884
      %v886 = vsel %vm712, %v881, -inf
      %887 = vmax.xlane.f32.xlu0 %v886
      %v888 = vpop.xlane.xlu0 %887
      %v889 = vsel %vm719, %v882, -inf
      %890 = vmax.xlane.f32.xlu0 %v889
      %v891 = vpop.xlane.xlu0 %890
      %v892 = vsub.f32 %v880, %v885
      %v893 = vsub.f32 %v881, %v888
      %v894 = vsub.f32 %v882, %v891
      %v895 = vmul.f32 %v892, 1.442695
      %v896 = vpow.pop %v895
      %v897 = vmul.f32 %v893, 1.442695
      %v898 = vpow.pop %v897
      %v899 = vmul.f32 %v894, 1.442695
      %v900 = vpow.pop %v899
      %v901 = vsel %vm712, %v896, 0.0
      %902 = vadd.xlane.f32.xlu0 %v901
      %v903 = vpop.xlane.xlu0 %902
      %v904 = vsel %vm712, %v898, 0.0
      %905 = vadd.xlane.f32.xlu0 %v904
      %v906 = vpop.xlane.xlu0 %905
      %v907 = vsel %vm719, %v900, 0.0
      %908 = vadd.xlane.f32.xlu0 %v907
      %v909 = vpop.xlane.xlu0 %908
      %v910 = vrcp.pop %v903
      %v911 = vrcp.pop %v906
      %v912 = vrcp.pop %v909
      %v913 = vmul.f32 %v896, %v910
      %v914 = vmul.f32 %v898, %v911
      %v915 = vmul.f32 %v900, %v912
      %v916 = vpack.c.bf16 %v914, %v913
      %v917 = vpack.c.bf16 %v915, %v915
      %918 = vrot.lane.b32.xlu0 %v640, 56
      %v919 = vpop.permute.xlu0 %918
      %920 = vrot.lane.b32.xlu0 %v641, 56
      %v921 = vpop.permute.xlu0 %920
      %v924 = vsel %vm712, %v916, 0
      %v927 = vsel %vm712, %v917, 0
      %v930 = vsel %vm760, %v921, 0
      %932 = vmatprep.subr.bf16.mxu0 0
      %933 = vmatpush1.bf16.msra.mxu0 %v919
      %934 = vmatprep.subr.bf16.mxu0 0
      %935 = vmatpush1.bf16.msra.mxu0 %v930
      %936 = vmatprep.subr.bf16.mxu0 0
      %937 = vmatpush1.bf16.msra.mxu0 0
      %938 = vmatprep.subr.bf16.mxu0 0
      %939 = vmatpush1.bf16.msra.mxu0 0
      %940 = vmatprep.subr.bf16.mxu0 0
      %941 = vmatpush1.bf16.msra.mxu0 0
      %942 = vmatprep.subr.bf16.mxu0 0
      %943 = vmatpush1.bf16.msra.mxu0 0
      %944 = vmatprep.subr.bf16.mxu0 0
      %945 = vmatpush1.bf16.msra.mxu0 0
      %946 = vmatprep.subr.bf16.mxu0 0
      %947 = vmatpush1.bf16.msra.mxu0 0
      %948 = vmatprep.subr.bf16.mxu0 0
      %949 = vmatpush1.bf16.msra.mxu0 0
      %950 = vmatprep.subr.bf16.mxu0 0
      %951 = vmatpush1.bf16.msra.mxu0 0
      %952 = vmatprep.subr.bf16.mxu0 0
      %953 = vmatpush1.bf16.msra.mxu0 0
      %954 = vmatprep.subr.bf16.mxu0 0
      %955 = vmatpush1.bf16.msra.mxu0 0
      %956 = vmatprep.subr.bf16.mxu0 0
      %957 = vmatpush1.bf16.msra.mxu0 0
      %958 = vmatprep.subr.bf16.mxu0 0
      %959 = vmatpush1.bf16.msra.mxu0 0
      %960 = vmatprep.subr.bf16.mxu0 0
      %961 = vmatpush1.bf16.msra.mxu0 0
      %962 = vmatprep.subr.bf16.mxu0 0
      %963 = vmatpush1.bf16.msra.mxu0 0
      %964 = vmatprep.mubr.bf16.mxu0 0
      %965 = vmatmul.mubr.bf16.gmra.mrb[0].mxu0 %v924
      %v966 = vpop.f32.mrb[0].mxu0
      %v967 = vadd.f32 0.0, %v966
      %v968 = vpop.f32.mrb[0].mxu0
      %v969 = vpop.f32.mrb[0].mxu0
      %v970 = vadd.f32 0.0, %v969
      %v971 = vpop.f32.mrb[0].mxu0
      %972 = vmatprep.mubr.bf16.mxu0 0
      %973 = vmatmul.mubr.bf16.gmra.mrb[0].mxu0 %v927
      %v974 = vpop.f32.mrb[0].mxu0
      %v975 = vadd.f32 0.0, %v974
      %v976 = vpop.f32.mrb[0].mxu0
      %v977 = vpop.f32.mrb[0].mxu0
      %v978 = vpop.f32.mrb[0].mxu0
      %979 = vdwg.mxu0
      %980 = vrot.lane.b32.xlu0 %v640, 112
      %v981 = vpop.permute.xlu0 %980
      %982 = vrot.lane.b32.xlu0 %v641, 112
      %v983 = vpop.permute.xlu0 %982
      %984 = vrot.lane.b32.xlu0 %v640, 80
      %v985 = vpop.permute.xlu0 %984
      %986 = vrot.lane.b32.xlu0 %v641, 80
      %v987 = vpop.permute.xlu0 %986
      %v989 = vsel %vm648, %v981, 0
      %v992 = vsel %vm648, %v983, 0
      %v995 = vsel %vm648, %v985, 0
      %v998 = vsel %vm648, %v987, 0
      %1000 = vmatprep.subr.bf16.mxu0 0
      %1001 = vmatpush1.bf16.xpose.msra.mxu0 %v995
      %1002 = vmatprep.subr.bf16.mxu0 0
      %1003 = vmatpush1.bf16.xpose.msra.mxu0 %v998
      %1004 = vmatprep.subr.bf16.mxu0 0
      %1005 = vmatpush1.bf16.xpose.msra.mxu0 0
      %1006 = vmatprep.subr.bf16.mxu0 0
      %1007 = vmatpush1.bf16.xpose.msra.mxu0 0
      %1008 = vmatprep.subr.bf16.mxu0 0
      %1009 = vmatpush1.bf16.xpose.msra.mxu0 0
      %1010 = vmatprep.subr.bf16.mxu0 0
      %1011 = vmatpush1.bf16.xpose.msra.mxu0 0
      %1012 = vmatprep.subr.bf16.mxu0 0
      %1013 = vmatpush1.bf16.xpose.msra.mxu0 0
      %1014 = vmatprep.subr.bf16.mxu0 0
      %1015 = vmatpush1.bf16.xpose.msra.mxu0 0
      %1016 = vmatprep.subr.bf16.mxu0 0
      %1017 = vmatpush1.bf16.xpose.msra.mxu0 0
      %1018 = vmatprep.subr.bf16.mxu0 0
      %1019 = vmatpush1.bf16.xpose.msra.mxu0 0
      %1020 = vmatprep.subr.bf16.mxu0 0
      %1021 = vmatpush1.bf16.xpose.msra.mxu0 0
      %1022 = vmatprep.subr.bf16.mxu0 0
      %1023 = vmatpush1.bf16.xpose.msra.mxu0 0
      %1024 = vmatprep.subr.bf16.mxu0 0
      %1025 = vmatpush1.bf16.xpose.msra.mxu0 0
      %1026 = vmatprep.subr.bf16.mxu0 0
      %1027 = vmatpush1.bf16.xpose.msra.mxu0 0
      %1028 = vmatprep.subr.bf16.mxu0 0
      %1029 = vmatpush1.bf16.xpose.msra.mxu0 0
      %1030 = vmatprep.subr.bf16.mxu0 0
      %1031 = vmatpush1.bf16.xpose.msra.mxu0 0
      %1032 = vmatprep.mubr.bf16.mxu0 0
      %1033 = vmatmul.mubr.bf16.gmra.mrb[0].mxu0 %v989
      %v1034 = vpop.f32.mrb[0].mxu0
      %v1035 = vadd.f32 0.0, %v1034
      %v1036 = vpop.f32.mrb[0].mxu0
      %v1037 = vpop.f32.mrb[0].mxu0
      %v1038 = vadd.f32 0.0, %v1037
      %v1039 = vpop.f32.mrb[0].mxu0
      %1040 = vmatprep.mubr.bf16.mxu0 0
      %1041 = vmatmul.mubr.bf16.gmra.mrb[0].mxu0 %v992
      %v1042 = vpop.f32.mrb[0].mxu0
      %v1043 = vadd.f32 0.0, %v1042
      %v1044 = vpop.f32.mrb[0].mxu0
      %v1045 = vpop.f32.mrb[0].mxu0
      %v1046 = vpop.f32.mrb[0].mxu0
      %1047 = vdwg.mxu0
      %v1048 = vmul.f32 %v1035, 0.35355338
      %v1049 = vmul.f32 %v1038, 0.35355338
      %v1050 = vmul.f32 %v1043, 0.35355338
      %v1051 = vsel %vm712, %v1048, -inf
      %1052 = vmax.xlane.f32.xlu0 %v1051
      %v1053 = vpop.xlane.xlu0 %1052
      %v1054 = vsel %vm712, %v1049, -inf
      %1055 = vmax.xlane.f32.xlu0 %v1054
      %v1056 = vpop.xlane.xlu0 %1055
      %v1057 = vsel %vm719, %v1050, -inf
      %1058 = vmax.xlane.f32.xlu0 %v1057
      %v1059 = vpop.xlane.xlu0 %1058
      %v1060 = vsub.f32 %v1048, %v1053
      %v1061 = vsub.f32 %v1049, %v1056
      %v1062 = vsub.f32 %v1050, %v1059
      %v1063 = vmul.f32 %v1060, 1.442695
      %v1064 = vpow.pop %v1063
      %v1065 = vmul.f32 %v1061, 1.442695
      %v1066 = vpow.pop %v1065
      %v1067 = vmul.f32 %v1062, 1.442695
      %v1068 = vpow.pop %v1067
      %v1069 = vsel %vm712, %v1064, 0.0
      %1070 = vadd.xlane.f32.xlu0 %v1069
      %v1071 = vpop.xlane.xlu0 %1070
      %v1072 = vsel %vm712, %v1066, 0.0
      %1073 = vadd.xlane.f32.xlu0 %v1072
      %v1074 = vpop.xlane.xlu0 %1073
      %v1075 = vsel %vm719, %v1068, 0.0
      %1076 = vadd.xlane.f32.xlu0 %v1075
      %v1077 = vpop.xlane.xlu0 %1076
      %v1078 = vrcp.pop %v1071
      %v1079 = vrcp.pop %v1074
      %v1080 = vrcp.pop %v1077
      %v1081 = vmul.f32 %v1064, %v1078
      %v1082 = vmul.f32 %v1066, %v1079
      %v1083 = vmul.f32 %v1068, %v1080
      %v1084 = vpack.c.bf16 %v1082, %v1081
      %v1085 = vpack.c.bf16 %v1083, %v1083
      %1086 = vrot.lane.b32.xlu0 %v640, 48
      %v1087 = vpop.permute.xlu0 %1086
      %1088 = vrot.lane.b32.xlu0 %v641, 48
      %v1089 = vpop.permute.xlu0 %1088
      %v1092 = vsel %vm712, %v1084, 0
      %v1095 = vsel %vm712, %v1085, 0
      %v1098 = vsel %vm760, %v1089, 0
      %1100 = vmatprep.subr.bf16.mxu0 0
      %1101 = vmatpush1.bf16.msra.mxu0 %v1087
      %1102 = vmatprep.subr.bf16.mxu0 0
      %1103 = vmatpush1.bf16.msra.mxu0 %v1098
      %1104 = vmatprep.subr.bf16.mxu0 0
      %1105 = vmatpush1.bf16.msra.mxu0 0
      %1106 = vmatprep.subr.bf16.mxu0 0
      %1107 = vmatpush1.bf16.msra.mxu0 0
      %1108 = vmatprep.subr.bf16.mxu0 0
      %1109 = vmatpush1.bf16.msra.mxu0 0
      %1110 = vmatprep.subr.bf16.mxu0 0
      %1111 = vmatpush1.bf16.msra.mxu0 0
      %1112 = vmatprep.subr.bf16.mxu0 0
      %1113 = vmatpush1.bf16.msra.mxu0 0
      %1114 = vmatprep.subr.bf16.mxu0 0
      %1115 = vmatpush1.bf16.msra.mxu0 0
      %1116 = vmatprep.subr.bf16.mxu0 0
      %1117 = vmatpush1.bf16.msra.mxu0 0
      %1118 = vmatprep.subr.bf16.mxu0 0
      %1119 = vmatpush1.bf16.msra.mxu0 0
      %1120 = vmatprep.subr.bf16.mxu0 0
      %1121 = vmatpush1.bf16.msra.mxu0 0
      %1122 = vmatprep.subr.bf16.mxu0 0
      %1123 = vmatpush1.bf16.msra.mxu0 0
      %1124 = vmatprep.subr.bf16.mxu0 0
      %1125 = vmatpush1.bf16.msra.mxu0 0
      %1126 = vmatprep.subr.bf16.mxu0 0
      %1127 = vmatpush1.bf16.msra.mxu0 0
      %1128 = vmatprep.subr.bf16.mxu0 0
      %1129 = vmatpush1.bf16.msra.mxu0 0
      %1130 = vmatprep.subr.bf16.mxu0 0
      %1131 = vmatpush1.bf16.msra.mxu0 0
      %1132 = vmatprep.mubr.bf16.mxu0 0
      %1133 = vmatmul.mubr.bf16.gmra.mrb[0].mxu0 %v1092
      %v1134 = vpop.f32.mrb[0].mxu0
      %v1135 = vadd.f32 0.0, %v1134
      %v1136 = vpop.f32.mrb[0].mxu0
      %v1137 = vpop.f32.mrb[0].mxu0
      %v1138 = vadd.f32 0.0, %v1137
      %v1139 = vpop.f32.mrb[0].mxu0
      %1140 = vmatprep.mubr.bf16.mxu0 0
      %1141 = vmatmul.mubr.bf16.gmra.mrb[0].mxu0 %v1095
      %v1142 = vpop.f32.mrb[0].mxu0
      %v1143 = vadd.f32 0.0, %v1142
      %v1144 = vpop.f32.mrb[0].mxu0
      %v1145 = vpop.f32.mrb[0].mxu0
      %v1146 = vpop.f32.mrb[0].mxu0
      %1147 = vdwg.mxu0
      %1148 = vrot.lane.b32.xlu0 %v640, 104
      %v1149 = vpop.permute.xlu0 %1148
      %1150 = vrot.lane.b32.xlu0 %v641, 104
      %v1151 = vpop.permute.xlu0 %1150
      %1152 = vrot.lane.b32.xlu0 %v640, 72
      %v1153 = vpop.permute.xlu0 %1152
      %1154 = vrot.lane.b32.xlu0 %v641, 72
      %v1155 = vpop.permute.xlu0 %1154
      %v1157 = vsel %vm648, %v1149, 0
      %v1160 = vsel %vm648, %v1151, 0
      %v1163 = vsel %vm648, %v1153, 0
      %v1166 = vsel %vm648, %v1155, 0
      %1168 = vmatprep.subr.bf16.mxu0 0
      %1169 = vmatpush1.bf16.xpose.msra.mxu0 %v1163
      %1170 = vmatprep.subr.bf16.mxu0 0
      %1171 = vmatpush1.bf16.xpose.msra.mxu0 %v1166
      %1172 = vmatprep.subr.bf16.mxu0 0
      %1173 = vmatpush1.bf16.xpose.msra.mxu0 0
      %1174 = vmatprep.subr.bf16.mxu0 0
      %1175 = vmatpush1.bf16.xpose.msra.mxu0 0
      %1176 = vmatprep.subr.bf16.mxu0 0
      %1177 = vmatpush1.bf16.xpose.msra.mxu0 0
      %1178 = vmatprep.subr.bf16.mxu0 0
      %1179 = vmatpush1.bf16.xpose.msra.mxu0 0
      %1180 = vmatprep.subr.bf16.mxu0 0
      %1181 = vmatpush1.bf16.xpose.msra.mxu0 0
      %1182 = vmatprep.subr.bf16.mxu0 0
      %1183 = vmatpush1.bf16.xpose.msra.mxu0 0
      %1184 = vmatprep.subr.bf16.mxu0 0
      %1185 = vmatpush1.bf16.xpose.msra.mxu0 0
      %1186 = vmatprep.subr.bf16.mxu0 0
      %1187 = vmatpush1.bf16.xpose.msra.mxu0 0
      %1188 = vmatprep.subr.bf16.mxu0 0
      %1189 = vmatpush1.bf16.xpose.msra.mxu0 0
      %1190 = vmatprep.subr.bf16.mxu0 0
      %1191 = vmatpush1.bf16.xpose.msra.mxu0 0
      %1192 = vmatprep.subr.bf16.mxu0 0
      %1193 = vmatpush1.bf16.xpose.msra.mxu0 0
      %1194 = vmatprep.subr.bf16.mxu0 0
      %1195 = vmatpush1.bf16.xpose.msra.mxu0 0
      %1196 = vmatprep.subr.bf16.mxu0 0
      %1197 = vmatpush1.bf16.xpose.msra.mxu0 0
      %1198 = vmatprep.subr.bf16.mxu0 0
      %1199 = vmatpush1.bf16.xpose.msra.mxu0 0
      %1200 = vmatprep.mubr.bf16.mxu0 0
      %1201 = vmatmul.mubr.bf16.gmra.mrb[0].mxu0 %v1157
      %v1202 = vpop.f32.mrb[0].mxu0
      %v1203 = vadd.f32 0.0, %v1202
      %v1204 = vpop.f32.mrb[0].mxu0
      %v1205 = vpop.f32.mrb[0].mxu0
      %v1206 = vadd.f32 0.0, %v1205
      %v1207 = vpop.f32.mrb[0].mxu0
      %1208 = vmatprep.mubr.bf16.mxu0 0
      %1209 = vmatmul.mubr.bf16.gmra.mrb[0].mxu0 %v1160
      %v1210 = vpop.f32.mrb[0].mxu0
      %v1211 = vadd.f32 0.0, %v1210
      %v1212 = vpop.f32.mrb[0].mxu0
      %v1213 = vpop.f32.mrb[0].mxu0
      %v1214 = vpop.f32.mrb[0].mxu0
      %1215 = vdwg.mxu0
      %v1216 = vmul.f32 %v1203, 0.35355338
      %v1217 = vmul.f32 %v1206, 0.35355338
      %v1218 = vmul.f32 %v1211, 0.35355338
      %v1219 = vsel %vm712, %v1216, -inf
      %1220 = vmax.xlane.f32.xlu0 %v1219
      %v1221 = vpop.xlane.xlu0 %1220
      %v1222 = vsel %vm712, %v1217, -inf
      %1223 = vmax.xlane.f32.xlu0 %v1222
      %v1224 = vpop.xlane.xlu0 %1223
      %v1225 = vsel %vm719, %v1218, -inf
      %1226 = vmax.xlane.f32.xlu0 %v1225
      %v1227 = vpop.xlane.xlu0 %1226
      %v1228 = vsub.f32 %v1216, %v1221
      %v1229 = vsub.f32 %v1217, %v1224
      %v1230 = vsub.f32 %v1218, %v1227
      %v1231 = vmul.f32 %v1228, 1.442695
      %v1232 = vpow.pop %v1231
      %v1233 = vmul.f32 %v1229, 1.442695
      %v1234 = vpow.pop %v1233
      %v1235 = vmul.f32 %v1230, 1.442695
      %v1236 = vpow.pop %v1235
      %v1237 = vsel %vm712, %v1232, 0.0
      %1238 = vadd.xlane.f32.xlu0 %v1237
      %v1239 = vpop.xlane.xlu0 %1238
      %v1240 = vsel %vm712, %v1234, 0.0
      %1241 = vadd.xlane.f32.xlu0 %v1240
      %v1242 = vpop.xlane.xlu0 %1241
      %v1243 = vsel %vm719, %v1236, 0.0
      %1244 = vadd.xlane.f32.xlu0 %v1243
      %v1245 = vpop.xlane.xlu0 %1244
      %v1246 = vrcp.pop %v1239
      %v1247 = vrcp.pop %v1242
      %v1248 = vrcp.pop %v1245
      %v1249 = vmul.f32 %v1232, %v1246
      %v1250 = vmul.f32 %v1234, %v1247
      %v1251 = vmul.f32 %v1236, %v1248
      %v1252 = vpack.c.bf16 %v1250, %v1249
      %v1253 = vpack.c.bf16 %v1251, %v1251
      %1254 = vrot.lane.b32.xlu0 %v640, 40
      %v1255 = vpop.permute.xlu0 %1254
      %1256 = vrot.lane.b32.xlu0 %v641, 40
      %v1257 = vpop.permute.xlu0 %1256
      %v1260 = vsel %vm712, %v1252, 0
      %v1263 = vsel %vm712, %v1253, 0
      %v1266 = vsel %vm760, %v1257, 0
      %1268 = vmatprep.subr.bf16.mxu0 0
      %1269 = vmatpush1.bf16.msra.mxu0 %v1255
      %1270 = vmatprep.subr.bf16.mxu0 0
      %1271 = vmatpush1.bf16.msra.mxu0 %v1266
      %1272 = vmatprep.subr.bf16.mxu0 0
      %1273 = vmatpush1.bf16.msra.mxu0 0
      %1274 = vmatprep.subr.bf16.mxu0 0
      %1275 = vmatpush1.bf16.msra.mxu0 0
      %1276 = vmatprep.subr.bf16.mxu0 0
      %1277 = vmatpush1.bf16.msra.mxu0 0
      %1278 = vmatprep.subr.bf16.mxu0 0
      %1279 = vmatpush1.bf16.msra.mxu0 0
      %1280 = vmatprep.subr.bf16.mxu0 0
      %1281 = vmatpush1.bf16.msra.mxu0 0
      %1282 = vmatprep.subr.bf16.mxu0 0
      %1283 = vmatpush1.bf16.msra.mxu0 0
      %1284 = vmatprep.subr.bf16.mxu0 0
      %1285 = vmatpush1.bf16.msra.mxu0 0
      %1286 = vmatprep.subr.bf16.mxu0 0
      %1287 = vmatpush1.bf16.msra.mxu0 0
      %1288 = vmatprep.subr.bf16.mxu0 0
      %1289 = vmatpush1.bf16.msra.mxu0 0
      %1290 = vmatprep.subr.bf16.mxu0 0
      %1291 = vmatpush1.bf16.msra.mxu0 0
      %1292 = vmatprep.subr.bf16.mxu0 0
      %1293 = vmatpush1.bf16.msra.mxu0 0
      %1294 = vmatprep.subr.bf16.mxu0 0
      %1295 = vmatpush1.bf16.msra.mxu0 0
      %1296 = vmatprep.subr.bf16.mxu0 0
      %1297 = vmatpush1.bf16.msra.mxu0 0
      %1298 = vmatprep.subr.bf16.mxu0 0
      %1299 = vmatpush1.bf16.msra.mxu0 0
      %1300 = vmatprep.mubr.bf16.mxu0 0
      %1301 = vmatmul.mubr.bf16.gmra.mrb[0].mxu0 %v1260
      %v1302 = vpop.f32.mrb[0].mxu0
      %v1303 = vadd.f32 0.0, %v1302
      %v1304 = vpop.f32.mrb[0].mxu0
      %v1305 = vpop.f32.mrb[0].mxu0
      %v1306 = vadd.f32 0.0, %v1305
      %v1307 = vpop.f32.mrb[0].mxu0
      %1308 = vmatprep.mubr.bf16.mxu0 0
      %1309 = vmatmul.mubr.bf16.gmra.mrb[0].mxu0 %v1263
      %v1310 = vpop.f32.mrb[0].mxu0
      %v1311 = vadd.f32 0.0, %v1310
      %v1312 = vpop.f32.mrb[0].mxu0
      %v1313 = vpop.f32.mrb[0].mxu0
      %v1314 = vpop.f32.mrb[0].mxu0
      %1315 = vdwg.mxu0
      %1319 = vrot.lane.b32.xlu0 %v967, 8
      %v1320 = vpop.permute.xlu0 %1319
      %1321 = vrot.lane.b32.xlu0 %v970, 8
      %v1322 = vpop.permute.xlu0 %1321
      %1323 = vrot.lane.b32.xlu0 %v975, 8
      %v1324 = vpop.permute.xlu0 %1323
      %1331 = vrot.lane.b32.xlu0 %v1135, 16
      %v1332 = vpop.permute.xlu0 %1331
      %1333 = vrot.lane.b32.xlu0 %v1138, 16
      %v1334 = vpop.permute.xlu0 %1333
      %1335 = vrot.lane.b32.xlu0 %v1143, 16
      %v1336 = vpop.permute.xlu0 %1335
      %1343 = vrot.lane.b32.xlu0 %v1303, 24
      %v1344 = vpop.permute.xlu0 %1343
      %1345 = vrot.lane.b32.xlu0 %v1306, 24
      %v1346 = vpop.permute.xlu0 %1345
      %1347 = vrot.lane.b32.xlu0 %v1311, 24
      %v1348 = vpop.permute.xlu0 %1347
      %v1352 = vsel %vm648, %v799, %v1320
      %v1353 = vsel %vm648, %v802, %v1322
      %v1354 = vsel %vm648, %v807, %v1324
      %vm1355 = vcmask 130048
      %v1356 = vsel %vm1355, %v1352, %v1332
      %v1357 = vsel %vm1355, %v1353, %v1334
      %v1358 = vsel %vm1355, %v1354, %v1336
      %vm1359 = vcmask 195584
      %v1360 = vsel %vm1359, %v1356, %v1344
      %v1361 = vsel %vm1359, %v1357, %v1346
      %v1362 = vsel %vm1359, %v1358, %v1348
      %v1363 = vpack.c.bf16 %v1361, %v1360
      %v1364 = vpack.c.bf16 %v1362, %v1362
      %v1365 = vld [vmem:[%s5] sm:$0xf]
      %v1366 = vld [vmem:[%s5 + $0x4] sm:$0xf]
      %v1367 = vld [vmem:[%s5 + $0x8] sm:$0xf]
      %v1368 = vld [vmem:[%s5 + $0xc] sm:$0xf]
      %v1369 = vld [vmem:[%s6] sm:$0x1]
      %v1371 = vlaneseq
      %v1372 = vshrl.u32 %v1371, 7
      %v1373 = vsub.s32 0, %v1372
      %v1374 = vrot.slane %v1369, %v1373
      %v1380 = vunpack.c.l.b16 %v1365
      %v1381 = vunpack.c.l.b16 %v1366
      %v1382 = vunpack.c.l.b16 %v1367
      %v1383 = vunpack.c.l.b16 %v1368
      %v1384 = vpack.c.b16 %v1381, %v1380
      %v1385 = vpack.c.b16 %v1383, %v1382
      %v1389 = vsel %vm499, %v1363, 0
      %v1392 = vsel %vm499, %v1364, 0
      %1394 = vmatprep.subr.bf16.mxu0 0
      %1395 = vmatpush1.bf16.msra.mxu0 %v1384
      %1396 = vmatprep.subr.bf16.mxu0 0
      %1397 = vmatpush1.bf16.msra.mxu0 %v1385
      %1398 = vmatprep.subr.bf16.mxu0 0
      %1399 = vmatpush1.bf16.msra.mxu0 0
      %1400 = vmatprep.subr.bf16.mxu0 0
      %1401 = vmatpush1.bf16.msra.mxu0 0
      %1402 = vmatprep.subr.bf16.mxu0 0
      %1403 = vmatpush1.bf16.msra.mxu0 0
      %1404 = vmatprep.subr.bf16.mxu0 0
      %1405 = vmatpush1.bf16.msra.mxu0 0
      %1406 = vmatprep.subr.bf16.mxu0 0
      %1407 = vmatpush1.bf16.msra.mxu0 0
      %1408 = vmatprep.subr.bf16.mxu0 0
      %1409 = vmatpush1.bf16.msra.mxu0 0
      %1410 = vmatprep.subr.bf16.mxu0 0
      %1411 = vmatpush1.bf16.msra.mxu0 0
      %1412 = vmatprep.subr.bf16.mxu0 0
      %1413 = vmatpush1.bf16.msra.mxu0 0
      %1414 = vmatprep.subr.bf16.mxu0 0
      %1415 = vmatpush1.bf16.msra.mxu0 0
      %1416 = vmatprep.subr.bf16.mxu0 0
      %1417 = vmatpush1.bf16.msra.mxu0 0
      %1418 = vmatprep.subr.bf16.mxu0 0
      %1419 = vmatpush1.bf16.msra.mxu0 0
      %1420 = vmatprep.subr.bf16.mxu0 0
      %1421 = vmatpush1.bf16.msra.mxu0 0
      %1422 = vmatprep.subr.bf16.mxu0 0
      %1423 = vmatpush1.bf16.msra.mxu0 0
      %1424 = vmatprep.subr.bf16.mxu0 0
      %1425 = vmatpush1.bf16.msra.mxu0 0
      %1426 = vmatprep.mubr.bf16.mxu0 0
      %1427 = vmatmul.mubr.bf16.gmra.mrb[0].mxu0 %v1389
      %v1428 = vpop.f32.mrb[0].mxu0
      %v1429 = vadd.f32 %v1374, %v1428
      %v1430 = vpop.f32.mrb[0].mxu0
      %v1431 = vpop.f32.mrb[0].mxu0
      %v1432 = vadd.f32 %v1374, %v1431
      %v1433 = vpop.f32.mrb[0].mxu0
      %1434 = vmatprep.mubr.bf16.mxu0 0
      %1435 = vmatmul.mubr.bf16.gmra.mrb[0].mxu0 %v1392
      %v1436 = vpop.f32.mrb[0].mxu0
      %v1437 = vadd.f32 %v1374, %v1436
      %v1438 = vpop.f32.mrb[0].mxu0
      %v1439 = vpop.f32.mrb[0].mxu0
      %v1440 = vpop.f32.mrb[0].mxu0
      %1441 = vdwg.mxu0
      %v1442 = vadd.f32 %v1429, %v496
      %v1443 = vadd.f32 %v1432, %v497
      %v1444 = vadd.f32 %v1437, %v498
      %v1445 = vsel %vm499, %v1442, 0.0
      %1446 = vadd.xlane.f32.xlu0 %v1445
      %v1447 = vpop.xlane.xlu0 %1446
      %v1448 = vsel %vm499, %v1443, 0.0
      %1449 = vadd.xlane.f32.xlu0 %v1448
      %v1450 = vpop.xlane.xlu0 %1449
      %v1451 = vsel %vm506, %v1444, 0.0
      %1452 = vadd.xlane.f32.xlu0 %v1451
      %v1453 = vpop.xlane.xlu0 %1452
      %v1454 = vmul.f32 %v1447, %v510
      %v1455 = vmul.f32 %v1450, %v510
      %v1456 = vmul.f32 %v1453, %v510
      %v1457 = vsub.f32 %v1442, %v1454
      %v1458 = vsub.f32 %v1443, %v1455
      %v1459 = vsub.f32 %v1444, %v1456
      %v1460 = vmul.f32 %v1457, %v1457
      %v1461 = vmul.f32 %v1458, %v1458
      %v1462 = vmul.f32 %v1459, %v1459
      %v1463 = vsel %vm499, %v1460, 0.0
      %1464 = vadd.xlane.f32.xlu0 %v1463
      %v1465 = vpop.xlane.xlu0 %1464
      %v1466 = vsel %vm499, %v1461, 0.0
      %1467 = vadd.xlane.f32.xlu0 %v1466
      %v1468 = vpop.xlane.xlu0 %1467
      %v1469 = vsel %vm506, %v1462, 0.0
      %1470 = vadd.xlane.f32.xlu0 %v1469
      %v1471 = vpop.xlane.xlu0 %1470
      %v1472 = vmul.f32 %v1465, %v510
      %v1473 = vmul.f32 %v1468, %v510
      %v1474 = vmul.f32 %v1471, %v510
      %v1475 = vadd.f32 %v1472, 1e-06
      %v1476 = vadd.f32 %v1473, 1e-06
      %v1477 = vadd.f32 %v1474, 1e-06
      %v1478 = vrsqrt.pop %v1475
      %v1479 = vrsqrt.pop %v1476
      %v1480 = vrsqrt.pop %v1477
      %v1481 = vmul.f32 %v1457, %v1478
      %v1482 = vmul.f32 %v1458, %v1479
      %v1483 = vmul.f32 %v1459, %v1480
      %v1484 = vld [vmem:[%s7] sm:$0x1]
      %v1486 = vlaneseq
      %v1487 = vshrl.u32 %v1486, 7
      %v1488 = vsub.s32 0, %v1487
      %v1489 = vrot.slane %v1484, %v1488
      %v1491 = vmul.f32 %v1481, %v1489
      %v1492 = vmul.f32 %v1482, %v1489
      %v1493 = vmul.f32 %v1483, %v1489
      %v1494 = vld [vmem:[%s8] sm:$0x1]
      %v1496 = vlaneseq
      %v1497 = vshrl.u32 %v1496, 7
      %v1498 = vsub.s32 0, %v1497
      %v1499 = vrot.slane %v1494, %v1498
      %v1501 = vadd.f32 %v1491, %v1499
      %v1502 = vadd.f32 %v1492, %v1499
      %v1503 = vadd.f32 %v1493, %v1499
      %v1504 = vpack.c.bf16 %v1502, %v1501
      %v1505 = vpack.c.bf16 %v1503, %v1503
      %v1506 = vld [vmem:[%s9] sm:$0xf]
      %v1507 = vld [vmem:[%s9 + $0x4] sm:$0xf]
      %v1508 = vld [vmem:[%s9 + $0x8] sm:$0xf]
      %v1509 = vld [vmem:[%s9 + $0xc] sm:$0xf]
      %v1510 = vld [vmem:[%s10] sm:$0x1]
      %v1512 = vlaneseq
      %v1513 = vshrl.u32 %v1512, 7
      %v1514 = vsub.s32 0, %v1513
      %v1515 = vrot.slane %v1510, %v1514
      %v1521 = vunpack.c.l.b16 %v1506
      %v1522 = vunpack.c.l.b16 %v1507
      %v1523 = vunpack.c.l.b16 %v1508
      %v1524 = vunpack.c.l.b16 %v1509
      %v1525 = vpack.c.b16 %v1522, %v1521
      %v1526 = vpack.c.b16 %v1524, %v1523
      %v1530 = vsel %vm499, %v1504, 0
      %v1533 = vsel %vm499, %v1505, 0
      %1535 = vmatprep.subr.bf16.mxu0 0
      %1536 = vmatpush1.bf16.msra.mxu0 %v1525
      %1537 = vmatprep.subr.bf16.mxu0 0
      %1538 = vmatpush1.bf16.msra.mxu0 %v1526
      %1539 = vmatprep.subr.bf16.mxu0 0
      %1540 = vmatpush1.bf16.msra.mxu0 0
      %1541 = vmatprep.subr.bf16.mxu0 0
      %1542 = vmatpush1.bf16.msra.mxu0 0
      %1543 = vmatprep.subr.bf16.mxu0 0
      %1544 = vmatpush1.bf16.msra.mxu0 0
      %1545 = vmatprep.subr.bf16.mxu0 0
      %1546 = vmatpush1.bf16.msra.mxu0 0
      %1547 = vmatprep.subr.bf16.mxu0 0
      %1548 = vmatpush1.bf16.msra.mxu0 0
      %1549 = vmatprep.subr.bf16.mxu0 0
      %1550 = vmatpush1.bf16.msra.mxu0 0
      %1551 = vmatprep.subr.bf16.mxu0 0
      %1552 = vmatpush1.bf16.msra.mxu0 0
      %1553 = vmatprep.subr.bf16.mxu0 0
      %1554 = vmatpush1.bf16.msra.mxu0 0
      %1555 = vmatprep.subr.bf16.mxu0 0
      %1556 = vmatpush1.bf16.msra.mxu0 0
      %1557 = vmatprep.subr.bf16.mxu0 0
      %1558 = vmatpush1.bf16.msra.mxu0 0
      %1559 = vmatprep.subr.bf16.mxu0 0
      %1560 = vmatpush1.bf16.msra.mxu0 0
      %1561 = vmatprep.subr.bf16.mxu0 0
      %1562 = vmatpush1.bf16.msra.mxu0 0
      %1563 = vmatprep.subr.bf16.mxu0 0
      %1564 = vmatpush1.bf16.msra.mxu0 0
      %1565 = vmatprep.subr.bf16.mxu0 0
      %1566 = vmatpush1.bf16.msra.mxu0 0
      %1567 = vmatprep.mubr.bf16.mxu0 0
      %1568 = vmatmul.mubr.bf16.gmra.mrb[0].mxu0 %v1530
      %v1569 = vpop.f32.mrb[0].mxu0
      %v1570 = vadd.f32 %v1515, %v1569
      %v1571 = vpop.f32.mrb[0].mxu0
      %v1572 = vpop.f32.mrb[0].mxu0
      %v1573 = vadd.f32 %v1515, %v1572
      %v1574 = vpop.f32.mrb[0].mxu0
      %1575 = vmatprep.mubr.bf16.mxu0 0
      %1576 = vmatmul.mubr.bf16.gmra.mrb[0].mxu0 %v1533
      %v1577 = vpop.f32.mrb[0].mxu0
      %v1578 = vadd.f32 %v1515, %v1577
      %v1579 = vpop.f32.mrb[0].mxu0
      %v1580 = vpop.f32.mrb[0].mxu0
      %v1581 = vpop.f32.mrb[0].mxu0
      %1582 = vdwg.mxu0
      %v1583 = vmul.f32 %v1570, 0.5
      %v1584 = vmul.f32 %v1573, 0.5
      %v1585 = vmul.f32 %v1578, 0.5
      %v1586 = vmul.f32 %v1570, 0.044715
      %v1587 = vmul.f32 %v1573, 0.044715
      %v1588 = vmul.f32 %v1578, 0.044715
      %v1589 = vmul.f32 %v1586, %v1570
      %v1590 = vmul.f32 %v1587, %v1573
      %v1591 = vmul.f32 %v1588, %v1578
      %v1592 = vmul.f32 %v1589, %v1570
      %v1593 = vmul.f32 %v1590, %v1573
      %v1594 = vmul.f32 %v1591, %v1578
      %v1595 = vadd.f32 %v1570, %v1592
      %v1596 = vadd.f32 %v1573, %v1593
      %v1597 = vadd.f32 %v1578, %v1594
      %v1598 = vmul.f32 %v1595, 0.7978846
      %v1599 = vmul.f32 %v1596, 0.7978846
      %v1600 = vmul.f32 %v1597, 0.7978846
      %v1601 = vtanh.pop %v1598
      %v1602 = vtanh.pop %v1599
      %v1603 = vtanh.pop %v1600
      %v1604 = vadd.f32 %v1601, 1.0
      %v1605 = vadd.f32 %v1602, 1.0
      %v1606 = vadd.f32 %v1603, 1.0
      %v1607 = vmul.f32 %v1583, %v1604
      %v1608 = vmul.f32 %v1584, %v1605
      %v1609 = vmul.f32 %v1585, %v1606
      %v1610 = vpack.c.bf16 %v1608, %v1607
      %v1611 = vpack.c.bf16 %v1609, %v1609
      %v1612 = vld [vmem:[%s11] sm:$0xf]
      %v1613 = vld [vmem:[%s11 + $0x4] sm:$0xf]
      %v1614 = vld [vmem:[%s11 + $0x8] sm:$0xf]
      %v1615 = vld [vmem:[%s11 + $0xc] sm:$0xf]
      %v1616 = vld [vmem:[%s11 + $0x10] sm:$0xf]
      %v1617 = vld [vmem:[%s11 + $0x14] sm:$0xf]
      %v1618 = vld [vmem:[%s11 + $0x18] sm:$0xf]
      %v1619 = vld [vmem:[%s11 + $0x1c] sm:$0xf]
      %v1620 = vld [vmem:[%s12] sm:$0x1]
      %v1622 = vlaneseq
      %v1623 = vshrl.u32 %v1622, 7
      %v1624 = vsub.s32 0, %v1623
      %v1625 = vrot.slane %v1620, %v1624
      %v1635 = vunpack.c.l.b16 %v1612
      %v1636 = vunpack.c.l.b16 %v1613
      %v1637 = vunpack.c.l.b16 %v1614
      %v1638 = vunpack.c.l.b16 %v1615
      %v1639 = vunpack.c.l.b16 %v1616
      %v1640 = vunpack.c.l.b16 %v1617
      %v1641 = vunpack.c.l.b16 %v1618
      %v1642 = vunpack.c.l.b16 %v1619
      %v1643 = vpack.c.b16 %v1636, %v1635
      %v1644 = vpack.c.b16 %v1638, %v1637
      %v1645 = vpack.c.b16 %v1640, %v1639
      %v1646 = vpack.c.b16 %v1642, %v1641
      %vm1651 = vcmask 523264
      %v1653 = vsel %vm1651, %v1610, 0
      %v1656 = vsel %vm1651, %v1611, 0
      %1658 = vmatprep.subr.bf16.mxu0 0
      %1659 = vmatpush1.bf16.msra.mxu0 %v1643
      %1660 = vmatprep.subr.bf16.mxu0 0
      %1661 = vmatpush1.bf16.msra.mxu0 %v1644
      %1662 = vmatprep.subr.bf16.mxu0 0
      %1663 = vmatpush1.bf16.msra.mxu0 %v1645
      %1664 = vmatprep.subr.bf16.mxu0 0
      %1665 = vmatpush1.bf16.msra.mxu0 %v1646
      %1666 = vmatprep.subr.bf16.mxu0 0
      %1667 = vmatpush1.bf16.msra.mxu0 0
      %1668 = vmatprep.subr.bf16.mxu0 0
      %1669 = vmatpush1.bf16.msra.mxu0 0
      %1670 = vmatprep.subr.bf16.mxu0 0
      %1671 = vmatpush1.bf16.msra.mxu0 0
      %1672 = vmatprep.subr.bf16.mxu0 0
      %1673 = vmatpush1.bf16.msra.mxu0 0
      %1674 = vmatprep.subr.bf16.mxu0 0
      %1675 = vmatpush1.bf16.msra.mxu0 0
      %1676 = vmatprep.subr.bf16.mxu0 0
      %1677 = vmatpush1.bf16.msra.mxu0 0
      %1678 = vmatprep.subr.bf16.mxu0 0
      %1679 = vmatpush1.bf16.msra.mxu0 0
      %1680 = vmatprep.subr.bf16.mxu0 0
      %1681 = vmatpush1.bf16.msra.mxu0 0
      %1682 = vmatprep.subr.bf16.mxu0 0
      %1683 = vmatpush1.bf16.msra.mxu0 0
      %1684 = vmatprep.subr.bf16.mxu0 0
      %1685 = vmatpush1.bf16.msra.mxu0 0
      %1686 = vmatprep.subr.bf16.mxu0 0
      %1687 = vmatpush1.bf16.msra.mxu0 0
      %1688 = vmatprep.subr.bf16.mxu0 0
      %1689 = vmatpush1.bf16.msra.mxu0 0
      %1690 = vmatprep.mubr.bf16.mxu0 0
      %1691 = vmatmul.mubr.bf16.gmra.mrb[0].mxu0 %v1653
      %v1692 = vpop.f32.mrb[0].mxu0
      %v1693 = vadd.f32 %v1625, %v1692
      %v1694 = vpop.f32.mrb[0].mxu0
      %v1695 = vpop.f32.mrb[0].mxu0
      %v1696 = vadd.f32 %v1625, %v1695
      %v1697 = vpop.f32.mrb[0].mxu0
      %1698 = vmatprep.mubr.bf16.mxu0 0
      %1699 = vmatmul.mubr.bf16.gmra.mrb[0].mxu0 %v1656
      %v1700 = vpop.f32.mrb[0].mxu0
      %v1701 = vadd.f32 %v1625, %v1700
      %v1702 = vpop.f32.mrb[0].mxu0
      %v1703 = vpop.f32.mrb[0].mxu0
      %v1704 = vpop.f32.mrb[0].mxu0
      %1705 = vdwg.mxu0
      %v1706 = vadd.f32 %v1693, %v1442
      %v1707 = vadd.f32 %v1696, %v1443
      %v1708 = vadd.f32 %v1701, %v1444
      %v1709 = vsel %vm499, %v1706, 0.0
      %1710 = vadd.xlane.f32.xlu0 %v1709
      %v1711 = vpop.xlane.xlu0 %1710
      %v1712 = vsel %vm499, %v1707, 0.0
      %1713 = vadd.xlane.f32.xlu0 %v1712
      %v1714 = vpop.xlane.xlu0 %1713
      %v1715 = vsel %vm506, %v1708, 0.0
      %1716 = vadd.xlane.f32.xlu0 %v1715
      %v1717 = vpop.xlane.xlu0 %1716
      %v1718 = vmul.f32 %v1711, %v510
      %v1719 = vmul.f32 %v1714, %v510
      %v1720 = vmul.f32 %v1717, %v510
      %v1721 = vsub.f32 %v1706, %v1718
      %v1722 = vsub.f32 %v1707, %v1719
      %v1723 = vsub.f32 %v1708, %v1720
      %v1724 = vmul.f32 %v1721, %v1721
      %v1725 = vmul.f32 %v1722, %v1722
      %v1726 = vmul.f32 %v1723, %v1723
      %v1727 = vsel %vm499, %v1724, 0.0
      %1728 = vadd.xlane.f32.xlu0 %v1727
      %v1729 = vpop.xlane.xlu0 %1728
      %v1730 = vsel %vm499, %v1725, 0.0
      %1731 = vadd.xlane.f32.xlu0 %v1730
      %v1732 = vpop.xlane.xlu0 %1731
      %v1733 = vsel %vm506, %v1726, 0.0
      %1734 = vadd.xlane.f32.xlu0 %v1733
      %v1735 = vpop.xlane.xlu0 %1734
      %v1736 = vmul.f32 %v1729, %v510
      %v1737 = vmul.f32 %v1732, %v510
      %v1738 = vmul.f32 %v1735, %v510
      %v1739 = vadd.f32 %v1736, 1e-06
      %v1740 = vadd.f32 %v1737, 1e-06
      %v1741 = vadd.f32 %v1738, 1e-06
      %v1742 = vrsqrt.pop %v1739
      %v1743 = vrsqrt.pop %v1740
      %v1744 = vrsqrt.pop %v1741
      %v1745 = vmul.f32 %v1721, %v1742
      %v1746 = vmul.f32 %v1722, %v1743
      %v1747 = vmul.f32 %v1723, %v1744
      %v1748 = vld [vmem:[%s13] sm:$0x1]
      %v1750 = vlaneseq
      %v1751 = vshrl.u32 %v1750, 7
      %v1752 = vsub.s32 0, %v1751
      %v1753 = vrot.slane %v1748, %v1752
      %v1755 = vmul.f32 %v1745, %v1753
      %v1756 = vmul.f32 %v1746, %v1753
      %v1757 = vmul.f32 %v1747, %v1753
      %v1758 = vld [vmem:[%s14] sm:$0x1]
      %v1760 = vlaneseq
      %v1761 = vshrl.u32 %v1760, 7
      %v1762 = vsub.s32 0, %v1761
      %v1763 = vrot.slane %v1758, %v1762
      %v1765 = vadd.f32 %v1755, %v1763
      %v1766 = vadd.f32 %v1756, %v1763
      %v1767 = vadd.f32 %v1757, %v1763
      %1768 = vst.msk [vmem:[%s494] sm:$0xff] %vm499, %v1765
      %1769 = vst.msk [vmem:[%s494 + $0x8] sm:$0xff] %vm499, %v1766
      %1770 = vst.msk [vmem:[%s494 + $0x10] sm:$0xf] %vm506, %v1767
      %p1771 = scmp.lt.s32.totalorder %s26, 1
      %s1772 = scalar_select %p1771, %s26, 1
      %s1773 = smul.addr %s1772, 3
      %s1774 = smul.addr %s1773, 8
      %s1775 = scalar_lea.vmem %s15, %s1774
      // Predicated region
      $region81: #{_lambda_.7} parent=79 // pred_check
        %p1776 = pneg %p364
      $region82: #{_lambda_.7} parent=79 // pred_check_branch
        %1778 = sbr.rel (%p1776) target = $region84
      $region83: #{_lambda_.7} parent=79 // pred_region
        _
      $region84: #{_lambda_.7} parent=79 // pred_fallthru
        _
    $region80: #{_lambda_.7} parent=5 // pred_fallthru
      _
    %p1779 = scmp.le.s32.totalorder 2, %s21
    // Predicated region
    $region85: #{_lambda_.7} parent=5 // pred_check
      %p1780 = pneg %p1779
    $region86: #{_lambda_.7} parent=5 // pred_check_branch
      %1782 = sbr.rel (%p1780) target = $region88
    $region87: #{_lambda_.7} parent=5 // pred_region
      %s1783 = ssub.s32 %s21, 2
      // Predicated region
      $region89: #{_lambda_.7} parent=87 // pred_check
        %p1784 = pneg %p370
      $region90: #{_lambda_.7} parent=87 // pred_check_branch
        %1786 = sbr.rel (%p1784) target = $region92
      $region91: #{_lambda_.7} parent=87 // pred_region
        %p1787 = scmp.lt.s32.totalorder %s27, 1
        %s1788 = scalar_select %p1787, %s27, 1
        %s1789 = smul.addr %s1788, 3
        %s1790 = smul.addr %s1789, 8
        %s1791 = scalar_lea.vmem %s15, %s1790
      $region92: #{_lambda_.7} parent=87 // pred_fallthru
        _
    $region88: #{_lambda_.7} parent=5 // pred_fallthru
      _
  $region6: #{_lambda_.7} parent=0 // loop_footer
    %s25 = sadd.s32 1, %s21
  $region7: #{_lambda_.7} parent=0 // loop_footer_branch
    %20 = sbr.rel target = $region3
  $region8: #{_lambda_.7} parent=0 // loop_exit
    _

</llo_original>
